<compile_context>
chip_gen: v7x
topology: tpu7x:2x2x1
jax: 0.10.0
libtpu: 0.0.40
codegen_flags: <defaults>
</compile_context>

<pallas_src>
import functools

import jax
import jax.numpy as jnp
from jax.experimental import pallas as pl
from jax.experimental.pallas import tpu as pltpu

_VMEM = functools.partial(pl.BlockSpec, memory_space=pltpu.MemorySpace.VMEM)


# ----------------------------- Kernel helpers --------------------------------

def _bilstm_layer(x_flat, T, B, H, P, wf_ref, wb_ref, whh_ref, b_ref, ys_ref):
    """One bidirectional LSTM layer, fully in-kernel, directions merged.

    x_flat : [T*B, I]   time-major flattened input (f32 value)
    wf_ref : [I, 4P]    bf16 input->gate weights, fwd gate columns only
    wb_ref : [I, 4P]    bf16 input->gate weights, bwd gate columns only
    whh_ref: [P, 4P]    bf16 block-diagonal hidden->gate weights (fwd rows 0:H
                        -> fwd cols, bwd rows H:2H -> bwd cols, rest zero)
    b_ref  : [1, 4P]    f32 folded (b_ih + b_hh) for both directions
    ys_ref : [T*B, 2H]  f32 VMEM scratch, written with [hf_t | hb_t] rows.
    Gate slot layout per 128-lane block k in {i,f,g,o}: [fwd H | bwd H | pad].
    """
    xb = x_flat.astype(jnp.bfloat16)
    # Hoisted input projections (one matmul per direction, both off the serial
    # recurrence chain; bias folded into the fwd one — it covers all columns).
    xw_f = (jnp.dot(xb, wf_ref[...], preferred_element_type=jnp.float32)
            + b_ref[...])                                     # [T*B, 4P]
    xw_b = jnp.dot(xb, wb_ref[...], preferred_element_type=jnp.float32)

    whh = whh_ref[...]                                        # [P, 4P] bf16

    # Merged state: lanes 0:H = fwd, H:2H = bwd, 2H:P = zero padding.
    h = jnp.zeros((B, P), jnp.float32)
    c = jnp.zeros((B, P), jnp.float32)

    # Static unroll: T known at trace time, h/c stay in vregs, all slice
    # offsets static and sublane-aligned (B == 8).
    for t in range(T):
        tb = T - 1 - t
        # fwd pre-activation from x[t], bwd from x[T-1-t]; disjoint columns,
        # so a single add combines them (not on the recurrence dep chain).
        pre = xw_f[t * B:(t + 1) * B, :] + xw_b[tb * B:(tb + 1) * B, :]
        # ONE block-diagonal recurrence matmul for both directions.
        gates = pre + jnp.dot(h.astype(jnp.bfloat16), whh,
                              preferred_element_type=jnp.float32)  # [B, 4P]
        # PyTorch gate order: i, f, g, o — each an exact-vreg 128-lane slice.
        i = jax.nn.sigmoid(gates[:, 0 * P:1 * P])
        f = jax.nn.sigmoid(gates[:, 1 * P:2 * P])
        g = jnp.tanh(gates[:, 2 * P:3 * P])
        o = jax.nn.sigmoid(gates[:, 3 * P:4 * P])
        c = f * c + i * g
        h = o * jnp.tanh(c)
        # Direct static-offset stores into the concatenated [T*B, 2H] layout
        # (off the recurrence dep chain; scheduler hides them).
        ys_ref[t * B:(t + 1) * B, 0:H] = h[:, 0:H]
        ys_ref[tb * B:(tb + 1) * B, H:2 * H] = h[:, H:2 * H]


def _make_textrcnn_kernel(num_layers, H, P):
    """Fused kernel: all BiLSTM layers + cat/linear/tanh/maxpool/fc head."""

    def kernel(x_ref, *refs):
        n_w = 4 * num_layers
        layer_refs = [refs[4 * i:4 * i + 4] for i in range(num_layers)]
        wla_ref, wlb_ref, bl_ref, wfc_ref, bfc_ref, o_ref = refs[n_w:n_w + 6]
        ys_refs = refs[n_w + 6:]

        T, B, E = x_ref.shape
        x_flat = x_ref[...].reshape(T * B, E)

        inp = x_flat
        for li in range(num_layers):
            wf_ref, wb_ref, whh_ref, b_ref = layer_refs[li]
            _bilstm_layer(inp, T, B, H, P,
                          wf_ref, wb_ref, whh_ref, b_ref, ys_refs[li])
            inp = ys_refs[li][...]                            # [T*B, 2H]

        # Linear over cat(outputs, x) == sum of split-weight matmuls.
        lin = jnp.tanh(
            jnp.dot(inp.astype(jnp.bfloat16), wla_ref[...],
                    preferred_element_type=jnp.float32)
            + jnp.dot(x_flat.astype(jnp.bfloat16), wlb_ref[...],
                      preferred_element_type=jnp.float32)
            + bl_ref[...])                                    # [T*B, 2H] f32
        HH = 2 * H
        # permute(0,2,1) + max_pool1d(full width) + squeeze == max over dim 1.
        pooled = jnp.max(lin.reshape(T, B, HH), axis=1)       # [T, 2H]
        # Lane-dense padded fc output (wrapper slices [:, :OD]).
        o_ref[...] = (jnp.dot(pooled.astype(jnp.bfloat16), wfc_ref[...],
                              preferred_element_type=jnp.float32)
                      + bfc_ref[...])

    return kernel


# ------------------------------ Wrappers --------------------------------------

def prepare_params(params):
    """One-time weight re-layout: transposes, direction merge into 128-lane
    padded gate slots, block-diagonal hidden weights, bias folding, bf16 cast,
    padded lane-dense fc. Done once at setup, NOT per forward call."""
    H = params["lstm"][0][0][1].shape[1]
    P = ((2 * H + 127) // 128) * 128          # padded per-gate slot width
    layers = []
    for layer in params["lstm"]:
        (wih_f, whh_f, bih_f, bhh_f), (wih_b, whh_b, bih_b, bhh_b) = layer
        in_dim = wih_f.shape[1]
        wf = jnp.zeros((in_dim, 4 * P), jnp.float32)
        wb = jnp.zeros((in_dim, 4 * P), jnp.float32)
        whh = jnp.zeros((P, 4 * P), jnp.float32)
        bias = jnp.zeros((1, 4 * P), jnp.float32)
        bf = bih_f + bhh_f
        bb = bih_b + bhh_b
        for k in range(4):                     # gate order i, f, g, o
            wf = wf.at[:, k * P:k * P + H].set(wih_f[k * H:(k + 1) * H, :].T)
            wb = wb.at[:, k * P + H:k * P + 2 * H].set(
                wih_b[k * H:(k + 1) * H, :].T)
            whh = whh.at[0:H, k * P:k * P + H].set(
                whh_f[k * H:(k + 1) * H, :].T)
            whh = whh.at[H:2 * H, k * P + H:k * P + 2 * H].set(
                whh_b[k * H:(k + 1) * H, :].T)
            bias = bias.at[0, k * P:k * P + H].set(bf[k * H:(k + 1) * H])
            bias = bias.at[0, k * P + H:k * P + 2 * H].set(
                bb[k * H:(k + 1) * H])
        layers.append((wf.astype(jnp.bfloat16), wb.astype(jnp.bfloat16),
                       whh.astype(jnp.bfloat16), bias))

    HH = params["w_lin"].shape[0]                                     # 2H
    OD = params["w_fc"].shape[0]
    ODP = ((OD + 127) // 128) * 128
    wfc = jnp.zeros((HH, ODP), jnp.float32).at[:, :OD].set(params["w_fc"].T)
    bfc = jnp.zeros((1, ODP), jnp.float32).at[0, :OD].set(params["b_fc"])
    return {
        "layers": layers,
        "H": H, "P": P, "OD": OD, "ODP": ODP,
        "wla": params["w_lin"][:, :HH].T.astype(jnp.bfloat16),       # [2H,2H]
        "wlb": params["w_lin"][:, HH:].T.astype(jnp.bfloat16),       # [E, 2H]
        "bl": params["b_lin"][None, :],                              # [1, 2H]
        "wfc": wfc.astype(jnp.bfloat16),                             # [2H,ODP]
        "bfc": bfc,                                                  # [1, ODP]
    }


def text_rcnn_forward(x, prep):
    """Full TextRCNN forward in ONE pallas_call. x: [T, B, E] -> [T, OD]."""
    T, B, E = x.shape
    assert B % 8 == 0, "sublane alignment: dim-1 (pooled dim) must be 8-aligned"
    num_layers = len(prep["layers"])
    H, P, OD, ODP = prep["H"], prep["P"], prep["OD"], prep["ODP"]

    inputs = [x]
    for layer in prep["layers"]:
        inputs.extend(layer)
    inputs += [prep["wla"], prep["wlb"], prep["bl"], prep["wfc"], prep["bfc"]]

    # Advisory cost estimate for XLA scheduling around the custom call.
    flops, trans = 0, 0
    in_dim = E
    for _ in range(num_layers):
        flops += 2 * 2 * (T * B) * in_dim * (4 * P)   # hoisted projections
        flops += T * 2 * B * P * (4 * P)              # recurrence matmuls
        trans += T * B * 5 * P                        # 4 gate acts + tanh(c)
        in_dim = 2 * H
    flops += 2 * (T * B) * (2 * H) * (2 * H) + 2 * (T * B) * E * (2 * H)
    flops += 2 * T * (2 * H) * ODP
    trans += T * B * 2 * H
    bytes_accessed = int(sum(v.size * v.dtype.itemsize for v in inputs)
                         + T * ODP * 4)

    out = pl.pallas_call(
        _make_textrcnn_kernel(num_layers, H, P),
        out_shape=jax.ShapeDtypeStruct((T, ODP), jnp.float32),
        in_specs=[_VMEM()] * len(inputs),
        out_specs=_VMEM(),
        scratch_shapes=[pltpu.VMEM((T * B, 2 * H), jnp.float32)
                        for _ in range(num_layers)],
        compiler_params=pltpu.CompilerParams(
            vmem_limit_bytes=32 * 1024 * 1024),
        cost_estimate=pl.CostEstimate(flops=int(flops),
                                      transcendentals=int(trans),
                                      bytes_accessed=bytes_accessed),
    )(*inputs)
    return out[:, :OD]


# --------------------------- Params & reference -------------------------------

def init_params(key, E, H, num_layers, OD, bidirectional=True):
    num_dirs = 2 if bidirectional else 1
    bound = 1.0 / (H ** 0.5)

    def u(k, shape, b):
        return jax.random.uniform(k, shape, jnp.float32, -b, b)

    lstm = []
    for layer in range(num_layers):
        in_dim = E if layer == 0 else num_dirs * H
        dirs = []
        for _ in range(num_dirs):
            key, k1, k2, k3, k4 = jax.random.split(key, 5)
            dirs.append((u(k1, (4 * H, in_dim), bound),
                         u(k2, (4 * H, H), bound),
                         u(k3, (4 * H,), bound),
                         u(k4, (4 * H,), bound)))
        lstm.append(tuple(dirs))

    kl = 1.0 / ((2 * H + E) ** 0.5)
    kf = 1.0 / ((2 * H) ** 0.5)
    key, k1, k2, k3, k4 = jax.random.split(key, 5)
    return {
        "lstm": lstm,
        "w_lin": u(k1, (2 * H, 2 * H + E), kl),
        "b_lin": u(k2, (2 * H,), kl),
        "w_fc": u(k3, (OD, 2 * H), kf),
        "b_fc": u(k4, (2 * H,), kf)[:OD] if False else u(k4, (OD,), kf),
    }


def ref_forward(x, params):
    """Pure-JAX f32 reference matching the PyTorch forward (eval mode)."""
    B = x.shape[1]
    inp = x
    for layer in params["lstm"]:
        ys = []
        for d, (w_ih, w_hh, b_ih, b_hh) in enumerate(layer):
            xs = inp if d == 0 else inp[::-1]
            H = w_hh.shape[1]

            def step(carry, xt, w_ih=w_ih, w_hh=w_hh, b_ih=b_ih, b_hh=b_hh):
                h, c = carry
                gates = xt @ w_ih.T + h @ w_hh.T + b_ih + b_hh
                i, f, g, o = jnp.split(gates, 4, axis=-1)
                c = jax.nn.sigmoid(f) * c + jax.nn.sigmoid(i) * jnp.tanh(g)
                h = jax.nn.sigmoid(o) * jnp.tanh(c)
                return (h, c), h

            init = (jnp.zeros((B, H), jnp.float32),
                    jnp.zeros((B, H), jnp.float32))
            _, y = jax.lax.scan(step, init, xs)
            ys.append(y if d == 0 else y[::-1])
        inp = jnp.concatenate(ys, axis=2)
    cat = jnp.concatenate([inp, x], axis=2)
    lin = jnp.tanh(cat @ params["w_lin"].T + params["b_lin"])
    pooled = jnp.max(lin, axis=1)
    return pooled @ params["w_fc"].T + params["b_fc"]


# --------------------------------- Main ----------------------------------------

if __name__ == "__main__":
    T, B, E, H, NUM_LAYERS, OUTPUT_DIM = 8, 8, 32, 32, 2, 4

    key = jax.random.PRNGKey(0)
    kx, kp = jax.random.split(key)
    x = jax.random.normal(kx, (T, B, E), dtype=jnp.float32)
    params = init_params(kp, E, H, NUM_LAYERS, OUTPUT_DIM, bidirectional=True)
    prep = jax.tree_util.tree_map(jax.block_until_ready, prepare_params(params))

    out = jax.block_until_ready(text_rcnn_forward(x, prep))
    ref = jax.block_until_ready(ref_forward(x, params))

    assert out.shape == (T, OUTPUT_DIM), out.shape
    max_err = float(jnp.max(jnp.abs(out - ref)))
    # bf16 MXU operands compound rounding across the T-step / 2-layer
    # recurrence; tolerance relaxed from 1e-3 accordingly.
    assert jnp.allclose(out, ref, atol=3e-2, rtol=3e-2), max_err

    print("KERNEL_OK")
</pallas_src>

<mosaic_0001>
module attributes {stable_mosaic.version = 11 : i64} {
  func.func @kernel(%arg0: memref<8x8x32xf32, #tpu.memory_space<vmem>>, %arg1: memref<32x512xbf16, #tpu.memory_space<vmem>>, %arg2: memref<32x512xbf16, #tpu.memory_space<vmem>>, %arg3: memref<128x512xbf16, #tpu.memory_space<vmem>>, %arg4: memref<1x512xf32, #tpu.memory_space<vmem>>, %arg5: memref<64x512xbf16, #tpu.memory_space<vmem>>, %arg6: memref<64x512xbf16, #tpu.memory_space<vmem>>, %arg7: memref<128x512xbf16, #tpu.memory_space<vmem>>, %arg8: memref<1x512xf32, #tpu.memory_space<vmem>>, %arg9: memref<64x64xbf16, #tpu.memory_space<vmem>>, %arg10: memref<32x64xbf16, #tpu.memory_space<vmem>>, %arg11: memref<1x64xf32, #tpu.memory_space<vmem>>, %arg12: memref<64x128xbf16, #tpu.memory_space<vmem>>, %arg13: memref<1x128xf32, #tpu.memory_space<vmem>>, %arg14: memref<8x128xf32, #tpu.memory_space<vmem>>, %arg15: memref<64x64xf32, #tpu.memory_space<vmem>>, %arg16: memref<64x64xf32, #tpu.memory_space<vmem>>) attributes {dimension_semantics = [], scalar_prefetch = 0 : i64, scratch_operands = 2 : i64, tpu.core_type = #tpu.core_type<tc>} {
    %c0 = arith.constant 0 : index
    %c0_0 = arith.constant 0 : index
    %c0_1 = arith.constant 0 : index
    %0 = vector.load %arg0[%c0, %c0_0, %c0_1] : memref<8x8x32xf32, #tpu.memory_space<vmem>>, vector<8x8x32xf32>
    %1 = vector.shape_cast %0 : vector<8x8x32xf32> to vector<64x32xf32>
    %2 = arith.truncf %1 : vector<64x32xf32> to vector<64x32xbf16>
    %c0_2 = arith.constant 0 : index
    %c0_3 = arith.constant 0 : index
    %3 = vector.load %arg1[%c0_2, %c0_3] : memref<32x512xbf16, #tpu.memory_space<vmem>>, vector<32x512xbf16>
    %cst = arith.constant dense<0.000000e+00> : vector<64x512xf32>
    %4 = tpu.matmul %2, %3, %cst {dimension_numbers = #tpu.dot_dimension_numbers<[1], [0], [0], [1], [0, 0, 1, 1], [], []>} : vector<64x32xbf16>, vector<32x512xbf16>, vector<64x512xf32> -> vector<64x512xf32>
    %c0_4 = arith.constant 0 : index
    %c0_5 = arith.constant 0 : index
    %5 = vector.load %arg4[%c0_4, %c0_5] : memref<1x512xf32, #tpu.memory_space<vmem>>, vector<1x512xf32>
    %6 = vector.broadcast %5 : vector<1x512xf32> to vector<64x512xf32>
    %7 = arith.addf %4, %6 : vector<64x512xf32>
    %c0_6 = arith.constant 0 : index
    %c0_7 = arith.constant 0 : index
    %8 = vector.load %arg2[%c0_6, %c0_7] : memref<32x512xbf16, #tpu.memory_space<vmem>>, vector<32x512xbf16>
    %cst_8 = arith.constant dense<0.000000e+00> : vector<64x512xf32>
    %9 = tpu.matmul %2, %8, %cst_8 {dimension_numbers = #tpu.dot_dimension_numbers<[1], [0], [0], [1], [0, 0, 1, 1], [], []>} : vector<64x32xbf16>, vector<32x512xbf16>, vector<64x512xf32> -> vector<64x512xf32>
    %c0_9 = arith.constant 0 : index
    %c0_10 = arith.constant 0 : index
    %10 = vector.load %arg3[%c0_9, %c0_10] : memref<128x512xbf16, #tpu.memory_space<vmem>>, vector<128x512xbf16>
    %cst_11 = arith.constant 0.000000e+00 : f32
    %11 = vector.broadcast %cst_11 : f32 to vector<8x128xf32>
    %cst_12 = arith.constant 0.000000e+00 : f32
    %12 = vector.broadcast %cst_12 : f32 to vector<8x128xf32>
    %13 = vector.extract_strided_slice %7 {offsets = [0, 0], sizes = [8, 512], strides = [1, 1]} : vector<64x512xf32> to vector<8x512xf32>
    %14 = vector.extract_strided_slice %9 {offsets = [56, 0], sizes = [8, 512], strides = [1, 1]} : vector<64x512xf32> to vector<8x512xf32>
    %15 = arith.addf %13, %14 : vector<8x512xf32>
    %16 = arith.truncf %11 : vector<8x128xf32> to vector<8x128xbf16>
    %cst_13 = arith.constant dense<0.000000e+00> : vector<8x512xf32>
    %17 = tpu.matmul %16, %10, %cst_13 {dimension_numbers = #tpu.dot_dimension_numbers<[1], [0], [0], [1], [0, 0, 1, 1], [], []>} : vector<8x128xbf16>, vector<128x512xbf16>, vector<8x512xf32> -> vector<8x512xf32>
    %18 = arith.addf %15, %17 : vector<8x512xf32>
    %19 = vector.extract_strided_slice %18 {offsets = [0, 0], sizes = [8, 128], strides = [1, 1]} : vector<8x512xf32> to vector<8x128xf32>
    %20 = arith.negf %19 : vector<8x128xf32>
    %21 = math.exp %20 : vector<8x128xf32>
    %cst_14 = arith.constant 1.000000e+00 : f32
    %22 = vector.broadcast %cst_14 : f32 to vector<8x128xf32>
    %23 = arith.addf %22, %21 : vector<8x128xf32>
    %24 = arith.divf %22, %23 : vector<8x128xf32>
    %25 = vector.extract_strided_slice %18 {offsets = [0, 128], sizes = [8, 128], strides = [1, 1]} : vector<8x512xf32> to vector<8x128xf32>
    %26 = arith.negf %25 : vector<8x128xf32>
    %27 = math.exp %26 : vector<8x128xf32>
    %cst_15 = arith.constant 1.000000e+00 : f32
    %28 = vector.broadcast %cst_15 : f32 to vector<8x128xf32>
    %29 = arith.addf %28, %27 : vector<8x128xf32>
    %30 = arith.divf %28, %29 : vector<8x128xf32>
    %31 = vector.extract_strided_slice %18 {offsets = [0, 256], sizes = [8, 128], strides = [1, 1]} : vector<8x512xf32> to vector<8x128xf32>
    %32 = math.tanh %31 : vector<8x128xf32>
    %33 = vector.extract_strided_slice %18 {offsets = [0, 384], sizes = [8, 128], strides = [1, 1]} : vector<8x512xf32> to vector<8x128xf32>
    %34 = arith.negf %33 : vector<8x128xf32>
    %35 = math.exp %34 : vector<8x128xf32>
    %cst_16 = arith.constant 1.000000e+00 : f32
    %36 = vector.broadcast %cst_16 : f32 to vector<8x128xf32>
    %37 = arith.addf %36, %35 : vector<8x128xf32>
    %38 = arith.divf %36, %37 : vector<8x128xf32>
    %39 = arith.mulf %30, %12 : vector<8x128xf32>
    %40 = arith.mulf %24, %32 : vector<8x128xf32>
    %41 = arith.addf %39, %40 : vector<8x128xf32>
    %42 = math.tanh %41 : vector<8x128xf32>
    %43 = arith.mulf %38, %42 : vector<8x128xf32>
    %44 = vector.extract_strided_slice %43 {offsets = [0, 0], sizes = [8, 32], strides = [1, 1]} : vector<8x128xf32> to vector<8x32xf32>
    %c0_17 = arith.constant 0 : index
    %c0_18 = arith.constant 0 : index
    %45 = vector.load %arg15[%c0_17, %c0_18] : memref<64x64xf32, #tpu.memory_space<vmem>>, vector<8x32xf32>
    tpu.vector_store %arg15[%c0_17, %c0_18], %44 {strides = array<i32>} : memref<64x64xf32, #tpu.memory_space<vmem>>, vector<8x32xf32>,
    %46 = vector.extract_strided_slice %43 {offsets = [0, 32], sizes = [8, 32], strides = [1, 1]} : vector<8x128xf32> to vector<8x32xf32>
    %c56 = arith.constant 56 : index
    %c32 = arith.constant 32 : index
    %47 = vector.load %arg15[%c56, %c32] : memref<64x64xf32, #tpu.memory_space<vmem>>, vector<8x32xf32>
    tpu.vector_store %arg15[%c56, %c32], %46 {strides = array<i32>} : memref<64x64xf32, #tpu.memory_space<vmem>>, vector<8x32xf32>,
    %48 = vector.extract_strided_slice %7 {offsets = [8, 0], sizes = [8, 512], strides = [1, 1]} : vector<64x512xf32> to vector<8x512xf32>
    %49 = vector.extract_strided_slice %9 {offsets = [48, 0], sizes = [8, 512], strides = [1, 1]} : vector<64x512xf32> to vector<8x512xf32>
    %50 = arith.addf %48, %49 : vector<8x512xf32>
    %51 = arith.truncf %43 : vector<8x128xf32> to vector<8x128xbf16>
    %cst_19 = arith.constant dense<0.000000e+00> : vector<8x512xf32>
    %52 = tpu.matmul %51, %10, %cst_19 {dimension_numbers = #tpu.dot_dimension_numbers<[1], [0], [0], [1], [0, 0, 1, 1], [], []>} : vector<8x128xbf16>, vector<128x512xbf16>, vector<8x512xf32> -> vector<8x512xf32>
    %53 = arith.addf %50, %52 : vector<8x512xf32>
    %54 = vector.extract_strided_slice %53 {offsets = [0, 0], sizes = [8, 128], strides = [1, 1]} : vector<8x512xf32> to vector<8x128xf32>
    %55 = arith.negf %54 : vector<8x128xf32>
    %56 = math.exp %55 : vector<8x128xf32>
    %cst_20 = arith.constant 1.000000e+00 : f32
    %57 = vector.broadcast %cst_20 : f32 to vector<8x128xf32>
    %58 = arith.addf %57, %56 : vector<8x128xf32>
    %59 = arith.divf %57, %58 : vector<8x128xf32>
    %60 = vector.extract_strided_slice %53 {offsets = [0, 128], sizes = [8, 128], strides = [1, 1]} : vector<8x512xf32> to vector<8x128xf32>
    %61 = arith.negf %60 : vector<8x128xf32>
    %62 = math.exp %61 : vector<8x128xf32>
    %cst_21 = arith.constant 1.000000e+00 : f32
    %63 = vector.broadcast %cst_21 : f32 to vector<8x128xf32>
    %64 = arith.addf %63, %62 : vector<8x128xf32>
    %65 = arith.divf %63, %64 : vector<8x128xf32>
    %66 = vector.extract_strided_slice %53 {offsets = [0, 256], sizes = [8, 128], strides = [1, 1]} : vector<8x512xf32> to vector<8x128xf32>
    %67 = math.tanh %66 : vector<8x128xf32>
    %68 = vector.extract_strided_slice %53 {offsets = [0, 384], sizes = [8, 128], strides = [1, 1]} : vector<8x512xf32> to vector<8x128xf32>
    %69 = arith.negf %68 : vector<8x128xf32>
    %70 = math.exp %69 : vector<8x128xf32>
    %cst_22 = arith.constant 1.000000e+00 : f32
    %71 = vector.broadcast %cst_22 : f32 to vector<8x128xf32>
    %72 = arith.addf %71, %70 : vector<8x128xf32>
    %73 = arith.divf %71, %72 : vector<8x128xf32>
    %74 = arith.mulf %65, %41 : vector<8x128xf32>
    %75 = arith.mulf %59, %67 : vector<8x128xf32>
    %76 = arith.addf %74, %75 : vector<8x128xf32>
    %77 = math.tanh %76 : vector<8x128xf32>
    %78 = arith.mulf %73, %77 : vector<8x128xf32>
    %79 = vector.extract_strided_slice %78 {offsets = [0, 0], sizes = [8, 32], strides = [1, 1]} : vector<8x128xf32> to vector<8x32xf32>
    %c8 = arith.constant 8 : index
    %c0_23 = arith.constant 0 : index
    %80 = vector.load %arg15[%c8, %c0_23] : memref<64x64xf32, #tpu.memory_space<vmem>>, vector<8x32xf32>
    tpu.vector_store %arg15[%c8, %c0_23], %79 {strides = array<i32>} : memref<64x64xf32, #tpu.memory_space<vmem>>, vector<8x32xf32>,
    %81 = vector.extract_strided_slice %78 {offsets = [0, 32], sizes = [8, 32], strides = [1, 1]} : vector<8x128xf32> to vector<8x32xf32>
    %c48 = arith.constant 48 : index
    %c32_24 = arith.constant 32 : index
    %82 = vector.load %arg15[%c48, %c32_24] : memref<64x64xf32, #tpu.memory_space<vmem>>, vector<8x32xf32>
    tpu.vector_store %arg15[%c48, %c32_24], %81 {strides = array<i32>} : memref<64x64xf32, #tpu.memory_space<vmem>>, vector<8x32xf32>,
    %83 = vector.extract_strided_slice %7 {offsets = [16, 0], sizes = [8, 512], strides = [1, 1]} : vector<64x512xf32> to vector<8x512xf32>
    %84 = vector.extract_strided_slice %9 {offsets = [40, 0], sizes = [8, 512], strides = [1, 1]} : vector<64x512xf32> to vector<8x512xf32>
    %85 = arith.addf %83, %84 : vector<8x512xf32>
    %86 = arith.truncf %78 : vector<8x128xf32> to vector<8x128xbf16>
    %cst_25 = arith.constant dense<0.000000e+00> : vector<8x512xf32>
    %87 = tpu.matmul %86, %10, %cst_25 {dimension_numbers = #tpu.dot_dimension_numbers<[1], [0], [0], [1], [0, 0, 1, 1], [], []>} : vector<8x128xbf16>, vector<128x512xbf16>, vector<8x512xf32> -> vector<8x512xf32>
    %88 = arith.addf %85, %87 : vector<8x512xf32>
    %89 = vector.extract_strided_slice %88 {offsets = [0, 0], sizes = [8, 128], strides = [1, 1]} : vector<8x512xf32> to vector<8x128xf32>
    %90 = arith.negf %89 : vector<8x128xf32>
    %91 = math.exp %90 : vector<8x128xf32>
    %cst_26 = arith.constant 1.000000e+00 : f32
    %92 = vector.broadcast %cst_26 : f32 to vector<8x128xf32>
    %93 = arith.addf %92, %91 : vector<8x128xf32>
    %94 = arith.divf %92, %93 : vector<8x128xf32>
    %95 = vector.extract_strided_slice %88 {offsets = [0, 128], sizes = [8, 128], strides = [1, 1]} : vector<8x512xf32> to vector<8x128xf32>
    %96 = arith.negf %95 : vector<8x128xf32>
    %97 = math.exp %96 : vector<8x128xf32>
    %cst_27 = arith.constant 1.000000e+00 : f32
    %98 = vector.broadcast %cst_27 : f32 to vector<8x128xf32>
    %99 = arith.addf %98, %97 : vector<8x128xf32>
    %100 = arith.divf %98, %99 : vector<8x128xf32>
    %101 = vector.extract_strided_slice %88 {offsets = [0, 256], sizes = [8, 128], strides = [1, 1]} : vector<8x512xf32> to vector<8x128xf32>
    %102 = math.tanh %101 : vector<8x128xf32>
    %103 = vector.extract_strided_slice %88 {offsets = [0, 384], sizes = [8, 128], strides = [1, 1]} : vector<8x512xf32> to vector<8x128xf32>
    %104 = arith.negf %103 : vector<8x128xf32>
    %105 = math.exp %104 : vector<8x128xf32>
    %cst_28 = arith.constant 1.000000e+00 : f32
    %106 = vector.broadcast %cst_28 : f32 to vector<8x128xf32>
    %107 = arith.addf %106, %105 : vector<8x128xf32>
    %108 = arith.divf %106, %107 : vector<8x128xf32>
    %109 = arith.mulf %100, %76 : vector<8x128xf32>
    %110 = arith.mulf %94, %102 : vector<8x128xf32>
    %111 = arith.addf %109, %110 : vector<8x128xf32>
    %112 = math.tanh %111 : vector<8x128xf32>
    %113 = arith.mulf %108, %112 : vector<8x128xf32>
    %114 = vector.extract_strided_slice %113 {offsets = [0, 0], sizes = [8, 32], strides = [1, 1]} : vector<8x128xf32> to vector<8x32xf32>
    %c16 = arith.constant 16 : index
    %c0_29 = arith.constant 0 : index
    %115 = vector.load %arg15[%c16, %c0_29] : memref<64x64xf32, #tpu.memory_space<vmem>>, vector<8x32xf32>
    tpu.vector_store %arg15[%c16, %c0_29], %114 {strides = array<i32>} : memref<64x64xf32, #tpu.memory_space<vmem>>, vector<8x32xf32>,
    %116 = vector.extract_strided_slice %113 {offsets = [0, 32], sizes = [8, 32], strides = [1, 1]} : vector<8x128xf32> to vector<8x32xf32>
    %c40 = arith.constant 40 : index
    %c32_30 = arith.constant 32 : index
    %117 = vector.load %arg15[%c40, %c32_30] : memref<64x64xf32, #tpu.memory_space<vmem>>, vector<8x32xf32>
    tpu.vector_store %arg15[%c40, %c32_30], %116 {strides = array<i32>} : memref<64x64xf32, #tpu.memory_space<vmem>>, vector<8x32xf32>,
    %118 = vector.extract_strided_slice %7 {offsets = [24, 0], sizes = [8, 512], strides = [1, 1]} : vector<64x512xf32> to vector<8x512xf32>
    %119 = vector.extract_strided_slice %9 {offsets = [32, 0], sizes = [8, 512], strides = [1, 1]} : vector<64x512xf32> to vector<8x512xf32>
    %120 = arith.addf %118, %119 : vector<8x512xf32>
    %121 = arith.truncf %113 : vector<8x128xf32> to vector<8x128xbf16>
    %cst_31 = arith.constant dense<0.000000e+00> : vector<8x512xf32>
    %122 = tpu.matmul %121, %10, %cst_31 {dimension_numbers = #tpu.dot_dimension_numbers<[1], [0], [0], [1], [0, 0, 1, 1], [], []>} : vector<8x128xbf16>, vector<128x512xbf16>, vector<8x512xf32> -> vector<8x512xf32>
    %123 = arith.addf %120, %122 : vector<8x512xf32>
    %124 = vector.extract_strided_slice %123 {offsets = [0, 0], sizes = [8, 128], strides = [1, 1]} : vector<8x512xf32> to vector<8x128xf32>
    %125 = arith.negf %124 : vector<8x128xf32>
    %126 = math.exp %125 : vector<8x128xf32>
    %cst_32 = arith.constant 1.000000e+00 : f32
    %127 = vector.broadcast %cst_32 : f32 to vector<8x128xf32>
    %128 = arith.addf %127, %126 : vector<8x128xf32>
    %129 = arith.divf %127, %128 : vector<8x128xf32>
    %130 = vector.extract_strided_slice %123 {offsets = [0, 128], sizes = [8, 128], strides = [1, 1]} : vector<8x512xf32> to vector<8x128xf32>
    %131 = arith.negf %130 : vector<8x128xf32>
    %132 = math.exp %131 : vector<8x128xf32>
    %cst_33 = arith.constant 1.000000e+00 : f32
    %133 = vector.broadcast %cst_33 : f32 to vector<8x128xf32>
    %134 = arith.addf %133, %132 : vector<8x128xf32>
    %135 = arith.divf %133, %134 : vector<8x128xf32>
    %136 = vector.extract_strided_slice %123 {offsets = [0, 256], sizes = [8, 128], strides = [1, 1]} : vector<8x512xf32> to vector<8x128xf32>
    %137 = math.tanh %136 : vector<8x128xf32>
    %138 = vector.extract_strided_slice %123 {offsets = [0, 384], sizes = [8, 128], strides = [1, 1]} : vector<8x512xf32> to vector<8x128xf32>
    %139 = arith.negf %138 : vector<8x128xf32>
    %140 = math.exp %139 : vector<8x128xf32>
    %cst_34 = arith.constant 1.000000e+00 : f32
    %141 = vector.broadcast %cst_34 : f32 to vector<8x128xf32>
    %142 = arith.addf %141, %140 : vector<8x128xf32>
    %143 = arith.divf %141, %142 : vector<8x128xf32>
    %144 = arith.mulf %135, %111 : vector<8x128xf32>
    %145 = arith.mulf %129, %137 : vector<8x128xf32>
    %146 = arith.addf %144, %145 : vector<8x128xf32>
    %147 = math.tanh %146 : vector<8x128xf32>
    %148 = arith.mulf %143, %147 : vector<8x128xf32>
    %149 = vector.extract_strided_slice %148 {offsets = [0, 0], sizes = [8, 32], strides = [1, 1]} : vector<8x128xf32> to vector<8x32xf32>
    %c24 = arith.constant 24 : index
    %c0_35 = arith.constant 0 : index
    %150 = vector.load %arg15[%c24, %c0_35] : memref<64x64xf32, #tpu.memory_space<vmem>>, vector<8x32xf32>
    tpu.vector_store %arg15[%c24, %c0_35], %149 {strides = array<i32>} : memref<64x64xf32, #tpu.memory_space<vmem>>, vector<8x32xf32>,
    %151 = vector.extract_strided_slice %148 {offsets = [0, 32], sizes = [8, 32], strides = [1, 1]} : vector<8x128xf32> to vector<8x32xf32>
    %c32_36 = arith.constant 32 : index
    %c32_37 = arith.constant 32 : index
    %152 = vector.load %arg15[%c32_36, %c32_37] : memref<64x64xf32, #tpu.memory_space<vmem>>, vector<8x32xf32>
    tpu.vector_store %arg15[%c32_36, %c32_37], %151 {strides = array<i32>} : memref<64x64xf32, #tpu.memory_space<vmem>>, vector<8x32xf32>,
    %153 = vector.extract_strided_slice %7 {offsets = [32, 0], sizes = [8, 512], strides = [1, 1]} : vector<64x512xf32> to vector<8x512xf32>
    %154 = vector.extract_strided_slice %9 {offsets = [24, 0], sizes = [8, 512], strides = [1, 1]} : vector<64x512xf32> to vector<8x512xf32>
    %155 = arith.addf %153, %154 : vector<8x512xf32>
    %156 = arith.truncf %148 : vector<8x128xf32> to vector<8x128xbf16>
    %cst_38 = arith.constant dense<0.000000e+00> : vector<8x512xf32>
    %157 = tpu.matmul %156, %10, %cst_38 {dimension_numbers = #tpu.dot_dimension_numbers<[1], [0], [0], [1], [0, 0, 1, 1], [], []>} : vector<8x128xbf16>, vector<128x512xbf16>, vector<8x512xf32> -> vector<8x512xf32>
    %158 = arith.addf %155, %157 : vector<8x512xf32>
    %159 = vector.extract_strided_slice %158 {offsets = [0, 0], sizes = [8, 128], strides = [1, 1]} : vector<8x512xf32> to vector<8x128xf32>
    %160 = arith.negf %159 : vector<8x128xf32>
    %161 = math.exp %160 : vector<8x128xf32>
    %cst_39 = arith.constant 1.000000e+00 : f32
    %162 = vector.broadcast %cst_39 : f32 to vector<8x128xf32>
    %163 = arith.addf %162, %161 : vector<8x128xf32>
    %164 = arith.divf %162, %163 : vector<8x128xf32>
    %165 = vector.extract_strided_slice %158 {offsets = [0, 128], sizes = [8, 128], strides = [1, 1]} : vector<8x512xf32> to vector<8x128xf32>
    %166 = arith.negf %165 : vector<8x128xf32>
    %167 = math.exp %166 : vector<8x128xf32>
    %cst_40 = arith.constant 1.000000e+00 : f32
    %168 = vector.broadcast %cst_40 : f32 to vector<8x128xf32>
    %169 = arith.addf %168, %167 : vector<8x128xf32>
    %170 = arith.divf %168, %169 : vector<8x128xf32>
    %171 = vector.extract_strided_slice %158 {offsets = [0, 256], sizes = [8, 128], strides = [1, 1]} : vector<8x512xf32> to vector<8x128xf32>
    %172 = math.tanh %171 : vector<8x128xf32>
    %173 = vector.extract_strided_slice %158 {offsets = [0, 384], sizes = [8, 128], strides = [1, 1]} : vector<8x512xf32> to vector<8x128xf32>
    %174 = arith.negf %173 : vector<8x128xf32>
    %175 = math.exp %174 : vector<8x128xf32>
    %cst_41 = arith.constant 1.000000e+00 : f32
    %176 = vector.broadcast %cst_41 : f32 to vector<8x128xf32>
    %177 = arith.addf %176, %175 : vector<8x128xf32>
    %178 = arith.divf %176, %177 : vector<8x128xf32>
    %179 = arith.mulf %170, %146 : vector<8x128xf32>
    %180 = arith.mulf %164, %172 : vector<8x128xf32>
    %181 = arith.addf %179, %180 : vector<8x128xf32>
    %182 = math.tanh %181 : vector<8x128xf32>
    %183 = arith.mulf %178, %182 : vector<8x128xf32>
    %184 = vector.extract_strided_slice %183 {offsets = [0, 0], sizes = [8, 32], strides = [1, 1]} : vector<8x128xf32> to vector<8x32xf32>
    %c32_42 = arith.constant 32 : index
    %c0_43 = arith.constant 0 : index
    %185 = vector.load %arg15[%c32_42, %c0_43] : memref<64x64xf32, #tpu.memory_space<vmem>>, vector<8x32xf32>
    tpu.vector_store %arg15[%c32_42, %c0_43], %184 {strides = array<i32>} : memref<64x64xf32, #tpu.memory_space<vmem>>, vector<8x32xf32>,
    %186 = vector.extract_strided_slice %183 {offsets = [0, 32], sizes = [8, 32], strides = [1, 1]} : vector<8x128xf32> to vector<8x32xf32>
    %c24_44 = arith.constant 24 : index
    %c32_45 = arith.constant 32 : index
    %187 = vector.load %arg15[%c24_44, %c32_45] : memref<64x64xf32, #tpu.memory_space<vmem>>, vector<8x32xf32>
    tpu.vector_store %arg15[%c24_44, %c32_45], %186 {strides = array<i32>} : memref<64x64xf32, #tpu.memory_space<vmem>>, vector<8x32xf32>,
    %188 = vector.extract_strided_slice %7 {offsets = [40, 0], sizes = [8, 512], strides = [1, 1]} : vector<64x512xf32> to vector<8x512xf32>
    %189 = vector.extract_strided_slice %9 {offsets = [16, 0], sizes = [8, 512], strides = [1, 1]} : vector<64x512xf32> to vector<8x512xf32>
    %190 = arith.addf %188, %189 : vector<8x512xf32>
    %191 = arith.truncf %183 : vector<8x128xf32> to vector<8x128xbf16>
    %cst_46 = arith.constant dense<0.000000e+00> : vector<8x512xf32>
    %192 = tpu.matmul %191, %10, %cst_46 {dimension_numbers = #tpu.dot_dimension_numbers<[1], [0], [0], [1], [0, 0, 1, 1], [], []>} : vector<8x128xbf16>, vector<128x512xbf16>, vector<8x512xf32> -> vector<8x512xf32>
    %193 = arith.addf %190, %192 : vector<8x512xf32>
    %194 = vector.extract_strided_slice %193 {offsets = [0, 0], sizes = [8, 128], strides = [1, 1]} : vector<8x512xf32> to vector<8x128xf32>
    %195 = arith.negf %194 : vector<8x128xf32>
    %196 = math.exp %195 : vector<8x128xf32>
    %cst_47 = arith.constant 1.000000e+00 : f32
    %197 = vector.broadcast %cst_47 : f32 to vector<8x128xf32>
    %198 = arith.addf %197, %196 : vector<8x128xf32>
    %199 = arith.divf %197, %198 : vector<8x128xf32>
    %200 = vector.extract_strided_slice %193 {offsets = [0, 128], sizes = [8, 128], strides = [1, 1]} : vector<8x512xf32> to vector<8x128xf32>
    %201 = arith.negf %200 : vector<8x128xf32>
    %202 = math.exp %201 : vector<8x128xf32>
    %cst_48 = arith.constant 1.000000e+00 : f32
    %203 = vector.broadcast %cst_48 : f32 to vector<8x128xf32>
    %204 = arith.addf %203, %202 : vector<8x128xf32>
    %205 = arith.divf %203, %204 : vector<8x128xf32>
    %206 = vector.extract_strided_slice %193 {offsets = [0, 256], sizes = [8, 128], strides = [1, 1]} : vector<8x512xf32> to vector<8x128xf32>
    %207 = math.tanh %206 : vector<8x128xf32>
    %208 = vector.extract_strided_slice %193 {offsets = [0, 384], sizes = [8, 128], strides = [1, 1]} : vector<8x512xf32> to vector<8x128xf32>
    %209 = arith.negf %208 : vector<8x128xf32>
    %210 = math.exp %209 : vector<8x128xf32>
    %cst_49 = arith.constant 1.000000e+00 : f32
    %211 = vector.broadcast %cst_49 : f32 to vector<8x128xf32>
    %212 = arith.addf %211, %210 : vector<8x128xf32>
    %213 = arith.divf %211, %212 : vector<8x128xf32>
    %214 = arith.mulf %205, %181 : vector<8x128xf32>
    %215 = arith.mulf %199, %207 : vector<8x128xf32>
    %216 = arith.addf %214, %215 : vector<8x128xf32>
    %217 = math.tanh %216 : vector<8x128xf32>
    %218 = arith.mulf %213, %217 : vector<8x128xf32>
    %219 = vector.extract_strided_slice %218 {offsets = [0, 0], sizes = [8, 32], strides = [1, 1]} : vector<8x128xf32> to vector<8x32xf32>
    %c40_50 = arith.constant 40 : index
    %c0_51 = arith.constant 0 : index
    %220 = vector.load %arg15[%c40_50, %c0_51] : memref<64x64xf32, #tpu.memory_space<vmem>>, vector<8x32xf32>
    tpu.vector_store %arg15[%c40_50, %c0_51], %219 {strides = array<i32>} : memref<64x64xf32, #tpu.memory_space<vmem>>, vector<8x32xf32>,
    %221 = vector.extract_strided_slice %218 {offsets = [0, 32], sizes = [8, 32], strides = [1, 1]} : vector<8x128xf32> to vector<8x32xf32>
    %c16_52 = arith.constant 16 : index
    %c32_53 = arith.constant 32 : index
    %222 = vector.load %arg15[%c16_52, %c32_53] : memref<64x64xf32, #tpu.memory_space<vmem>>, vector<8x32xf32>
    tpu.vector_store %arg15[%c16_52, %c32_53], %221 {strides = array<i32>} : memref<64x64xf32, #tpu.memory_space<vmem>>, vector<8x32xf32>,
    %223 = vector.extract_strided_slice %7 {offsets = [48, 0], sizes = [8, 512], strides = [1, 1]} : vector<64x512xf32> to vector<8x512xf32>
    %224 = vector.extract_strided_slice %9 {offsets = [8, 0], sizes = [8, 512], strides = [1, 1]} : vector<64x512xf32> to vector<8x512xf32>
    %225 = arith.addf %223, %224 : vector<8x512xf32>
    %226 = arith.truncf %218 : vector<8x128xf32> to vector<8x128xbf16>
    %cst_54 = arith.constant dense<0.000000e+00> : vector<8x512xf32>
    %227 = tpu.matmul %226, %10, %cst_54 {dimension_numbers = #tpu.dot_dimension_numbers<[1], [0], [0], [1], [0, 0, 1, 1], [], []>} : vector<8x128xbf16>, vector<128x512xbf16>, vector<8x512xf32> -> vector<8x512xf32>
    %228 = arith.addf %225, %227 : vector<8x512xf32>
    %229 = vector.extract_strided_slice %228 {offsets = [0, 0], sizes = [8, 128], strides = [1, 1]} : vector<8x512xf32> to vector<8x128xf32>
    %230 = arith.negf %229 : vector<8x128xf32>
    %231 = math.exp %230 : vector<8x128xf32>
    %cst_55 = arith.constant 1.000000e+00 : f32
    %232 = vector.broadcast %cst_55 : f32 to vector<8x128xf32>
    %233 = arith.addf %232, %231 : vector<8x128xf32>
    %234 = arith.divf %232, %233 : vector<8x128xf32>
    %235 = vector.extract_strided_slice %228 {offsets = [0, 128], sizes = [8, 128], strides = [1, 1]} : vector<8x512xf32> to vector<8x128xf32>
    %236 = arith.negf %235 : vector<8x128xf32>
    %237 = math.exp %236 : vector<8x128xf32>
    %cst_56 = arith.constant 1.000000e+00 : f32
    %238 = vector.broadcast %cst_56 : f32 to vector<8x128xf32>
    %239 = arith.addf %238, %237 : vector<8x128xf32>
    %240 = arith.divf %238, %239 : vector<8x128xf32>
    %241 = vector.extract_strided_slice %228 {offsets = [0, 256], sizes = [8, 128], strides = [1, 1]} : vector<8x512xf32> to vector<8x128xf32>
    %242 = math.tanh %241 : vector<8x128xf32>
    %243 = vector.extract_strided_slice %228 {offsets = [0, 384], sizes = [8, 128], strides = [1, 1]} : vector<8x512xf32> to vector<8x128xf32>
    %244 = arith.negf %243 : vector<8x128xf32>
    %245 = math.exp %244 : vector<8x128xf32>
    %cst_57 = arith.constant 1.000000e+00 : f32
    %246 = vector.broadcast %cst_57 : f32 to vector<8x128xf32>
    %247 = arith.addf %246, %245 : vector<8x128xf32>
    %248 = arith.divf %246, %247 : vector<8x128xf32>
    %249 = arith.mulf %240, %216 : vector<8x128xf32>
    %250 = arith.mulf %234, %242 : vector<8x128xf32>
    %251 = arith.addf %249, %250 : vector<8x128xf32>
    %252 = math.tanh %251 : vector<8x128xf32>
    %253 = arith.mulf %248, %252 : vector<8x128xf32>
    %254 = vector.extract_strided_slice %253 {offsets = [0, 0], sizes = [8, 32], strides = [1, 1]} : vector<8x128xf32> to vector<8x32xf32>
    %c48_58 = arith.constant 48 : index
    %c0_59 = arith.constant 0 : index
    %255 = vector.load %arg15[%c48_58, %c0_59] : memref<64x64xf32, #tpu.memory_space<vmem>>, vector<8x32xf32>
    tpu.vector_store %arg15[%c48_58, %c0_59], %254 {strides = array<i32>} : memref<64x64xf32, #tpu.memory_space<vmem>>, vector<8x32xf32>,
    %256 = vector.extract_strided_slice %253 {offsets = [0, 32], sizes = [8, 32], strides = [1, 1]} : vector<8x128xf32> to vector<8x32xf32>
    %c8_60 = arith.constant 8 : index
    %c32_61 = arith.constant 32 : index
    %257 = vector.load %arg15[%c8_60, %c32_61] : memref<64x64xf32, #tpu.memory_space<vmem>>, vector<8x32xf32>
    tpu.vector_store %arg15[%c8_60, %c32_61], %256 {strides = array<i32>} : memref<64x64xf32, #tpu.memory_space<vmem>>, vector<8x32xf32>,
    %258 = vector.extract_strided_slice %7 {offsets = [56, 0], sizes = [8, 512], strides = [1, 1]} : vector<64x512xf32> to vector<8x512xf32>
    %259 = vector.extract_strided_slice %9 {offsets = [0, 0], sizes = [8, 512], strides = [1, 1]} : vector<64x512xf32> to vector<8x512xf32>
    %260 = arith.addf %258, %259 : vector<8x512xf32>
    %261 = arith.truncf %253 : vector<8x128xf32> to vector<8x128xbf16>
    %cst_62 = arith.constant dense<0.000000e+00> : vector<8x512xf32>
    %262 = tpu.matmul %261, %10, %cst_62 {dimension_numbers = #tpu.dot_dimension_numbers<[1], [0], [0], [1], [0, 0, 1, 1], [], []>} : vector<8x128xbf16>, vector<128x512xbf16>, vector<8x512xf32> -> vector<8x512xf32>
    %263 = arith.addf %260, %262 : vector<8x512xf32>
    %264 = vector.extract_strided_slice %263 {offsets = [0, 0], sizes = [8, 128], strides = [1, 1]} : vector<8x512xf32> to vector<8x128xf32>
    %265 = arith.negf %264 : vector<8x128xf32>
    %266 = math.exp %265 : vector<8x128xf32>
    %cst_63 = arith.constant 1.000000e+00 : f32
    %267 = vector.broadcast %cst_63 : f32 to vector<8x128xf32>
    %268 = arith.addf %267, %266 : vector<8x128xf32>
    %269 = arith.divf %267, %268 : vector<8x128xf32>
    %270 = vector.extract_strided_slice %263 {offsets = [0, 128], sizes = [8, 128], strides = [1, 1]} : vector<8x512xf32> to vector<8x128xf32>
    %271 = arith.negf %270 : vector<8x128xf32>
    %272 = math.exp %271 : vector<8x128xf32>
    %cst_64 = arith.constant 1.000000e+00 : f32
    %273 = vector.broadcast %cst_64 : f32 to vector<8x128xf32>
    %274 = arith.addf %273, %272 : vector<8x128xf32>
    %275 = arith.divf %273, %274 : vector<8x128xf32>
    %276 = vector.extract_strided_slice %263 {offsets = [0, 256], sizes = [8, 128], strides = [1, 1]} : vector<8x512xf32> to vector<8x128xf32>
    %277 = math.tanh %276 : vector<8x128xf32>
    %278 = vector.extract_strided_slice %263 {offsets = [0, 384], sizes = [8, 128], strides = [1, 1]} : vector<8x512xf32> to vector<8x128xf32>
    %279 = arith.negf %278 : vector<8x128xf32>
    %280 = math.exp %279 : vector<8x128xf32>
    %cst_65 = arith.constant 1.000000e+00 : f32
    %281 = vector.broadcast %cst_65 : f32 to vector<8x128xf32>
    %282 = arith.addf %281, %280 : vector<8x128xf32>
    %283 = arith.divf %281, %282 : vector<8x128xf32>
    %284 = arith.mulf %275, %251 : vector<8x128xf32>
    %285 = arith.mulf %269, %277 : vector<8x128xf32>
    %286 = arith.addf %284, %285 : vector<8x128xf32>
    %287 = math.tanh %286 : vector<8x128xf32>
    %288 = arith.mulf %283, %287 : vector<8x128xf32>
    %289 = vector.extract_strided_slice %288 {offsets = [0, 0], sizes = [8, 32], strides = [1, 1]} : vector<8x128xf32> to vector<8x32xf32>
    %c56_66 = arith.constant 56 : index
    %c0_67 = arith.constant 0 : index
    %290 = vector.load %arg15[%c56_66, %c0_67] : memref<64x64xf32, #tpu.memory_space<vmem>>, vector<8x32xf32>
    tpu.vector_store %arg15[%c56_66, %c0_67], %289 {strides = array<i32>} : memref<64x64xf32, #tpu.memory_space<vmem>>, vector<8x32xf32>,
    %291 = vector.extract_strided_slice %288 {offsets = [0, 32], sizes = [8, 32], strides = [1, 1]} : vector<8x128xf32> to vector<8x32xf32>
    %c0_68 = arith.constant 0 : index
    %c32_69 = arith.constant 32 : index
    %292 = vector.load %arg15[%c0_68, %c32_69] : memref<64x64xf32, #tpu.memory_space<vmem>>, vector<8x32xf32>
    tpu.vector_store %arg15[%c0_68, %c32_69], %291 {strides = array<i32>} : memref<64x64xf32, #tpu.memory_space<vmem>>, vector<8x32xf32>,
    %c0_70 = arith.constant 0 : index
    %c0_71 = arith.constant 0 : index
    %293 = vector.load %arg15[%c0_70, %c0_71] : memref<64x64xf32, #tpu.memory_space<vmem>>, vector<64x64xf32>
    %294 = arith.truncf %293 : vector<64x64xf32> to vector<64x64xbf16>
    %c0_72 = arith.constant 0 : index
    %c0_73 = arith.constant 0 : index
    %295 = vector.load %arg5[%c0_72, %c0_73] : memref<64x512xbf16, #tpu.memory_space<vmem>>, vector<64x512xbf16>
    %cst_74 = arith.constant dense<0.000000e+00> : vector<64x512xf32>
    %296 = tpu.matmul %294, %295, %cst_74 {dimension_numbers = #tpu.dot_dimension_numbers<[1], [0], [0], [1], [0, 0, 1, 1], [], []>} : vector<64x64xbf16>, vector<64x512xbf16>, vector<64x512xf32> -> vector<64x512xf32>
    %c0_75 = arith.constant 0 : index
    %c0_76 = arith.constant 0 : index
    %297 = vector.load %arg8[%c0_75, %c0_76] : memref<1x512xf32, #tpu.memory_space<vmem>>, vector<1x512xf32>
    %298 = vector.broadcast %297 : vector<1x512xf32> to vector<64x512xf32>
    %299 = arith.addf %296, %298 : vector<64x512xf32>
    %c0_77 = arith.constant 0 : index
    %c0_78 = arith.constant 0 : index
    %300 = vector.load %arg6[%c0_77, %c0_78] : memref<64x512xbf16, #tpu.memory_space<vmem>>, vector<64x512xbf16>
    %cst_79 = arith.constant dense<0.000000e+00> : vector<64x512xf32>
    %301 = tpu.matmul %294, %300, %cst_79 {dimension_numbers = #tpu.dot_dimension_numbers<[1], [0], [0], [1], [0, 0, 1, 1], [], []>} : vector<64x64xbf16>, vector<64x512xbf16>, vector<64x512xf32> -> vector<64x512xf32>
    %c0_80 = arith.constant 0 : index
    %c0_81 = arith.constant 0 : index
    %302 = vector.load %arg7[%c0_80, %c0_81] : memref<128x512xbf16, #tpu.memory_space<vmem>>, vector<128x512xbf16>
    %cst_82 = arith.constant 0.000000e+00 : f32
    %303 = vector.broadcast %cst_82 : f32 to vector<8x128xf32>
    %cst_83 = arith.constant 0.000000e+00 : f32
    %304 = vector.broadcast %cst_83 : f32 to vector<8x128xf32>
    %305 = vector.extract_strided_slice %299 {offsets = [0, 0], sizes = [8, 512], strides = [1, 1]} : vector<64x512xf32> to vector<8x512xf32>
    %306 = vector.extract_strided_slice %301 {offsets = [56, 0], sizes = [8, 512], strides = [1, 1]} : vector<64x512xf32> to vector<8x512xf32>
    %307 = arith.addf %305, %306 : vector<8x512xf32>
    %308 = arith.truncf %303 : vector<8x128xf32> to vector<8x128xbf16>
    %cst_84 = arith.constant dense<0.000000e+00> : vector<8x512xf32>
    %309 = tpu.matmul %308, %302, %cst_84 {dimension_numbers = #tpu.dot_dimension_numbers<[1], [0], [0], [1], [0, 0, 1, 1], [], []>} : vector<8x128xbf16>, vector<128x512xbf16>, vector<8x512xf32> -> vector<8x512xf32>
    %310 = arith.addf %307, %309 : vector<8x512xf32>
    %311 = vector.extract_strided_slice %310 {offsets = [0, 0], sizes = [8, 128], strides = [1, 1]} : vector<8x512xf32> to vector<8x128xf32>
    %312 = arith.negf %311 : vector<8x128xf32>
    %313 = math.exp %312 : vector<8x128xf32>
    %cst_85 = arith.constant 1.000000e+00 : f32
    %314 = vector.broadcast %cst_85 : f32 to vector<8x128xf32>
    %315 = arith.addf %314, %313 : vector<8x128xf32>
    %316 = arith.divf %314, %315 : vector<8x128xf32>
    %317 = vector.extract_strided_slice %310 {offsets = [0, 128], sizes = [8, 128], strides = [1, 1]} : vector<8x512xf32> to vector<8x128xf32>
    %318 = arith.negf %317 : vector<8x128xf32>
    %319 = math.exp %318 : vector<8x128xf32>
    %cst_86 = arith.constant 1.000000e+00 : f32
    %320 = vector.broadcast %cst_86 : f32 to vector<8x128xf32>
    %321 = arith.addf %320, %319 : vector<8x128xf32>
    %322 = arith.divf %320, %321 : vector<8x128xf32>
    %323 = vector.extract_strided_slice %310 {offsets = [0, 256], sizes = [8, 128], strides = [1, 1]} : vector<8x512xf32> to vector<8x128xf32>
    %324 = math.tanh %323 : vector<8x128xf32>
    %325 = vector.extract_strided_slice %310 {offsets = [0, 384], sizes = [8, 128], strides = [1, 1]} : vector<8x512xf32> to vector<8x128xf32>
    %326 = arith.negf %325 : vector<8x128xf32>
    %327 = math.exp %326 : vector<8x128xf32>
    %cst_87 = arith.constant 1.000000e+00 : f32
    %328 = vector.broadcast %cst_87 : f32 to vector<8x128xf32>
    %329 = arith.addf %328, %327 : vector<8x128xf32>
    %330 = arith.divf %328, %329 : vector<8x128xf32>
    %331 = arith.mulf %322, %304 : vector<8x128xf32>
    %332 = arith.mulf %316, %324 : vector<8x128xf32>
    %333 = arith.addf %331, %332 : vector<8x128xf32>
    %334 = math.tanh %333 : vector<8x128xf32>
    %335 = arith.mulf %330, %334 : vector<8x128xf32>
    %336 = vector.extract_strided_slice %335 {offsets = [0, 0], sizes = [8, 32], strides = [1, 1]} : vector<8x128xf32> to vector<8x32xf32>
    %c0_88 = arith.constant 0 : index
    %c0_89 = arith.constant 0 : index
    %337 = vector.load %arg16[%c0_88, %c0_89] : memref<64x64xf32, #tpu.memory_space<vmem>>, vector<8x32xf32>
    tpu.vector_store %arg16[%c0_88, %c0_89], %336 {strides = array<i32>} : memref<64x64xf32, #tpu.memory_space<vmem>>, vector<8x32xf32>,
    %338 = vector.extract_strided_slice %335 {offsets = [0, 32], sizes = [8, 32], strides = [1, 1]} : vector<8x128xf32> to vector<8x32xf32>
    %c56_90 = arith.constant 56 : index
    %c32_91 = arith.constant 32 : index
    %339 = vector.load %arg16[%c56_90, %c32_91] : memref<64x64xf32, #tpu.memory_space<vmem>>, vector<8x32xf32>
    tpu.vector_store %arg16[%c56_90, %c32_91], %338 {strides = array<i32>} : memref<64x64xf32, #tpu.memory_space<vmem>>, vector<8x32xf32>,
    %340 = vector.extract_strided_slice %299 {offsets = [8, 0], sizes = [8, 512], strides = [1, 1]} : vector<64x512xf32> to vector<8x512xf32>
    %341 = vector.extract_strided_slice %301 {offsets = [48, 0], sizes = [8, 512], strides = [1, 1]} : vector<64x512xf32> to vector<8x512xf32>
    %342 = arith.addf %340, %341 : vector<8x512xf32>
    %343 = arith.truncf %335 : vector<8x128xf32> to vector<8x128xbf16>
    %cst_92 = arith.constant dense<0.000000e+00> : vector<8x512xf32>
    %344 = tpu.matmul %343, %302, %cst_92 {dimension_numbers = #tpu.dot_dimension_numbers<[1], [0], [0], [1], [0, 0, 1, 1], [], []>} : vector<8x128xbf16>, vector<128x512xbf16>, vector<8x512xf32> -> vector<8x512xf32>
    %345 = arith.addf %342, %344 : vector<8x512xf32>
    %346 = vector.extract_strided_slice %345 {offsets = [0, 0], sizes = [8, 128], strides = [1, 1]} : vector<8x512xf32> to vector<8x128xf32>
    %347 = arith.negf %346 : vector<8x128xf32>
    %348 = math.exp %347 : vector<8x128xf32>
    %cst_93 = arith.constant 1.000000e+00 : f32
    %349 = vector.broadcast %cst_93 : f32 to vector<8x128xf32>
    %350 = arith.addf %349, %348 : vector<8x128xf32>
    %351 = arith.divf %349, %350 : vector<8x128xf32>
    %352 = vector.extract_strided_slice %345 {offsets = [0, 128], sizes = [8, 128], strides = [1, 1]} : vector<8x512xf32> to vector<8x128xf32>
    %353 = arith.negf %352 : vector<8x128xf32>
    %354 = math.exp %353 : vector<8x128xf32>
    %cst_94 = arith.constant 1.000000e+00 : f32
    %355 = vector.broadcast %cst_94 : f32 to vector<8x128xf32>
    %356 = arith.addf %355, %354 : vector<8x128xf32>
    %357 = arith.divf %355, %356 : vector<8x128xf32>
    %358 = vector.extract_strided_slice %345 {offsets = [0, 256], sizes = [8, 128], strides = [1, 1]} : vector<8x512xf32> to vector<8x128xf32>
    %359 = math.tanh %358 : vector<8x128xf32>
    %360 = vector.extract_strided_slice %345 {offsets = [0, 384], sizes = [8, 128], strides = [1, 1]} : vector<8x512xf32> to vector<8x128xf32>
    %361 = arith.negf %360 : vector<8x128xf32>
    %362 = math.exp %361 : vector<8x128xf32>
    %cst_95 = arith.constant 1.000000e+00 : f32
    %363 = vector.broadcast %cst_95 : f32 to vector<8x128xf32>
    %364 = arith.addf %363, %362 : vector<8x128xf32>
    %365 = arith.divf %363, %364 : vector<8x128xf32>
    %366 = arith.mulf %357, %333 : vector<8x128xf32>
    %367 = arith.mulf %351, %359 : vector<8x128xf32>
    %368 = arith.addf %366, %367 : vector<8x128xf32>
    %369 = math.tanh %368 : vector<8x128xf32>
    %370 = arith.mulf %365, %369 : vector<8x128xf32>
    %371 = vector.extract_strided_slice %370 {offsets = [0, 0], sizes = [8, 32], strides = [1, 1]} : vector<8x128xf32> to vector<8x32xf32>
    %c8_96 = arith.constant 8 : index
    %c0_97 = arith.constant 0 : index
    %372 = vector.load %arg16[%c8_96, %c0_97] : memref<64x64xf32, #tpu.memory_space<vmem>>, vector<8x32xf32>
    tpu.vector_store %arg16[%c8_96, %c0_97], %371 {strides = array<i32>} : memref<64x64xf32, #tpu.memory_space<vmem>>, vector<8x32xf32>,
    %373 = vector.extract_strided_slice %370 {offsets = [0, 32], sizes = [8, 32], strides = [1, 1]} : vector<8x128xf32> to vector<8x32xf32>
    %c48_98 = arith.constant 48 : index
    %c32_99 = arith.constant 32 : index
    %374 = vector.load %arg16[%c48_98, %c32_99] : memref<64x64xf32, #tpu.memory_space<vmem>>, vector<8x32xf32>
    tpu.vector_store %arg16[%c48_98, %c32_99], %373 {strides = array<i32>} : memref<64x64xf32, #tpu.memory_space<vmem>>, vector<8x32xf32>,
    %375 = vector.extract_strided_slice %299 {offsets = [16, 0], sizes = [8, 512], strides = [1, 1]} : vector<64x512xf32> to vector<8x512xf32>
    %376 = vector.extract_strided_slice %301 {offsets = [40, 0], sizes = [8, 512], strides = [1, 1]} : vector<64x512xf32> to vector<8x512xf32>
    %377 = arith.addf %375, %376 : vector<8x512xf32>
    %378 = arith.truncf %370 : vector<8x128xf32> to vector<8x128xbf16>
    %cst_100 = arith.constant dense<0.000000e+00> : vector<8x512xf32>
    %379 = tpu.matmul %378, %302, %cst_100 {dimension_numbers = #tpu.dot_dimension_numbers<[1], [0], [0], [1], [0, 0, 1, 1], [], []>} : vector<8x128xbf16>, vector<128x512xbf16>, vector<8x512xf32> -> vector<8x512xf32>
    %380 = arith.addf %377, %379 : vector<8x512xf32>
    %381 = vector.extract_strided_slice %380 {offsets = [0, 0], sizes = [8, 128], strides = [1, 1]} : vector<8x512xf32> to vector<8x128xf32>
    %382 = arith.negf %381 : vector<8x128xf32>
    %383 = math.exp %382 : vector<8x128xf32>
    %cst_101 = arith.constant 1.000000e+00 : f32
    %384 = vector.broadcast %cst_101 : f32 to vector<8x128xf32>
    %385 = arith.addf %384, %383 : vector<8x128xf32>
    %386 = arith.divf %384, %385 : vector<8x128xf32>
    %387 = vector.extract_strided_slice %380 {offsets = [0, 128], sizes = [8, 128], strides = [1, 1]} : vector<8x512xf32> to vector<8x128xf32>
    %388 = arith.negf %387 : vector<8x128xf32>
    %389 = math.exp %388 : vector<8x128xf32>
    %cst_102 = arith.constant 1.000000e+00 : f32
    %390 = vector.broadcast %cst_102 : f32 to vector<8x128xf32>
    %391 = arith.addf %390, %389 : vector<8x128xf32>
    %392 = arith.divf %390, %391 : vector<8x128xf32>
    %393 = vector.extract_strided_slice %380 {offsets = [0, 256], sizes = [8, 128], strides = [1, 1]} : vector<8x512xf32> to vector<8x128xf32>
    %394 = math.tanh %393 : vector<8x128xf32>
    %395 = vector.extract_strided_slice %380 {offsets = [0, 384], sizes = [8, 128], strides = [1, 1]} : vector<8x512xf32> to vector<8x128xf32>
    %396 = arith.negf %395 : vector<8x128xf32>
    %397 = math.exp %396 : vector<8x128xf32>
    %cst_103 = arith.constant 1.000000e+00 : f32
    %398 = vector.broadcast %cst_103 : f32 to vector<8x128xf32>
    %399 = arith.addf %398, %397 : vector<8x128xf32>
    %400 = arith.divf %398, %399 : vector<8x128xf32>
    %401 = arith.mulf %392, %368 : vector<8x128xf32>
    %402 = arith.mulf %386, %394 : vector<8x128xf32>
    %403 = arith.addf %401, %402 : vector<8x128xf32>
    %404 = math.tanh %403 : vector<8x128xf32>
    %405 = arith.mulf %400, %404 : vector<8x128xf32>
    %406 = vector.extract_strided_slice %405 {offsets = [0, 0], sizes = [8, 32], strides = [1, 1]} : vector<8x128xf32> to vector<8x32xf32>
    %c16_104 = arith.constant 16 : index
    %c0_105 = arith.constant 0 : index
    %407 = vector.load %arg16[%c16_104, %c0_105] : memref<64x64xf32, #tpu.memory_space<vmem>>, vector<8x32xf32>
    tpu.vector_store %arg16[%c16_104, %c0_105], %406 {strides = array<i32>} : memref<64x64xf32, #tpu.memory_space<vmem>>, vector<8x32xf32>,
    %408 = vector.extract_strided_slice %405 {offsets = [0, 32], sizes = [8, 32], strides = [1, 1]} : vector<8x128xf32> to vector<8x32xf32>
    %c40_106 = arith.constant 40 : index
    %c32_107 = arith.constant 32 : index
    %409 = vector.load %arg16[%c40_106, %c32_107] : memref<64x64xf32, #tpu.memory_space<vmem>>, vector<8x32xf32>
    tpu.vector_store %arg16[%c40_106, %c32_107], %408 {strides = array<i32>} : memref<64x64xf32, #tpu.memory_space<vmem>>, vector<8x32xf32>,
    %410 = vector.extract_strided_slice %299 {offsets = [24, 0], sizes = [8, 512], strides = [1, 1]} : vector<64x512xf32> to vector<8x512xf32>
    %411 = vector.extract_strided_slice %301 {offsets = [32, 0], sizes = [8, 512], strides = [1, 1]} : vector<64x512xf32> to vector<8x512xf32>
    %412 = arith.addf %410, %411 : vector<8x512xf32>
    %413 = arith.truncf %405 : vector<8x128xf32> to vector<8x128xbf16>
    %cst_108 = arith.constant dense<0.000000e+00> : vector<8x512xf32>
    %414 = tpu.matmul %413, %302, %cst_108 {dimension_numbers = #tpu.dot_dimension_numbers<[1], [0], [0], [1], [0, 0, 1, 1], [], []>} : vector<8x128xbf16>, vector<128x512xbf16>, vector<8x512xf32> -> vector<8x512xf32>
    %415 = arith.addf %412, %414 : vector<8x512xf32>
    %416 = vector.extract_strided_slice %415 {offsets = [0, 0], sizes = [8, 128], strides = [1, 1]} : vector<8x512xf32> to vector<8x128xf32>
    %417 = arith.negf %416 : vector<8x128xf32>
    %418 = math.exp %417 : vector<8x128xf32>
    %cst_109 = arith.constant 1.000000e+00 : f32
    %419 = vector.broadcast %cst_109 : f32 to vector<8x128xf32>
    %420 = arith.addf %419, %418 : vector<8x128xf32>
    %421 = arith.divf %419, %420 : vector<8x128xf32>
    %422 = vector.extract_strided_slice %415 {offsets = [0, 128], sizes = [8, 128], strides = [1, 1]} : vector<8x512xf32> to vector<8x128xf32>
    %423 = arith.negf %422 : vector<8x128xf32>
    %424 = math.exp %423 : vector<8x128xf32>
    %cst_110 = arith.constant 1.000000e+00 : f32
    %425 = vector.broadcast %cst_110 : f32 to vector<8x128xf32>
    %426 = arith.addf %425, %424 : vector<8x128xf32>
    %427 = arith.divf %425, %426 : vector<8x128xf32>
    %428 = vector.extract_strided_slice %415 {offsets = [0, 256], sizes = [8, 128], strides = [1, 1]} : vector<8x512xf32> to vector<8x128xf32>
    %429 = math.tanh %428 : vector<8x128xf32>
    %430 = vector.extract_strided_slice %415 {offsets = [0, 384], sizes = [8, 128], strides = [1, 1]} : vector<8x512xf32> to vector<8x128xf32>
    %431 = arith.negf %430 : vector<8x128xf32>
    %432 = math.exp %431 : vector<8x128xf32>
    %cst_111 = arith.constant 1.000000e+00 : f32
    %433 = vector.broadcast %cst_111 : f32 to vector<8x128xf32>
    %434 = arith.addf %433, %432 : vector<8x128xf32>
    %435 = arith.divf %433, %434 : vector<8x128xf32>
    %436 = arith.mulf %427, %403 : vector<8x128xf32>
    %437 = arith.mulf %421, %429 : vector<8x128xf32>
    %438 = arith.addf %436, %437 : vector<8x128xf32>
    %439 = math.tanh %438 : vector<8x128xf32>
    %440 = arith.mulf %435, %439 : vector<8x128xf32>
    %441 = vector.extract_strided_slice %440 {offsets = [0, 0], sizes = [8, 32], strides = [1, 1]} : vector<8x128xf32> to vector<8x32xf32>
    %c24_112 = arith.constant 24 : index
    %c0_113 = arith.constant 0 : index
    %442 = vector.load %arg16[%c24_112, %c0_113] : memref<64x64xf32, #tpu.memory_space<vmem>>, vector<8x32xf32>
    tpu.vector_store %arg16[%c24_112, %c0_113], %441 {strides = array<i32>} : memref<64x64xf32, #tpu.memory_space<vmem>>, vector<8x32xf32>,
    %443 = vector.extract_strided_slice %440 {offsets = [0, 32], sizes = [8, 32], strides = [1, 1]} : vector<8x128xf32> to vector<8x32xf32>
    %c32_114 = arith.constant 32 : index
    %c32_115 = arith.constant 32 : index
    %444 = vector.load %arg16[%c32_114, %c32_115] : memref<64x64xf32, #tpu.memory_space<vmem>>, vector<8x32xf32>
    tpu.vector_store %arg16[%c32_114, %c32_115], %443 {strides = array<i32>} : memref<64x64xf32, #tpu.memory_space<vmem>>, vector<8x32xf32>,
    %445 = vector.extract_strided_slice %299 {offsets = [32, 0], sizes = [8, 512], strides = [1, 1]} : vector<64x512xf32> to vector<8x512xf32>
    %446 = vector.extract_strided_slice %301 {offsets = [24, 0], sizes = [8, 512], strides = [1, 1]} : vector<64x512xf32> to vector<8x512xf32>
    %447 = arith.addf %445, %446 : vector<8x512xf32>
    %448 = arith.truncf %440 : vector<8x128xf32> to vector<8x128xbf16>
    %cst_116 = arith.constant dense<0.000000e+00> : vector<8x512xf32>
    %449 = tpu.matmul %448, %302, %cst_116 {dimension_numbers = #tpu.dot_dimension_numbers<[1], [0], [0], [1], [0, 0, 1, 1], [], []>} : vector<8x128xbf16>, vector<128x512xbf16>, vector<8x512xf32> -> vector<8x512xf32>
    %450 = arith.addf %447, %449 : vector<8x512xf32>
    %451 = vector.extract_strided_slice %450 {offsets = [0, 0], sizes = [8, 128], strides = [1, 1]} : vector<8x512xf32> to vector<8x128xf32>
    %452 = arith.negf %451 : vector<8x128xf32>
    %453 = math.exp %452 : vector<8x128xf32>
    %cst_117 = arith.constant 1.000000e+00 : f32
    %454 = vector.broadcast %cst_117 : f32 to vector<8x128xf32>
    %455 = arith.addf %454, %453 : vector<8x128xf32>
    %456 = arith.divf %454, %455 : vector<8x128xf32>
    %457 = vector.extract_strided_slice %450 {offsets = [0, 128], sizes = [8, 128], strides = [1, 1]} : vector<8x512xf32> to vector<8x128xf32>
    %458 = arith.negf %457 : vector<8x128xf32>
    %459 = math.exp %458 : vector<8x128xf32>
    %cst_118 = arith.constant 1.000000e+00 : f32
    %460 = vector.broadcast %cst_118 : f32 to vector<8x128xf32>
    %461 = arith.addf %460, %459 : vector<8x128xf32>
    %462 = arith.divf %460, %461 : vector<8x128xf32>
    %463 = vector.extract_strided_slice %450 {offsets = [0, 256], sizes = [8, 128], strides = [1, 1]} : vector<8x512xf32> to vector<8x128xf32>
    %464 = math.tanh %463 : vector<8x128xf32>
    %465 = vector.extract_strided_slice %450 {offsets = [0, 384], sizes = [8, 128], strides = [1, 1]} : vector<8x512xf32> to vector<8x128xf32>
    %466 = arith.negf %465 : vector<8x128xf32>
    %467 = math.exp %466 : vector<8x128xf32>
    %cst_119 = arith.constant 1.000000e+00 : f32
    %468 = vector.broadcast %cst_119 : f32 to vector<8x128xf32>
    %469 = arith.addf %468, %467 : vector<8x128xf32>
    %470 = arith.divf %468, %469 : vector<8x128xf32>
    %471 = arith.mulf %462, %438 : vector<8x128xf32>
    %472 = arith.mulf %456, %464 : vector<8x128xf32>
    %473 = arith.addf %471, %472 : vector<8x128xf32>
    %474 = math.tanh %473 : vector<8x128xf32>
    %475 = arith.mulf %470, %474 : vector<8x128xf32>
    %476 = vector.extract_strided_slice %475 {offsets = [0, 0], sizes = [8, 32], strides = [1, 1]} : vector<8x128xf32> to vector<8x32xf32>
    %c32_120 = arith.constant 32 : index
    %c0_121 = arith.constant 0 : index
    %477 = vector.load %arg16[%c32_120, %c0_121] : memref<64x64xf32, #tpu.memory_space<vmem>>, vector<8x32xf32>
    tpu.vector_store %arg16[%c32_120, %c0_121], %476 {strides = array<i32>} : memref<64x64xf32, #tpu.memory_space<vmem>>, vector<8x32xf32>,
    %478 = vector.extract_strided_slice %475 {offsets = [0, 32], sizes = [8, 32], strides = [1, 1]} : vector<8x128xf32> to vector<8x32xf32>
    %c24_122 = arith.constant 24 : index
    %c32_123 = arith.constant 32 : index
    %479 = vector.load %arg16[%c24_122, %c32_123] : memref<64x64xf32, #tpu.memory_space<vmem>>, vector<8x32xf32>
    tpu.vector_store %arg16[%c24_122, %c32_123], %478 {strides = array<i32>} : memref<64x64xf32, #tpu.memory_space<vmem>>, vector<8x32xf32>,
    %480 = vector.extract_strided_slice %299 {offsets = [40, 0], sizes = [8, 512], strides = [1, 1]} : vector<64x512xf32> to vector<8x512xf32>
    %481 = vector.extract_strided_slice %301 {offsets = [16, 0], sizes = [8, 512], strides = [1, 1]} : vector<64x512xf32> to vector<8x512xf32>
    %482 = arith.addf %480, %481 : vector<8x512xf32>
    %483 = arith.truncf %475 : vector<8x128xf32> to vector<8x128xbf16>
    %cst_124 = arith.constant dense<0.000000e+00> : vector<8x512xf32>
    %484 = tpu.matmul %483, %302, %cst_124 {dimension_numbers = #tpu.dot_dimension_numbers<[1], [0], [0], [1], [0, 0, 1, 1], [], []>} : vector<8x128xbf16>, vector<128x512xbf16>, vector<8x512xf32> -> vector<8x512xf32>
    %485 = arith.addf %482, %484 : vector<8x512xf32>
    %486 = vector.extract_strided_slice %485 {offsets = [0, 0], sizes = [8, 128], strides = [1, 1]} : vector<8x512xf32> to vector<8x128xf32>
    %487 = arith.negf %486 : vector<8x128xf32>
    %488 = math.exp %487 : vector<8x128xf32>
    %cst_125 = arith.constant 1.000000e+00 : f32
    %489 = vector.broadcast %cst_125 : f32 to vector<8x128xf32>
    %490 = arith.addf %489, %488 : vector<8x128xf32>
    %491 = arith.divf %489, %490 : vector<8x128xf32>
    %492 = vector.extract_strided_slice %485 {offsets = [0, 128], sizes = [8, 128], strides = [1, 1]} : vector<8x512xf32> to vector<8x128xf32>
    %493 = arith.negf %492 : vector<8x128xf32>
    %494 = math.exp %493 : vector<8x128xf32>
    %cst_126 = arith.constant 1.000000e+00 : f32
    %495 = vector.broadcast %cst_126 : f32 to vector<8x128xf32>
    %496 = arith.addf %495, %494 : vector<8x128xf32>
    %497 = arith.divf %495, %496 : vector<8x128xf32>
    %498 = vector.extract_strided_slice %485 {offsets = [0, 256], sizes = [8, 128], strides = [1, 1]} : vector<8x512xf32> to vector<8x128xf32>
    %499 = math.tanh %498 : vector<8x128xf32>
    %500 = vector.extract_strided_slice %485 {offsets = [0, 384], sizes = [8, 128], strides = [1, 1]} : vector<8x512xf32> to vector<8x128xf32>
    %501 = arith.negf %500 : vector<8x128xf32>
    %502 = math.exp %501 : vector<8x128xf32>
    %cst_127 = arith.constant 1.000000e+00 : f32
    %503 = vector.broadcast %cst_127 : f32 to vector<8x128xf32>
    %504 = arith.addf %503, %502 : vector<8x128xf32>
    %505 = arith.divf %503, %504 : vector<8x128xf32>
    %506 = arith.mulf %497, %473 : vector<8x128xf32>
    %507 = arith.mulf %491, %499 : vector<8x128xf32>
    %508 = arith.addf %506, %507 : vector<8x128xf32>
    %509 = math.tanh %508 : vector<8x128xf32>
    %510 = arith.mulf %505, %509 : vector<8x128xf32>
    %511 = vector.extract_strided_slice %510 {offsets = [0, 0], sizes = [8, 32], strides = [1, 1]} : vector<8x128xf32> to vector<8x32xf32>
    %c40_128 = arith.constant 40 : index
    %c0_129 = arith.constant 0 : index
    %512 = vector.load %arg16[%c40_128, %c0_129] : memref<64x64xf32, #tpu.memory_space<vmem>>, vector<8x32xf32>
    tpu.vector_store %arg16[%c40_128, %c0_129], %511 {strides = array<i32>} : memref<64x64xf32, #tpu.memory_space<vmem>>, vector<8x32xf32>,
    %513 = vector.extract_strided_slice %510 {offsets = [0, 32], sizes = [8, 32], strides = [1, 1]} : vector<8x128xf32> to vector<8x32xf32>
    %c16_130 = arith.constant 16 : index
    %c32_131 = arith.constant 32 : index
    %514 = vector.load %arg16[%c16_130, %c32_131] : memref<64x64xf32, #tpu.memory_space<vmem>>, vector<8x32xf32>
    tpu.vector_store %arg16[%c16_130, %c32_131], %513 {strides = array<i32>} : memref<64x64xf32, #tpu.memory_space<vmem>>, vector<8x32xf32>,
    %515 = vector.extract_strided_slice %299 {offsets = [48, 0], sizes = [8, 512], strides = [1, 1]} : vector<64x512xf32> to vector<8x512xf32>
    %516 = vector.extract_strided_slice %301 {offsets = [8, 0], sizes = [8, 512], strides = [1, 1]} : vector<64x512xf32> to vector<8x512xf32>
    %517 = arith.addf %515, %516 : vector<8x512xf32>
    %518 = arith.truncf %510 : vector<8x128xf32> to vector<8x128xbf16>
    %cst_132 = arith.constant dense<0.000000e+00> : vector<8x512xf32>
    %519 = tpu.matmul %518, %302, %cst_132 {dimension_numbers = #tpu.dot_dimension_numbers<[1], [0], [0], [1], [0, 0, 1, 1], [], []>} : vector<8x128xbf16>, vector<128x512xbf16>, vector<8x512xf32> -> vector<8x512xf32>
    %520 = arith.addf %517, %519 : vector<8x512xf32>
    %521 = vector.extract_strided_slice %520 {offsets = [0, 0], sizes = [8, 128], strides = [1, 1]} : vector<8x512xf32> to vector<8x128xf32>
    %522 = arith.negf %521 : vector<8x128xf32>
    %523 = math.exp %522 : vector<8x128xf32>
    %cst_133 = arith.constant 1.000000e+00 : f32
    %524 = vector.broadcast %cst_133 : f32 to vector<8x128xf32>
    %525 = arith.addf %524, %523 : vector<8x128xf32>
    %526 = arith.divf %524, %525 : vector<8x128xf32>
    %527 = vector.extract_strided_slice %520 {offsets = [0, 128], sizes = [8, 128], strides = [1, 1]} : vector<8x512xf32> to vector<8x128xf32>
    %528 = arith.negf %527 : vector<8x128xf32>
    %529 = math.exp %528 : vector<8x128xf32>
    %cst_134 = arith.constant 1.000000e+00 : f32
    %530 = vector.broadcast %cst_134 : f32 to vector<8x128xf32>
    %531 = arith.addf %530, %529 : vector<8x128xf32>
    %532 = arith.divf %530, %531 : vector<8x128xf32>
    %533 = vector.extract_strided_slice %520 {offsets = [0, 256], sizes = [8, 128], strides = [1, 1]} : vector<8x512xf32> to vector<8x128xf32>
    %534 = math.tanh %533 : vector<8x128xf32>
    %535 = vector.extract_strided_slice %520 {offsets = [0, 384], sizes = [8, 128], strides = [1, 1]} : vector<8x512xf32> to vector<8x128xf32>
    %536 = arith.negf %535 : vector<8x128xf32>
    %537 = math.exp %536 : vector<8x128xf32>
    %cst_135 = arith.constant 1.000000e+00 : f32
    %538 = vector.broadcast %cst_135 : f32 to vector<8x128xf32>
    %539 = arith.addf %538, %537 : vector<8x128xf32>
    %540 = arith.divf %538, %539 : vector<8x128xf32>
    %541 = arith.mulf %532, %508 : vector<8x128xf32>
    %542 = arith.mulf %526, %534 : vector<8x128xf32>
    %543 = arith.addf %541, %542 : vector<8x128xf32>
    %544 = math.tanh %543 : vector<8x128xf32>
    %545 = arith.mulf %540, %544 : vector<8x128xf32>
    %546 = vector.extract_strided_slice %545 {offsets = [0, 0], sizes = [8, 32], strides = [1, 1]} : vector<8x128xf32> to vector<8x32xf32>
    %c48_136 = arith.constant 48 : index
    %c0_137 = arith.constant 0 : index
    %547 = vector.load %arg16[%c48_136, %c0_137] : memref<64x64xf32, #tpu.memory_space<vmem>>, vector<8x32xf32>
    tpu.vector_store %arg16[%c48_136, %c0_137], %546 {strides = array<i32>} : memref<64x64xf32, #tpu.memory_space<vmem>>, vector<8x32xf32>,
    %548 = vector.extract_strided_slice %545 {offsets = [0, 32], sizes = [8, 32], strides = [1, 1]} : vector<8x128xf32> to vector<8x32xf32>
    %c8_138 = arith.constant 8 : index
    %c32_139 = arith.constant 32 : index
    %549 = vector.load %arg16[%c8_138, %c32_139] : memref<64x64xf32, #tpu.memory_space<vmem>>, vector<8x32xf32>
    tpu.vector_store %arg16[%c8_138, %c32_139], %548 {strides = array<i32>} : memref<64x64xf32, #tpu.memory_space<vmem>>, vector<8x32xf32>,
    %550 = vector.extract_strided_slice %299 {offsets = [56, 0], sizes = [8, 512], strides = [1, 1]} : vector<64x512xf32> to vector<8x512xf32>
    %551 = vector.extract_strided_slice %301 {offsets = [0, 0], sizes = [8, 512], strides = [1, 1]} : vector<64x512xf32> to vector<8x512xf32>
    %552 = arith.addf %550, %551 : vector<8x512xf32>
    %553 = arith.truncf %545 : vector<8x128xf32> to vector<8x128xbf16>
    %cst_140 = arith.constant dense<0.000000e+00> : vector<8x512xf32>
    %554 = tpu.matmul %553, %302, %cst_140 {dimension_numbers = #tpu.dot_dimension_numbers<[1], [0], [0], [1], [0, 0, 1, 1], [], []>} : vector<8x128xbf16>, vector<128x512xbf16>, vector<8x512xf32> -> vector<8x512xf32>
    %555 = arith.addf %552, %554 : vector<8x512xf32>
    %556 = vector.extract_strided_slice %555 {offsets = [0, 0], sizes = [8, 128], strides = [1, 1]} : vector<8x512xf32> to vector<8x128xf32>
    %557 = arith.negf %556 : vector<8x128xf32>
    %558 = math.exp %557 : vector<8x128xf32>
    %cst_141 = arith.constant 1.000000e+00 : f32
    %559 = vector.broadcast %cst_141 : f32 to vector<8x128xf32>
    %560 = arith.addf %559, %558 : vector<8x128xf32>
    %561 = arith.divf %559, %560 : vector<8x128xf32>
    %562 = vector.extract_strided_slice %555 {offsets = [0, 128], sizes = [8, 128], strides = [1, 1]} : vector<8x512xf32> to vector<8x128xf32>
    %563 = arith.negf %562 : vector<8x128xf32>
    %564 = math.exp %563 : vector<8x128xf32>
    %cst_142 = arith.constant 1.000000e+00 : f32
    %565 = vector.broadcast %cst_142 : f32 to vector<8x128xf32>
    %566 = arith.addf %565, %564 : vector<8x128xf32>
    %567 = arith.divf %565, %566 : vector<8x128xf32>
    %568 = vector.extract_strided_slice %555 {offsets = [0, 256], sizes = [8, 128], strides = [1, 1]} : vector<8x512xf32> to vector<8x128xf32>
    %569 = math.tanh %568 : vector<8x128xf32>
    %570 = vector.extract_strided_slice %555 {offsets = [0, 384], sizes = [8, 128], strides = [1, 1]} : vector<8x512xf32> to vector<8x128xf32>
    %571 = arith.negf %570 : vector<8x128xf32>
    %572 = math.exp %571 : vector<8x128xf32>
    %cst_143 = arith.constant 1.000000e+00 : f32
    %573 = vector.broadcast %cst_143 : f32 to vector<8x128xf32>
    %574 = arith.addf %573, %572 : vector<8x128xf32>
    %575 = arith.divf %573, %574 : vector<8x128xf32>
    %576 = arith.mulf %567, %543 : vector<8x128xf32>
    %577 = arith.mulf %561, %569 : vector<8x128xf32>
    %578 = arith.addf %576, %577 : vector<8x128xf32>
    %579 = math.tanh %578 : vector<8x128xf32>
    %580 = arith.mulf %575, %579 : vector<8x128xf32>
    %581 = vector.extract_strided_slice %580 {offsets = [0, 0], sizes = [8, 32], strides = [1, 1]} : vector<8x128xf32> to vector<8x32xf32>
    %c56_144 = arith.constant 56 : index
    %c0_145 = arith.constant 0 : index
    %582 = vector.load %arg16[%c56_144, %c0_145] : memref<64x64xf32, #tpu.memory_space<vmem>>, vector<8x32xf32>
    tpu.vector_store %arg16[%c56_144, %c0_145], %581 {strides = array<i32>} : memref<64x64xf32, #tpu.memory_space<vmem>>, vector<8x32xf32>,
    %583 = vector.extract_strided_slice %580 {offsets = [0, 32], sizes = [8, 32], strides = [1, 1]} : vector<8x128xf32> to vector<8x32xf32>
    %c0_146 = arith.constant 0 : index
    %c32_147 = arith.constant 32 : index
    %584 = vector.load %arg16[%c0_146, %c32_147] : memref<64x64xf32, #tpu.memory_space<vmem>>, vector<8x32xf32>
    tpu.vector_store %arg16[%c0_146, %c32_147], %583 {strides = array<i32>} : memref<64x64xf32, #tpu.memory_space<vmem>>, vector<8x32xf32>,
    %c0_148 = arith.constant 0 : index
    %c0_149 = arith.constant 0 : index
    %585 = vector.load %arg16[%c0_148, %c0_149] : memref<64x64xf32, #tpu.memory_space<vmem>>, vector<64x64xf32>
    %586 = arith.truncf %585 : vector<64x64xf32> to vector<64x64xbf16>
    %c0_150 = arith.constant 0 : index
    %c0_151 = arith.constant 0 : index
    %587 = vector.load %arg9[%c0_150, %c0_151] : memref<64x64xbf16, #tpu.memory_space<vmem>>, vector<64x64xbf16>
    %cst_152 = arith.constant dense<0.000000e+00> : vector<64x64xf32>
    %588 = tpu.matmul %586, %587, %cst_152 {dimension_numbers = #tpu.dot_dimension_numbers<[1], [0], [0], [1], [0, 0, 1, 1], [], []>} : vector<64x64xbf16>, vector<64x64xbf16>, vector<64x64xf32> -> vector<64x64xf32>
    %589 = arith.truncf %1 : vector<64x32xf32> to vector<64x32xbf16>
    %c0_153 = arith.constant 0 : index
    %c0_154 = arith.constant 0 : index
    %590 = vector.load %arg10[%c0_153, %c0_154] : memref<32x64xbf16, #tpu.memory_space<vmem>>, vector<32x64xbf16>
    %cst_155 = arith.constant dense<0.000000e+00> : vector<64x64xf32>
    %591 = tpu.matmul %589, %590, %cst_155 {dimension_numbers = #tpu.dot_dimension_numbers<[1], [0], [0], [1], [0, 0, 1, 1], [], []>} : vector<64x32xbf16>, vector<32x64xbf16>, vector<64x64xf32> -> vector<64x64xf32>
    %592 = arith.addf %588, %591 : vector<64x64xf32>
    %c0_156 = arith.constant 0 : index
    %c0_157 = arith.constant 0 : index
    %593 = vector.load %arg11[%c0_156, %c0_157] : memref<1x64xf32, #tpu.memory_space<vmem>>, vector<1x64xf32>
    %594 = vector.broadcast %593 : vector<1x64xf32> to vector<64x64xf32>
    %595 = arith.addf %592, %594 : vector<64x64xf32>
    %596 = math.tanh %595 : vector<64x64xf32>
    %597 = vector.shape_cast %596 : vector<64x64xf32> to vector<8x8x64xf32>
    %cst_158 = arith.constant dense<0xFF800000> : vector<8x64xf32>
    %598 = vector.multi_reduction <maximumf>, %597, %cst_158 [1] : vector<8x8x64xf32> to vector<8x64xf32>
    %599 = arith.truncf %598 : vector<8x64xf32> to vector<8x64xbf16>
    %c0_159 = arith.constant 0 : index
    %c0_160 = arith.constant 0 : index
    %600 = vector.load %arg12[%c0_159, %c0_160] : memref<64x128xbf16, #tpu.memory_space<vmem>>, vector<64x128xbf16>
    %cst_161 = arith.constant dense<0.000000e+00> : vector<8x128xf32>
    %601 = tpu.matmul %599, %600, %cst_161 {dimension_numbers = #tpu.dot_dimension_numbers<[1], [0], [0], [1], [0, 0, 1, 1], [], []>} : vector<8x64xbf16>, vector<64x128xbf16>, vector<8x128xf32> -> vector<8x128xf32>
    %c0_162 = arith.constant 0 : index
    %c0_163 = arith.constant 0 : index
    %602 = vector.load %arg13[%c0_162, %c0_163] : memref<1x128xf32, #tpu.memory_space<vmem>>, vector<1x128xf32>
    %603 = vector.broadcast %602 : vector<1x128xf32> to vector<8x128xf32>
    %604 = arith.addf %601, %603 : vector<8x128xf32>
    %c0_164 = arith.constant 0 : index
    %c0_165 = arith.constant 0 : index
    %605 = vector.load %arg14[%c0_164, %c0_165] : memref<8x128xf32, #tpu.memory_space<vmem>>, vector<8x128xf32>
    tpu.vector_store %arg14[%c0_164, %c0_165], %604 {strides = array<i32>} : memref<8x128xf32, #tpu.memory_space<vmem>>, vector<8x128xf32>,
    return
  }
}

</mosaic_0001>

<llo_original>
// kernel: tpu_custom_call.1
$region0: #{tpu_custom_call.1}
  #allocation0 [shape = 'u32[]', space=smem, size = 0x4, offset = 0x4, fixed_abs, tag = 'smem constant byte address 0x4 - core index']
  #allocation1 [shape = 'u32[144,128]{1,0:T(1,128)}', space=vmem, size = 0x12000, scoped, tag = 'internal scratch']
  #allocation2 [shape = 'f32[64,64]{1,0:T(8,128)}', space=vmem, size = 0x8000, scoped, tag = 'scratch operand']
  #allocation3 [shape = 'f32[64,64]{1,0:T(8,128)}', space=vmem, size = 0x8000, scoped, tag = 'scratch operand']
  %s0 = inlined_call_operand.hbm [shape: f32[8,8,32], index: 0, kind: input, shape index: {}]
  %s1 = inlined_call_operand.hbm [shape: bf16[32,512], index: 1, kind: input, shape index: {}]
  %s2 = inlined_call_operand.hbm [shape: bf16[32,512], index: 2, kind: input, shape index: {}]
  %s3 = inlined_call_operand.hbm [shape: bf16[128,512], index: 3, kind: input, shape index: {}]
  %s4 = inlined_call_operand.hbm [shape: f32[1,512], index: 4, kind: input, shape index: {}]
  %s5 = inlined_call_operand.hbm [shape: bf16[64,512], index: 5, kind: input, shape index: {}]
  %s6 = inlined_call_operand.hbm [shape: bf16[64,512], index: 6, kind: input, shape index: {}]
  %s7 = inlined_call_operand.hbm [shape: bf16[128,512], index: 7, kind: input, shape index: {}]
  %s8 = inlined_call_operand.hbm [shape: f32[1,512], index: 8, kind: input, shape index: {}]
  %s9 = inlined_call_operand.vmem [shape: bf16[64,64], index: 9, kind: input, shape index: {}]
  %s10 = inlined_call_operand.hbm [shape: bf16[32,64], index: 10, kind: input, shape index: {}]
  %s11 = inlined_call_operand.vmem [shape: f32[1,64], index: 11, kind: input, shape index: {}]
  %s12 = inlined_call_operand.hbm [shape: bf16[64,128], index: 12, kind: input, shape index: {}]
  %s13 = inlined_call_operand.vmem [shape: f32[1,128], index: 13, kind: input, shape index: {}]
  %s14 = inlined_call_operand.hbm [shape: f32[8,128], index: 14, kind: output, shape index: {}]
  %s15 = sld [smem:[#allocation0]]
  $region110: #{tpu_custom_call.1} parent=0
    _
  %s17 = ssub.s32 1, %s15
  %s18 = scalar_select 0, %s17, %s15
  $region1: #{tpu_custom_call.1} parent=0
    #allocation4 [shape = 'u8[32768]{0}', space=vmem, size = 0x8000, scoped, tag = 'input window, operand 0, single buffered']
    #allocation5 [shape = 's32[1]{0}', space=sflag, size = 0x4, scoped, tag = 'scoped memory for tpu_custom_call.1']
    #allocation6 [shape = 's32[1]{0}', space=sflag, size = 0x4, scoped, tag = 'scoped memory for tpu_custom_call.1']
    #allocation7 [shape = 'u8[32768]{0}', space=vmem, size = 0x8000, scoped, tag = 'input window, operand 1, single buffered']
    #allocation8 [shape = 's32[1]{0}', space=sflag, size = 0x4, scoped, tag = 'scoped memory for tpu_custom_call.1']
    #allocation9 [shape = 'u8[32768]{0}', space=vmem, size = 0x8000, scoped, tag = 'input window, operand 2, single buffered']
    #allocation10 [shape = 'u8[131072]{0}', space=vmem, size = 0x20000, scoped, tag = 'input window, operand 3, single buffered']
    #allocation11 [shape = 's32[1]{0}', space=sflag, size = 0x4, scoped, tag = 'scoped memory for tpu_custom_call.1']
    #allocation12 [shape = 'u8[2048]{0}', space=vmem, size = 0x800, scoped, tag = 'input window, operand 4, single buffered']
    #allocation13 [shape = 'u8[65536]{0}', space=vmem, size = 0x10000, scoped, tag = 'input window, operand 5, single buffered']
    #allocation14 [shape = 's32[1]{0}', space=sflag, size = 0x4, scoped, tag = 'scoped memory for tpu_custom_call.1']
    #allocation15 [shape = 'u8[65536]{0}', space=vmem, size = 0x10000, scoped, tag = 'input window, operand 6, single buffered']
    #allocation16 [shape = 'u8[131072]{0}', space=vmem, size = 0x20000, scoped, tag = 'input window, operand 7, single buffered']
    #allocation17 [shape = 's32[1]{0}', space=sflag, size = 0x4, scoped, tag = 'scoped memory for tpu_custom_call.1']
    #allocation18 [shape = 'u8[2048]{0}', space=vmem, size = 0x800, scoped, tag = 'input window, operand 8, single buffered']
    #allocation19 [shape = 'u8[8192]{0}', space=vmem, size = 0x2000, scoped, tag = 'input window, operand 10, single buffered']
    #allocation20 [shape = 's32[1]{0}', space=sflag, size = 0x4, scoped, tag = 'scoped memory for tpu_custom_call.1']
    #allocation21 [shape = 'u8[16384]{0}', space=vmem, size = 0x4000, scoped, tag = 'input window, operand 12, single buffered']
    #allocation22 [shape = 'u8[4096]{0}', space=vmem, size = 0x1000, scoped, tag = 'output window, operand 0, single buffered']
    %19 = vsyncpa [#allocation5], 0
    %20 = vsyncpa [#allocation8], 0
    %21 = vsyncpa [#allocation11], 0
    %22 = vsyncpa [#allocation14], 0
    %23 = vsyncpa [#allocation17], 0
    %24 = vsyncpa [#allocation20], 0
    %25 = vsyncpa [#allocation6], 0
    // Predicated region
    $region2: #{tpu_custom_call.1} parent=1 // pred_check
      _
    $region3: #{tpu_custom_call.1} parent=1 // pred_check_branch
      %27 = sbr.rel (0) target = $region5
    $region4: #{tpu_custom_call.1} parent=1 // pred_region
      %s29 = ssub.s32 1024, 1024
      %30 = vsyncadd [#allocation5], %s29
      %s31 = sshll.u32 [#allocation4], 4
      %s32 = int_to_ptr.vmem [resolvable:$true] %s31
      %37 = dma.hbm_to_vmem [thread:$0]  %s0, 1024, %s32, [#allocation5], 128, 128, 8
    $region5: #{tpu_custom_call.1} parent=1 // pred_fallthru
      _
    // Predicated region
    $region6: #{tpu_custom_call.1} parent=1 // pred_check
      _
    $region7: #{tpu_custom_call.1} parent=1 // pred_check_branch
      %39 = sbr.rel (0) target = $region9
    $region8: #{tpu_custom_call.1} parent=1 // pred_region
      %s41 = ssub.s32 1024, 1024
      %42 = vsyncadd [#allocation8], %s41
      %s43 = sshll.u32 [#allocation7], 4
      %s44 = int_to_ptr.vmem [resolvable:$true] %s43
      %49 = dma.hbm_to_vmem [thread:$0]  %s1, 1024, %s44, [#allocation8], 256, 256, 16
    $region9: #{tpu_custom_call.1} parent=1 // pred_fallthru
      _
    // Predicated region
    $region10: #{tpu_custom_call.1} parent=1 // pred_check
      _
    $region11: #{tpu_custom_call.1} parent=1 // pred_check_branch
      %51 = sbr.rel (0) target = $region13
    $region12: #{tpu_custom_call.1} parent=1 // pred_region
      %s53 = ssub.s32 1024, 1024
      %54 = vsyncadd [#allocation8], %s53
      %s55 = sshll.u32 [#allocation9], 4
      %s56 = int_to_ptr.vmem [resolvable:$true] %s55
      %61 = dma.hbm_to_vmem [thread:$0]  %s2, 1024, %s56, [#allocation8], 256, 256, 16
    $region13: #{tpu_custom_call.1} parent=1 // pred_fallthru
      _
    // Predicated region
    $region14: #{tpu_custom_call.1} parent=1 // pred_check
      _
    $region15: #{tpu_custom_call.1} parent=1 // pred_check_branch
      %63 = sbr.rel (0) target = $region17
    $region16: #{tpu_custom_call.1} parent=1 // pred_region
      %s65 = ssub.s32 4096, 4096
      %66 = vsyncadd [#allocation11], %s65
      %s67 = sshll.u32 [#allocation10], 4
      %s68 = int_to_ptr.vmem [resolvable:$true] %s67
      %73 = dma.hbm_to_vmem [thread:$0]  %s3, 4096, %s68, [#allocation11], 256, 256, 16
    $region17: #{tpu_custom_call.1} parent=1 // pred_fallthru
      _
    // Predicated region
    $region18: #{tpu_custom_call.1} parent=1 // pred_check
      _
    $region19: #{tpu_custom_call.1} parent=1 // pred_check_branch
      %75 = sbr.rel (0) target = $region21
    $region20: #{tpu_custom_call.1} parent=1 // pred_region
      %s77 = ssub.s32 64, 64
      %78 = vsyncadd [#allocation11], %s77
      %s80 = sshll.u32 [#allocation12], 4
      %s81 = int_to_ptr.vmem [resolvable:$true] %s80
      %83 = dma.hbm_to_vmem [thread:$0]  %s4, 64, %s81, [#allocation11]
    $region21: #{tpu_custom_call.1} parent=1 // pred_fallthru
      _
    // Predicated region
    $region22: #{tpu_custom_call.1} parent=1 // pred_check
      _
    $region23: #{tpu_custom_call.1} parent=1 // pred_check_branch
      %85 = sbr.rel (0) target = $region25
    $region24: #{tpu_custom_call.1} parent=1 // pred_region
      %s87 = ssub.s32 2048, 2048
      %88 = vsyncadd [#allocation14], %s87
      %s89 = sshll.u32 [#allocation13], 4
      %s90 = int_to_ptr.vmem [resolvable:$true] %s89
      %95 = dma.hbm_to_vmem [thread:$0]  %s5, 2048, %s90, [#allocation14], 256, 256, 16
    $region25: #{tpu_custom_call.1} parent=1 // pred_fallthru
      _
    // Predicated region
    $region26: #{tpu_custom_call.1} parent=1 // pred_check
      _
    $region27: #{tpu_custom_call.1} parent=1 // pred_check_branch
      %97 = sbr.rel (0) target = $region29
    $region28: #{tpu_custom_call.1} parent=1 // pred_region
      %s99 = ssub.s32 2048, 2048
      %100 = vsyncadd [#allocation14], %s99
      %s101 = sshll.u32 [#allocation15], 4
      %s102 = int_to_ptr.vmem [resolvable:$true] %s101
      %107 = dma.hbm_to_vmem [thread:$0]  %s6, 2048, %s102, [#allocation14], 256, 256, 16
    $region29: #{tpu_custom_call.1} parent=1 // pred_fallthru
      _
    // Predicated region
    $region30: #{tpu_custom_call.1} parent=1 // pred_check
      _
    $region31: #{tpu_custom_call.1} parent=1 // pred_check_branch
      %109 = sbr.rel (0) target = $region33
    $region32: #{tpu_custom_call.1} parent=1 // pred_region
      %s111 = ssub.s32 4096, 4096
      %112 = vsyncadd [#allocation17], %s111
      %s113 = sshll.u32 [#allocation16], 4
      %s114 = int_to_ptr.vmem [resolvable:$true] %s113
      %119 = dma.hbm_to_vmem [thread:$0]  %s7, 4096, %s114, [#allocation17], 256, 256, 16
    $region33: #{tpu_custom_call.1} parent=1 // pred_fallthru
      _
    // Predicated region
    $region34: #{tpu_custom_call.1} parent=1 // pred_check
      _
    $region35: #{tpu_custom_call.1} parent=1 // pred_check_branch
      %121 = sbr.rel (0) target = $region37
    $region36: #{tpu_custom_call.1} parent=1 // pred_region
      %s123 = ssub.s32 64, 64
      %124 = vsyncadd [#allocation17], %s123
      %s126 = sshll.u32 [#allocation18], 4
      %s127 = int_to_ptr.vmem [resolvable:$true] %s126
      %129 = dma.hbm_to_vmem [thread:$0]  %s8, 64, %s127, [#allocation17]
    $region37: #{tpu_custom_call.1} parent=1 // pred_fallthru
      _
    // Predicated region
    $region38: #{tpu_custom_call.1} parent=1 // pred_check
      _
    $region39: #{tpu_custom_call.1} parent=1 // pred_check_branch
      %131 = sbr.rel (0) target = $region41
    $region40: #{tpu_custom_call.1} parent=1 // pred_region
      _
    $region41: #{tpu_custom_call.1} parent=1 // pred_fallthru
      _
    // Predicated region
    $region42: #{tpu_custom_call.1} parent=1 // pred_check
      _
    $region43: #{tpu_custom_call.1} parent=1 // pred_check_branch
      %133 = sbr.rel (0) target = $region45
    $region44: #{tpu_custom_call.1} parent=1 // pred_region
      %s135 = ssub.s32 256, 256
      %136 = vsyncadd [#allocation20], %s135
      %s137 = sshll.u32 [#allocation19], 4
      %s138 = int_to_ptr.vmem [resolvable:$true] %s137
      %143 = dma.hbm_to_vmem [thread:$0]  %s10, 256, %s138, [#allocation20], 64, 64, 4
    $region45: #{tpu_custom_call.1} parent=1 // pred_fallthru
      _
    // Predicated region
    $region46: #{tpu_custom_call.1} parent=1 // pred_check
      _
    $region47: #{tpu_custom_call.1} parent=1 // pred_check_branch
      %145 = sbr.rel (0) target = $region49
    $region48: #{tpu_custom_call.1} parent=1 // pred_region
      _
    $region49: #{tpu_custom_call.1} parent=1 // pred_fallthru
      _
    // Predicated region
    $region50: #{tpu_custom_call.1} parent=1 // pred_check
      _
    $region51: #{tpu_custom_call.1} parent=1 // pred_check_branch
      %147 = sbr.rel (0) target = $region53
    $region52: #{tpu_custom_call.1} parent=1 // pred_region
      %s149 = ssub.s32 512, 512
      %150 = vsyncadd [#allocation20], %s149
      %s151 = sshll.u32 [#allocation21], 4
      %s152 = int_to_ptr.vmem [resolvable:$true] %s151
      %157 = dma.hbm_to_vmem [thread:$0]  %s12, 512, %s152, [#allocation20], 64, 64, 4
    $region53: #{tpu_custom_call.1} parent=1 // pred_fallthru
      _
    // Predicated region
    $region54: #{tpu_custom_call.1} parent=1 // pred_check
      _
    $region55: #{tpu_custom_call.1} parent=1 // pred_check_branch
      %159 = sbr.rel (0) target = $region57
    $region56: #{tpu_custom_call.1} parent=1 // pred_region
      _
    $region57: #{tpu_custom_call.1} parent=1 // pred_fallthru
      _
    // Predicated region
    $region58: #{tpu_custom_call.1} parent=1 // pred_check
      _
    $region59: #{tpu_custom_call.1} parent=1 // pred_check_branch
      %161 = sbr.rel (0) target = $region61
    $region60: #{tpu_custom_call.1} parent=1 // pred_region
      %162 = dma.done [#allocation5], 1024
    $region61: #{tpu_custom_call.1} parent=1 // pred_fallthru
      _
    // Predicated region
    $region62: #{tpu_custom_call.1} parent=1 // pred_check
      _
    $region63: #{tpu_custom_call.1} parent=1 // pred_check_branch
      %164 = sbr.rel (0) target = $region65
    $region64: #{tpu_custom_call.1} parent=1 // pred_region
      %165 = dma.done [#allocation8], 1024
    $region65: #{tpu_custom_call.1} parent=1 // pred_fallthru
      _
    // Predicated region
    $region66: #{tpu_custom_call.1} parent=1 // pred_check
      _
    $region67: #{tpu_custom_call.1} parent=1 // pred_check_branch
      %167 = sbr.rel (0) target = $region69
    $region68: #{tpu_custom_call.1} parent=1 // pred_region
      %168 = dma.done [#allocation8], 1024
    $region69: #{tpu_custom_call.1} parent=1 // pred_fallthru
      _
    // Predicated region
    $region70: #{tpu_custom_call.1} parent=1 // pred_check
      _
    $region71: #{tpu_custom_call.1} parent=1 // pred_check_branch
      %170 = sbr.rel (0) target = $region73
    $region72: #{tpu_custom_call.1} parent=1 // pred_region
      %171 = dma.done [#allocation11], 4096
    $region73: #{tpu_custom_call.1} parent=1 // pred_fallthru
      _
    // Predicated region
    $region74: #{tpu_custom_call.1} parent=1 // pred_check
      _
    $region75: #{tpu_custom_call.1} parent=1 // pred_check_branch
      %173 = sbr.rel (0) target = $region77
    $region76: #{tpu_custom_call.1} parent=1 // pred_region
      %174 = dma.done [#allocation11], 64
    $region77: #{tpu_custom_call.1} parent=1 // pred_fallthru
      _
    // Predicated region
    $region78: #{tpu_custom_call.1} parent=1 // pred_check
      _
    $region79: #{tpu_custom_call.1} parent=1 // pred_check_branch
      %176 = sbr.rel (0) target = $region81
    $region80: #{tpu_custom_call.1} parent=1 // pred_region
      %177 = dma.done [#allocation14], 2048
    $region81: #{tpu_custom_call.1} parent=1 // pred_fallthru
      _
    // Predicated region
    $region82: #{tpu_custom_call.1} parent=1 // pred_check
      _
    $region83: #{tpu_custom_call.1} parent=1 // pred_check_branch
      %179 = sbr.rel (0) target = $region85
    $region84: #{tpu_custom_call.1} parent=1 // pred_region
      %180 = dma.done [#allocation14], 2048
    $region85: #{tpu_custom_call.1} parent=1 // pred_fallthru
      _
    // Predicated region
    $region86: #{tpu_custom_call.1} parent=1 // pred_check
      _
    $region87: #{tpu_custom_call.1} parent=1 // pred_check_branch
      %182 = sbr.rel (0) target = $region89
    $region88: #{tpu_custom_call.1} parent=1 // pred_region
      %183 = dma.done [#allocation17], 4096
    $region89: #{tpu_custom_call.1} parent=1 // pred_fallthru
      _
    // Predicated region
    $region90: #{tpu_custom_call.1} parent=1 // pred_check
      _
    $region91: #{tpu_custom_call.1} parent=1 // pred_check_branch
      %185 = sbr.rel (0) target = $region93
    $region92: #{tpu_custom_call.1} parent=1 // pred_region
      %186 = dma.done [#allocation17], 64
    $region93: #{tpu_custom_call.1} parent=1 // pred_fallthru
      _
    // Predicated region
    $region94: #{tpu_custom_call.1} parent=1 // pred_check
      _
    $region95: #{tpu_custom_call.1} parent=1 // pred_check_branch
      %188 = sbr.rel (0) target = $region97
    $region96: #{tpu_custom_call.1} parent=1 // pred_region
      %189 = dma.done [#allocation20], 256
    $region97: #{tpu_custom_call.1} parent=1 // pred_fallthru
      _
    // Predicated region
    $region98: #{tpu_custom_call.1} parent=1 // pred_check
      _
    $region99: #{tpu_custom_call.1} parent=1 // pred_check_branch
      %191 = sbr.rel (0) target = $region101
    $region100: #{tpu_custom_call.1} parent=1 // pred_region
      %192 = dma.done [#allocation20], 512
    $region101: #{tpu_custom_call.1} parent=1 // pred_fallthru
      _
    %v194 = vld [vmem:[#allocation4] sm:$0xff]
    %v195 = vld [vmem:[#allocation4 + $0x8] sm:$0xff]
    %v196 = vld [vmem:[#allocation4 + $0x10] sm:$0xff]
    %v197 = vld [vmem:[#allocation4 + $0x18] sm:$0xff]
    %v198 = vld [vmem:[#allocation4 + $0x20] sm:$0xff]
    %v199 = vld [vmem:[#allocation4 + $0x28] sm:$0xff]
    %v200 = vld [vmem:[#allocation4 + $0x30] sm:$0xff]
    %v201 = vld [vmem:[#allocation4 + $0x38] sm:$0xff]
    %v202 = vpack.c.bf16 %v195, %v194
    %v203 = vpack.c.bf16 %v197, %v196
    %v204 = vpack.c.bf16 %v199, %v198
    %v205 = vpack.c.bf16 %v201, %v200
    %v206 = vld [vmem:[#allocation7] sm:$0xff]
    %v207 = vld [vmem:[#allocation7 + $0x8] sm:$0xff]
    %v208 = vld [vmem:[#allocation7 + $0x10] sm:$0xff]
    %v209 = vld [vmem:[#allocation7 + $0x18] sm:$0xff]
    %v210 = vld [vmem:[#allocation7 + $0x20] sm:$0xff]
    %v211 = vld [vmem:[#allocation7 + $0x28] sm:$0xff]
    %v212 = vld [vmem:[#allocation7 + $0x30] sm:$0xff]
    %v213 = vld [vmem:[#allocation7 + $0x38] sm:$0xff]
    %v214 = vld [vmem:[#allocation12] sm:$0xf]
    %v216 = vlaneseq
    %v217 = vshrl.u32 %v216, 7
    %v218 = vsub.s32 0, %v217
    %v219 = vrot.slane %v214, %v218
    %v220 = vlaneseq
    %v221 = vshrl.u32 %v220, 7
    %v222 = vsub.s32 1, %v221
    %v223 = vrot.slane %v214, %v222
    %v224 = vlaneseq
    %v225 = vshrl.u32 %v224, 7
    %v226 = vsub.s32 2, %v225
    %v227 = vrot.slane %v214, %v226
    %v228 = vlaneseq
    %v229 = vshrl.u32 %v228, 7
    %v230 = vsub.s32 3, %v229
    %v231 = vrot.slane %v214, %v230
    %v244 = vunpack.c.l.b16 %v206
    %v245 = vunpack.c.h.b16 %v206
    %v246 = vunpack.c.l.b16 %v207
    %v247 = vunpack.c.h.b16 %v207
    %v248 = vunpack.c.l.b16 %v208
    %v249 = vunpack.c.h.b16 %v208
    %v250 = vunpack.c.l.b16 %v209
    %v251 = vunpack.c.h.b16 %v209
    %v252 = vunpack.c.l.b16 %v210
    %v253 = vunpack.c.h.b16 %v210
    %v254 = vunpack.c.l.b16 %v211
    %v255 = vunpack.c.h.b16 %v211
    %v256 = vunpack.c.l.b16 %v212
    %v257 = vunpack.c.h.b16 %v212
    %v258 = vunpack.c.l.b16 %v213
    %v259 = vunpack.c.h.b16 %v213
    %v260 = vpack.c.b16 %v248, %v244
    %v261 = vpack.c.b16 %v249, %v245
    %v262 = vpack.c.b16 %v250, %v246
    %v263 = vpack.c.b16 %v251, %v247
    %v264 = vpack.c.b16 %v256, %v252
    %v265 = vpack.c.b16 %v257, %v253
    %v266 = vpack.c.b16 %v258, %v254
    %v267 = vpack.c.b16 %v259, %v255
    %vm276 = vcmask 261120
    %v278 = vsel %vm276, %v202, 0
    %v281 = vsel %vm276, %v203, 0
    %v284 = vsel %vm276, %v204, 0
    %v287 = vsel %vm276, %v205, 0
    %289 = vmatprep.subr.bf16.mxu0 %v261
    %290 = vmatpush1.bf16.msra.mxu0 %v260
    %291 = vmatprep.subr.bf16.mxu0 %v265
    %292 = vmatpush1.bf16.msra.mxu0 %v264
    %293 = vmatprep.subr.bf16.mxu0 0
    %294 = vmatpush1.bf16.msra.mxu0 0
    %295 = vmatprep.subr.bf16.mxu0 0
    %296 = vmatpush1.bf16.msra.mxu0 0
    %297 = vmatprep.subr.bf16.mxu0 0
    %298 = vmatpush1.bf16.msra.mxu0 0
    %299 = vmatprep.subr.bf16.mxu0 0
    %300 = vmatpush1.bf16.msra.mxu0 0
    %301 = vmatprep.subr.bf16.mxu0 0
    %302 = vmatpush1.bf16.msra.mxu0 0
    %303 = vmatprep.subr.bf16.mxu0 0
    %304 = vmatpush1.bf16.msra.mxu0 0
    %305 = vmatprep.subr.bf16.mxu0 0
    %306 = vmatpush1.bf16.msra.mxu0 0
    %307 = vmatprep.subr.bf16.mxu0 0
    %308 = vmatpush1.bf16.msra.mxu0 0
    %309 = vmatprep.subr.bf16.mxu0 0
    %310 = vmatpush1.bf16.msra.mxu0 0
    %311 = vmatprep.subr.bf16.mxu0 0
    %312 = vmatpush1.bf16.msra.mxu0 0
    %313 = vmatprep.subr.bf16.mxu0 0
    %314 = vmatpush1.bf16.msra.mxu0 0
    %315 = vmatprep.subr.bf16.mxu0 0
    %316 = vmatpush1.bf16.msra.mxu0 0
    %317 = vmatprep.subr.bf16.mxu0 0
    %318 = vmatpush1.bf16.msra.mxu0 0
    %319 = vmatprep.subr.bf16.mxu0 0
    %320 = vmatpush1.bf16.msra.mxu0 0
    %321 = vmatprep.mubr.bf16.mxu0 0
    %322 = vmatmul.mubr.bf16.gmra.mrb[0].mxu0 %v278
    %v323 = vpop.f32.mrb[0].mxu0
    %v324 = vadd.f32 %v219, %v323
    %v325 = vpop.f32.mrb[0].mxu0
    %v326 = vadd.f32 %v223, %v325
    %v327 = vpop.f32.mrb[0].mxu0
    %v328 = vadd.f32 %v219, %v327
    %v329 = vpop.f32.mrb[0].mxu0
    %v330 = vadd.f32 %v223, %v329
    %331 = vmatprep.mubr.bf16.mxu0 0
    %332 = vmatmul.mubr.bf16.gmra.mrb[0].mxu0 %v281
    %v333 = vpop.f32.mrb[0].mxu0
    %v334 = vadd.f32 %v219, %v333
    %v335 = vpop.f32.mrb[0].mxu0
    %v336 = vadd.f32 %v223, %v335
    %v337 = vpop.f32.mrb[0].mxu0
    %v338 = vadd.f32 %v219, %v337
    %v339 = vpop.f32.mrb[0].mxu0
    %v340 = vadd.f32 %v223, %v339
    %341 = vmatprep.mubr.bf16.mxu0 0
    %342 = vmatmul.mubr.bf16.gmra.mrb[0].mxu0 %v284
    %v343 = vpop.f32.mrb[0].mxu0
    %v344 = vadd.f32 %v219, %v343
    %v345 = vpop.f32.mrb[0].mxu0
    %v346 = vadd.f32 %v223, %v345
    %v347 = vpop.f32.mrb[0].mxu0
    %v348 = vadd.f32 %v219, %v347
    %v349 = vpop.f32.mrb[0].mxu0
    %v350 = vadd.f32 %v223, %v349
    %351 = vmatprep.mubr.bf16.mxu0 0
    %352 = vmatmul.mubr.bf16.gmra.mrb[0].mxu0 %v287
    %v353 = vpop.f32.mrb[0].mxu0
    %v354 = vadd.f32 %v219, %v353
    %v355 = vpop.f32.mrb[0].mxu0
    %v356 = vadd.f32 %v223, %v355
    %v357 = vpop.f32.mrb[0].mxu0
    %v358 = vadd.f32 %v219, %v357
    %v359 = vpop.f32.mrb[0].mxu0
    %v360 = vadd.f32 %v223, %v359
    %361 = vdwg.mxu0
    %362 = vmatprep.subr.bf16.mxu0 %v263
    %363 = vmatpush1.bf16.msra.mxu0 %v262
    %364 = vmatprep.subr.bf16.mxu0 %v267
    %365 = vmatpush1.bf16.msra.mxu0 %v266
    %366 = vmatprep.subr.bf16.mxu0 0
    %367 = vmatpush1.bf16.msra.mxu0 0
    %368 = vmatprep.subr.bf16.mxu0 0
    %369 = vmatpush1.bf16.msra.mxu0 0
    %370 = vmatprep.subr.bf16.mxu0 0
    %371 = vmatpush1.bf16.msra.mxu0 0
    %372 = vmatprep.subr.bf16.mxu0 0
    %373 = vmatpush1.bf16.msra.mxu0 0
    %374 = vmatprep.subr.bf16.mxu0 0
    %375 = vmatpush1.bf16.msra.mxu0 0
    %376 = vmatprep.subr.bf16.mxu0 0
    %377 = vmatpush1.bf16.msra.mxu0 0
    %378 = vmatprep.subr.bf16.mxu0 0
    %379 = vmatpush1.bf16.msra.mxu0 0
    %380 = vmatprep.subr.bf16.mxu0 0
    %381 = vmatpush1.bf16.msra.mxu0 0
    %382 = vmatprep.subr.bf16.mxu0 0
    %383 = vmatpush1.bf16.msra.mxu0 0
    %384 = vmatprep.subr.bf16.mxu0 0
    %385 = vmatpush1.bf16.msra.mxu0 0
    %386 = vmatprep.subr.bf16.mxu0 0
    %387 = vmatpush1.bf16.msra.mxu0 0
    %388 = vmatprep.subr.bf16.mxu0 0
    %389 = vmatpush1.bf16.msra.mxu0 0
    %390 = vmatprep.subr.bf16.mxu0 0
    %391 = vmatpush1.bf16.msra.mxu0 0
    %392 = vmatprep.subr.bf16.mxu0 0
    %393 = vmatpush1.bf16.msra.mxu0 0
    %394 = vmatprep.mubr.bf16.mxu0 0
    %395 = vmatmul.mubr.bf16.gmra.mrb[0].mxu0 %v278
    %v396 = vpop.f32.mrb[0].mxu0
    %v397 = vadd.f32 %v227, %v396
    %v398 = vpop.f32.mrb[0].mxu0
    %v399 = vadd.f32 %v231, %v398
    %v400 = vpop.f32.mrb[0].mxu0
    %v401 = vadd.f32 %v227, %v400
    %v402 = vpop.f32.mrb[0].mxu0
    %v403 = vadd.f32 %v231, %v402
    %404 = vmatprep.mubr.bf16.mxu0 0
    %405 = vmatmul.mubr.bf16.gmra.mrb[0].mxu0 %v281
    %v406 = vpop.f32.mrb[0].mxu0
    %v407 = vadd.f32 %v227, %v406
    %v408 = vpop.f32.mrb[0].mxu0
    %v409 = vadd.f32 %v231, %v408
    %v410 = vpop.f32.mrb[0].mxu0
    %v411 = vadd.f32 %v227, %v410
    %v412 = vpop.f32.mrb[0].mxu0
    %v413 = vadd.f32 %v231, %v412
    %414 = vmatprep.mubr.bf16.mxu0 0
    %415 = vmatmul.mubr.bf16.gmra.mrb[0].mxu0 %v284
    %v416 = vpop.f32.mrb[0].mxu0
    %v417 = vadd.f32 %v227, %v416
    %v418 = vpop.f32.mrb[0].mxu0
    %v419 = vadd.f32 %v231, %v418
    %v420 = vpop.f32.mrb[0].mxu0
    %v421 = vadd.f32 %v227, %v420
    %v422 = vpop.f32.mrb[0].mxu0
    %v423 = vadd.f32 %v231, %v422
    %424 = vmatprep.mubr.bf16.mxu0 0
    %425 = vmatmul.mubr.bf16.gmra.mrb[0].mxu0 %v287
    %v426 = vpop.f32.mrb[0].mxu0
    %v427 = vadd.f32 %v227, %v426
    %v428 = vpop.f32.mrb[0].mxu0
    %v429 = vadd.f32 %v231, %v428
    %v430 = vpop.f32.mrb[0].mxu0
    %v431 = vadd.f32 %v227, %v430
    %v432 = vpop.f32.mrb[0].mxu0
    %v433 = vadd.f32 %v231, %v432
    %434 = vdwg.mxu0
    %v435 = vld [vmem:[#allocation9] sm:$0xff]
    %v436 = vld [vmem:[#allocation9 + $0x8] sm:$0xff]
    %v437 = vld [vmem:[#allocation9 + $0x10] sm:$0xff]
    %v438 = vld [vmem:[#allocation9 + $0x18] sm:$0xff]
    %v439 = vld [vmem:[#allocation9 + $0x20] sm:$0xff]
    %v440 = vld [vmem:[#allocation9 + $0x28] sm:$0xff]
    %v441 = vld [vmem:[#allocation9 + $0x30] sm:$0xff]
    %v442 = vld [vmem:[#allocation9 + $0x38] sm:$0xff]
    %v451 = vunpack.c.l.b16 %v435
    %v452 = vunpack.c.h.b16 %v435
    %v453 = vunpack.c.l.b16 %v436
    %v454 = vunpack.c.h.b16 %v436
    %v455 = vunpack.c.l.b16 %v437
    %v456 = vunpack.c.h.b16 %v437
    %v457 = vunpack.c.l.b16 %v438
    %v458 = vunpack.c.h.b16 %v438
    %v459 = vunpack.c.l.b16 %v439
    %v460 = vunpack.c.h.b16 %v439
    %v461 = vunpack.c.l.b16 %v440
    %v462 = vunpack.c.h.b16 %v440
    %v463 = vunpack.c.l.b16 %v441
    %v464 = vunpack.c.h.b16 %v441
    %v465 = vunpack.c.l.b16 %v442
    %v466 = vunpack.c.h.b16 %v442
    %v467 = vpack.c.b16 %v455, %v451
    %v468 = vpack.c.b16 %v456, %v452
    %v469 = vpack.c.b16 %v457, %v453
    %v470 = vpack.c.b16 %v458, %v454
    %v471 = vpack.c.b16 %v463, %v459
    %v472 = vpack.c.b16 %v464, %v460
    %v473 = vpack.c.b16 %v465, %v461
    %v474 = vpack.c.b16 %v466, %v462
    %483 = vmatprep.subr.bf16.mxu0 %v468
    %484 = vmatpush1.bf16.msra.mxu0 %v467
    %485 = vmatprep.subr.bf16.mxu0 %v472
    %486 = vmatpush1.bf16.msra.mxu0 %v471
    %487 = vmatprep.subr.bf16.mxu0 0
    %488 = vmatpush1.bf16.msra.mxu0 0
    %489 = vmatprep.subr.bf16.mxu0 0
    %490 = vmatpush1.bf16.msra.mxu0 0
    %491 = vmatprep.subr.bf16.mxu0 0
    %492 = vmatpush1.bf16.msra.mxu0 0
    %493 = vmatprep.subr.bf16.mxu0 0
    %494 = vmatpush1.bf16.msra.mxu0 0
    %495 = vmatprep.subr.bf16.mxu0 0
    %496 = vmatpush1.bf16.msra.mxu0 0
    %497 = vmatprep.subr.bf16.mxu0 0
    %498 = vmatpush1.bf16.msra.mxu0 0
    %499 = vmatprep.subr.bf16.mxu0 0
    %500 = vmatpush1.bf16.msra.mxu0 0
    %501 = vmatprep.subr.bf16.mxu0 0
    %502 = vmatpush1.bf16.msra.mxu0 0
    %503 = vmatprep.subr.bf16.mxu0 0
    %504 = vmatpush1.bf16.msra.mxu0 0
    %505 = vmatprep.subr.bf16.mxu0 0
    %506 = vmatpush1.bf16.msra.mxu0 0
    %507 = vmatprep.subr.bf16.mxu0 0
    %508 = vmatpush1.bf16.msra.mxu0 0
    %509 = vmatprep.subr.bf16.mxu0 0
    %510 = vmatpush1.bf16.msra.mxu0 0
    %511 = vmatprep.subr.bf16.mxu0 0
    %512 = vmatpush1.bf16.msra.mxu0 0
    %513 = vmatprep.subr.bf16.mxu0 0
    %514 = vmatpush1.bf16.msra.mxu0 0
    %515 = vmatprep.mubr.bf16.mxu0 0
    %516 = vmatmul.mubr.bf16.gmra.mrb[0].mxu0 %v278
    %v517 = vpop.f32.mrb[0].mxu0
    %v518 = vadd.f32 0.0, %v517
    %v519 = vpop.f32.mrb[0].mxu0
    %v520 = vadd.f32 0.0, %v519
    %v521 = vpop.f32.mrb[0].mxu0
    %v522 = vadd.f32 0.0, %v521
    %v523 = vpop.f32.mrb[0].mxu0
    %v524 = vadd.f32 0.0, %v523
    %525 = vmatprep.mubr.bf16.mxu0 0
    %526 = vmatmul.mubr.bf16.gmra.mrb[0].mxu0 %v281
    %v527 = vpop.f32.mrb[0].mxu0
    %v528 = vadd.f32 0.0, %v527
    %v529 = vpop.f32.mrb[0].mxu0
    %v530 = vadd.f32 0.0, %v529
    %v531 = vpop.f32.mrb[0].mxu0
    %v532 = vadd.f32 0.0, %v531
    %v533 = vpop.f32.mrb[0].mxu0
    %v534 = vadd.f32 0.0, %v533
    %535 = vmatprep.mubr.bf16.mxu0 0
    %536 = vmatmul.mubr.bf16.gmra.mrb[0].mxu0 %v284
    %v537 = vpop.f32.mrb[0].mxu0
    %v538 = vadd.f32 0.0, %v537
    %v539 = vpop.f32.mrb[0].mxu0
    %v540 = vadd.f32 0.0, %v539
    %v541 = vpop.f32.mrb[0].mxu0
    %v542 = vadd.f32 0.0, %v541
    %v543 = vpop.f32.mrb[0].mxu0
    %v544 = vadd.f32 0.0, %v543
    %545 = vmatprep.mubr.bf16.mxu0 0
    %546 = vmatmul.mubr.bf16.gmra.mrb[0].mxu0 %v287
    %v547 = vpop.f32.mrb[0].mxu0
    %v548 = vadd.f32 0.0, %v547
    %v549 = vpop.f32.mrb[0].mxu0
    %v550 = vadd.f32 0.0, %v549
    %v551 = vpop.f32.mrb[0].mxu0
    %v552 = vadd.f32 0.0, %v551
    %v553 = vpop.f32.mrb[0].mxu0
    %v554 = vadd.f32 0.0, %v553
    %555 = vdwg.mxu0
    %556 = vmatprep.subr.bf16.mxu0 %v470
    %557 = vmatpush1.bf16.msra.mxu0 %v469
    %558 = vmatprep.subr.bf16.mxu0 %v474
    %559 = vmatpush1.bf16.msra.mxu0 %v473
    %560 = vmatprep.subr.bf16.mxu0 0
    %561 = vmatpush1.bf16.msra.mxu0 0
    %562 = vmatprep.subr.bf16.mxu0 0
    %563 = vmatpush1.bf16.msra.mxu0 0
    %564 = vmatprep.subr.bf16.mxu0 0
    %565 = vmatpush1.bf16.msra.mxu0 0
    %566 = vmatprep.subr.bf16.mxu0 0
    %567 = vmatpush1.bf16.msra.mxu0 0
    %568 = vmatprep.subr.bf16.mxu0 0
    %569 = vmatpush1.bf16.msra.mxu0 0
    %570 = vmatprep.subr.bf16.mxu0 0
    %571 = vmatpush1.bf16.msra.mxu0 0
    %572 = vmatprep.subr.bf16.mxu0 0
    %573 = vmatpush1.bf16.msra.mxu0 0
    %574 = vmatprep.subr.bf16.mxu0 0
    %575 = vmatpush1.bf16.msra.mxu0 0
    %576 = vmatprep.subr.bf16.mxu0 0
    %577 = vmatpush1.bf16.msra.mxu0 0
    %578 = vmatprep.subr.bf16.mxu0 0
    %579 = vmatpush1.bf16.msra.mxu0 0
    %580 = vmatprep.subr.bf16.mxu0 0
    %581 = vmatpush1.bf16.msra.mxu0 0
    %582 = vmatprep.subr.bf16.mxu0 0
    %583 = vmatpush1.bf16.msra.mxu0 0
    %584 = vmatprep.subr.bf16.mxu0 0
    %585 = vmatpush1.bf16.msra.mxu0 0
    %586 = vmatprep.subr.bf16.mxu0 0
    %587 = vmatpush1.bf16.msra.mxu0 0
    %588 = vmatprep.mubr.bf16.mxu0 0
    %589 = vmatmul.mubr.bf16.gmra.mrb[0].mxu0 %v278
    %v590 = vpop.f32.mrb[0].mxu0
    %v591 = vadd.f32 0.0, %v590
    %v592 = vpop.f32.mrb[0].mxu0
    %v593 = vadd.f32 0.0, %v592
    %v594 = vpop.f32.mrb[0].mxu0
    %v595 = vadd.f32 0.0, %v594
    %v596 = vpop.f32.mrb[0].mxu0
    %v597 = vadd.f32 0.0, %v596
    %598 = vmatprep.mubr.bf16.mxu0 0
    %599 = vmatmul.mubr.bf16.gmra.mrb[0].mxu0 %v281
    %v600 = vpop.f32.mrb[0].mxu0
    %v601 = vadd.f32 0.0, %v600
    %v602 = vpop.f32.mrb[0].mxu0
    %v603 = vadd.f32 0.0, %v602
    %v604 = vpop.f32.mrb[0].mxu0
    %v605 = vadd.f32 0.0, %v604
    %v606 = vpop.f32.mrb[0].mxu0
    %v607 = vadd.f32 0.0, %v606
    %608 = vmatprep.mubr.bf16.mxu0 0
    %609 = vmatmul.mubr.bf16.gmra.mrb[0].mxu0 %v284
    %v610 = vpop.f32.mrb[0].mxu0
    %v611 = vadd.f32 0.0, %v610
    %v612 = vpop.f32.mrb[0].mxu0
    %v613 = vadd.f32 0.0, %v612
    %v614 = vpop.f32.mrb[0].mxu0
    %v615 = vadd.f32 0.0, %v614
    %v616 = vpop.f32.mrb[0].mxu0
    %v617 = vadd.f32 0.0, %v616
    %618 = vmatprep.mubr.bf16.mxu0 0
    %619 = vmatmul.mubr.bf16.gmra.mrb[0].mxu0 %v287
    %v620 = vpop.f32.mrb[0].mxu0
    %v621 = vadd.f32 0.0, %v620
    %v622 = vpop.f32.mrb[0].mxu0
    %v623 = vadd.f32 0.0, %v622
    %v624 = vpop.f32.mrb[0].mxu0
    %v625 = vadd.f32 0.0, %v624
    %v626 = vpop.f32.mrb[0].mxu0
    %v627 = vadd.f32 0.0, %v626
    %628 = vdwg.mxu0
    %v629 = vld [vmem:[#allocation10] sm:$0xff]
    %v630 = vld [vmem:[#allocation10 + $0x8] sm:$0xff]
    %v631 = vld [vmem:[#allocation10 + $0x10] sm:$0xff]
    %v632 = vld [vmem:[#allocation10 + $0x18] sm:$0xff]
    %v633 = vld [vmem:[#allocation10 + $0x20] sm:$0xff]
    %v634 = vld [vmem:[#allocation10 + $0x28] sm:$0xff]
    %v635 = vld [vmem:[#allocation10 + $0x30] sm:$0xff]
    %v636 = vld [vmem:[#allocation10 + $0x38] sm:$0xff]
    %v637 = vld [vmem:[#allocation10 + $0x40] sm:$0xff]
    %v638 = vld [vmem:[#allocation10 + $0x48] sm:$0xff]
    %v639 = vld [vmem:[#allocation10 + $0x50] sm:$0xff]
    %v640 = vld [vmem:[#allocation10 + $0x58] sm:$0xff]
    %v641 = vld [vmem:[#allocation10 + $0x60] sm:$0xff]
    %v642 = vld [vmem:[#allocation10 + $0x68] sm:$0xff]
    %v643 = vld [vmem:[#allocation10 + $0x70] sm:$0xff]
    %v644 = vld [vmem:[#allocation10 + $0x78] sm:$0xff]
    %v645 = vld [vmem:[#allocation10 + $0x80] sm:$0xff]
    %v646 = vld [vmem:[#allocation10 + $0x88] sm:$0xff]
    %v647 = vld [vmem:[#allocation10 + $0x90] sm:$0xff]
    %v648 = vld [vmem:[#allocation10 + $0x98] sm:$0xff]
    %v649 = vld [vmem:[#allocation10 + $0xa0] sm:$0xff]
    %v650 = vld [vmem:[#allocation10 + $0xa8] sm:$0xff]
    %v651 = vld [vmem:[#allocation10 + $0xb0] sm:$0xff]
    %v652 = vld [vmem:[#allocation10 + $0xb8] sm:$0xff]
    %v653 = vld [vmem:[#allocation10 + $0xc0] sm:$0xff]
    %v654 = vld [vmem:[#allocation10 + $0xc8] sm:$0xff]
    %v655 = vld [vmem:[#allocation10 + $0xd0] sm:$0xff]
    %v656 = vld [vmem:[#allocation10 + $0xd8] sm:$0xff]
    %v657 = vld [vmem:[#allocation10 + $0xe0] sm:$0xff]
    %v658 = vld [vmem:[#allocation10 + $0xe8] sm:$0xff]
    %v659 = vld [vmem:[#allocation10 + $0xf0] sm:$0xff]
    %v660 = vld [vmem:[#allocation10 + $0xf8] sm:$0xff]
    %v661 = vadd.f32 %v324, %v552
    %v662 = vadd.f32 %v326, %v554
    %v663 = vadd.f32 %v397, %v625
    %v664 = vadd.f32 %v399, %v627
    %v697 = vunpack.c.l.b16 %v629
    %v698 = vunpack.c.h.b16 %v629
    %v699 = vunpack.c.l.b16 %v630
    %v700 = vunpack.c.h.b16 %v630
    %v701 = vunpack.c.l.b16 %v631
    %v702 = vunpack.c.h.b16 %v631
    %v703 = vunpack.c.l.b16 %v632
    %v704 = vunpack.c.h.b16 %v632
    %v705 = vunpack.c.l.b16 %v633
    %v706 = vunpack.c.h.b16 %v633
    %v707 = vunpack.c.l.b16 %v634
    %v708 = vunpack.c.h.b16 %v634
    %v709 = vunpack.c.l.b16 %v635
    %v710 = vunpack.c.h.b16 %v635
    %v711 = vunpack.c.l.b16 %v636
    %v712 = vunpack.c.h.b16 %v636
    %v713 = vunpack.c.l.b16 %v637
    %v714 = vunpack.c.h.b16 %v637
    %v715 = vunpack.c.l.b16 %v638
    %v716 = vunpack.c.h.b16 %v638
    %v717 = vunpack.c.l.b16 %v639
    %v718 = vunpack.c.h.b16 %v639
    %v719 = vunpack.c.l.b16 %v640
    %v720 = vunpack.c.h.b16 %v640
    %v721 = vunpack.c.l.b16 %v641
    %v722 = vunpack.c.h.b16 %v641
    %v723 = vunpack.c.l.b16 %v642
    %v724 = vunpack.c.h.b16 %v642
    %v725 = vunpack.c.l.b16 %v643
    %v726 = vunpack.c.h.b16 %v643
    %v727 = vunpack.c.l.b16 %v644
    %v728 = vunpack.c.h.b16 %v644
    %v729 = vunpack.c.l.b16 %v645
    %v730 = vunpack.c.h.b16 %v645
    %v731 = vunpack.c.l.b16 %v646
    %v732 = vunpack.c.h.b16 %v646
    %v733 = vunpack.c.l.b16 %v647
    %v734 = vunpack.c.h.b16 %v647
    %v735 = vunpack.c.l.b16 %v648
    %v736 = vunpack.c.h.b16 %v648
    %v737 = vunpack.c.l.b16 %v649
    %v738 = vunpack.c.h.b16 %v649
    %v739 = vunpack.c.l.b16 %v650
    %v740 = vunpack.c.h.b16 %v650
    %v741 = vunpack.c.l.b16 %v651
    %v742 = vunpack.c.h.b16 %v651
    %v743 = vunpack.c.l.b16 %v652
    %v744 = vunpack.c.h.b16 %v652
    %v745 = vunpack.c.l.b16 %v653
    %v746 = vunpack.c.h.b16 %v653
    %v747 = vunpack.c.l.b16 %v654
    %v748 = vunpack.c.h.b16 %v654
    %v749 = vunpack.c.l.b16 %v655
    %v750 = vunpack.c.h.b16 %v655
    %v751 = vunpack.c.l.b16 %v656
    %v752 = vunpack.c.h.b16 %v656
    %v753 = vunpack.c.l.b16 %v657
    %v754 = vunpack.c.h.b16 %v657
    %v755 = vunpack.c.l.b16 %v658
    %v756 = vunpack.c.h.b16 %v658
    %v757 = vunpack.c.l.b16 %v659
    %v758 = vunpack.c.h.b16 %v659
    %v759 = vunpack.c.l.b16 %v660
    %v760 = vunpack.c.h.b16 %v660
    %v761 = vpack.c.b16 %v701, %v697
    %v762 = vpack.c.b16 %v702, %v698
    %v763 = vpack.c.b16 %v703, %v699
    %v764 = vpack.c.b16 %v704, %v700
    %v765 = vpack.c.b16 %v709, %v705
    %v766 = vpack.c.b16 %v710, %v706
    %v767 = vpack.c.b16 %v711, %v707
    %v768 = vpack.c.b16 %v712, %v708
    %v769 = vpack.c.b16 %v717, %v713
    %v770 = vpack.c.b16 %v718, %v714
    %v771 = vpack.c.b16 %v719, %v715
    %v772 = vpack.c.b16 %v720, %v716
    %v773 = vpack.c.b16 %v725, %v721
    %v774 = vpack.c.b16 %v726, %v722
    %v775 = vpack.c.b16 %v727, %v723
    %v776 = vpack.c.b16 %v728, %v724
    %v777 = vpack.c.b16 %v733, %v729
    %v778 = vpack.c.b16 %v734, %v730
    %v779 = vpack.c.b16 %v735, %v731
    %v780 = vpack.c.b16 %v736, %v732
    %v781 = vpack.c.b16 %v741, %v737
    %v782 = vpack.c.b16 %v742, %v738
    %v783 = vpack.c.b16 %v743, %v739
    %v784 = vpack.c.b16 %v744, %v740
    %v785 = vpack.c.b16 %v749, %v745
    %v786 = vpack.c.b16 %v750, %v746
    %v787 = vpack.c.b16 %v751, %v747
    %v788 = vpack.c.b16 %v752, %v748
    %v789 = vpack.c.b16 %v757, %v753
    %v790 = vpack.c.b16 %v758, %v754
    %v791 = vpack.c.b16 %v759, %v755
    %v792 = vpack.c.b16 %v760, %v756
    %825 = vmatprep.subr.bf16.mxu0 %v762
    %826 = vmatpush1.bf16.msra.mxu0 %v761
    %827 = vmatprep.subr.bf16.mxu0 %v766
    %828 = vmatpush1.bf16.msra.mxu0 %v765
    %829 = vmatprep.subr.bf16.mxu0 %v770
    %830 = vmatpush1.bf16.msra.mxu0 %v769
    %831 = vmatprep.subr.bf16.mxu0 %v774
    %832 = vmatpush1.bf16.msra.mxu0 %v773
    %833 = vmatprep.subr.bf16.mxu0 %v778
    %834 = vmatpush1.bf16.msra.mxu0 %v777
    %835 = vmatprep.subr.bf16.mxu0 %v782
    %836 = vmatpush1.bf16.msra.mxu0 %v781
    %837 = vmatprep.subr.bf16.mxu0 %v786
    %838 = vmatpush1.bf16.msra.mxu0 %v785
    %839 = vmatprep.subr.bf16.mxu0 %v790
    %840 = vmatpush1.bf16.msra.mxu0 %v789
    %841 = vmatprep.subr.bf16.mxu0 0
    %842 = vmatpush1.bf16.msra.mxu0 0
    %843 = vmatprep.subr.bf16.mxu0 0
    %844 = vmatpush1.bf16.msra.mxu0 0
    %845 = vmatprep.subr.bf16.mxu0 0
    %846 = vmatpush1.bf16.msra.mxu0 0
    %847 = vmatprep.subr.bf16.mxu0 0
    %848 = vmatpush1.bf16.msra.mxu0 0
    %849 = vmatprep.subr.bf16.mxu0 0
    %850 = vmatpush1.bf16.msra.mxu0 0
    %851 = vmatprep.subr.bf16.mxu0 0
    %852 = vmatpush1.bf16.msra.mxu0 0
    %853 = vmatprep.subr.bf16.mxu0 0
    %854 = vmatpush1.bf16.msra.mxu0 0
    %855 = vmatprep.subr.bf16.mxu0 0
    %856 = vmatpush1.bf16.msra.mxu0 0
    %857 = vmatprep.mubr.bf16.mxu0 0
    %858 = vmatmul.mubr.bf16.gmra.mrb[0].mxu0 0
    %v859 = vpop.f32.mrb[0].mxu0
    %v860 = vadd.f32 0.0, %v859
    %v861 = vpop.f32.mrb[0].mxu0
    %v862 = vadd.f32 0.0, %v861
    %v863 = vpop.f32.mrb[0].mxu0
    %v864 = vpop.f32.mrb[0].mxu0
    %865 = vdwg.mxu0
    %866 = vmatprep.subr.bf16.mxu0 %v764
    %867 = vmatpush1.bf16.msra.mxu0 %v763
    %868 = vmatprep.subr.bf16.mxu0 %v768
    %869 = vmatpush1.bf16.msra.mxu0 %v767
    %870 = vmatprep.subr.bf16.mxu0 %v772
    %871 = vmatpush1.bf16.msra.mxu0 %v771
    %872 = vmatprep.subr.bf16.mxu0 %v776
    %873 = vmatpush1.bf16.msra.mxu0 %v775
    %874 = vmatprep.subr.bf16.mxu0 %v780
    %875 = vmatpush1.bf16.msra.mxu0 %v779
    %876 = vmatprep.subr.bf16.mxu0 %v784
    %877 = vmatpush1.bf16.msra.mxu0 %v783
    %878 = vmatprep.subr.bf16.mxu0 %v788
    %879 = vmatpush1.bf16.msra.mxu0 %v787
    %880 = vmatprep.subr.bf16.mxu0 %v792
    %881 = vmatpush1.bf16.msra.mxu0 %v791
    %882 = vmatprep.subr.bf16.mxu0 0
    %883 = vmatpush1.bf16.msra.mxu0 0
    %884 = vmatprep.subr.bf16.mxu0 0
    %885 = vmatpush1.bf16.msra.mxu0 0
    %886 = vmatprep.subr.bf16.mxu0 0
    %887 = vmatpush1.bf16.msra.mxu0 0
    %888 = vmatprep.subr.bf16.mxu0 0
    %889 = vmatpush1.bf16.msra.mxu0 0
    %890 = vmatprep.subr.bf16.mxu0 0
    %891 = vmatpush1.bf16.msra.mxu0 0
    %892 = vmatprep.subr.bf16.mxu0 0
    %893 = vmatpush1.bf16.msra.mxu0 0
    %894 = vmatprep.subr.bf16.mxu0 0
    %895 = vmatpush1.bf16.msra.mxu0 0
    %896 = vmatprep.subr.bf16.mxu0 0
    %897 = vmatpush1.bf16.msra.mxu0 0
    %898 = vmatprep.mubr.bf16.mxu0 0
    %899 = vmatmul.mubr.bf16.gmra.mrb[0].mxu0 0
    %v900 = vpop.f32.mrb[0].mxu0
    %v901 = vadd.f32 0.0, %v900
    %v902 = vpop.f32.mrb[0].mxu0
    %v903 = vadd.f32 0.0, %v902
    %v904 = vpop.f32.mrb[0].mxu0
    %v905 = vpop.f32.mrb[0].mxu0
    %906 = vdwg.mxu0
    %v907 = vadd.f32 %v661, %v860
    %v908 = vadd.f32 %v662, %v862
    %v909 = vadd.f32 %v663, %v901
    %v910 = vadd.f32 %v664, %v903
    %v911 = vxor.u32 %v907, 2147483648
    %v912 = vmul.f32 %v911, 1.442695
    %v913 = vpow.pop %v912
    %v914 = vadd.f32 %v913, 1.0
    %v915 = vrcp.pop %v914
    %v916 = vmul.f32 1.0, %v915
    %v917 = vxor.u32 %v908, 2147483648
    %v918 = vmul.f32 %v917, 1.442695
    %v919 = vpow.pop %v918
    %v920 = vadd.f32 %v919, 1.0
    %v921 = vrcp.pop %v920
    %v922 = vmul.f32 1.0, %v921
    %v923 = vtanh.pop %v909
    %v924 = vxor.u32 %v910, 2147483648
    %v925 = vmul.f32 %v924, 1.442695
    %v926 = vpow.pop %v925
    %v927 = vadd.f32 %v926, 1.0
    %v928 = vrcp.pop %v927
    %v929 = vmul.f32 1.0, %v928
    %v930 = vmul.f32 %v922, 0.0
    %v931 = vmul.f32 %v916, %v923
    %v932 = vadd.f32 %v930, %v931
    %v933 = vtanh.pop %v932
    %v934 = vmul.f32 %v929, %v933
    %935 = vst.msk [vmem:[#allocation2] sm:$0xff] %vm276, %v934
    %vm936 = vcmask 523520
    %937 = vst.msk [vmem:[#allocation2 + $0x38] sm:$0xff] %vm936, %v934
    %v938 = vadd.f32 %v328, %v548
    %v939 = vadd.f32 %v330, %v550
    %v940 = vadd.f32 %v401, %v621
    %v941 = vadd.f32 %v403, %v623
    %v942 = vpack.c.bf16 %v934, %v934
    %943 = vmatprep.subr.bf16.mxu0 %v762
    %944 = vmatpush1.bf16.msra.mxu0 %v761
    %945 = vmatprep.subr.bf16.mxu0 %v766
    %946 = vmatpush1.bf16.msra.mxu0 %v765
    %947 = vmatprep.subr.bf16.mxu0 %v770
    %948 = vmatpush1.bf16.msra.mxu0 %v769
    %949 = vmatprep.subr.bf16.mxu0 %v774
    %950 = vmatpush1.bf16.msra.mxu0 %v773
    %951 = vmatprep.subr.bf16.mxu0 %v778
    %952 = vmatpush1.bf16.msra.mxu0 %v777
    %953 = vmatprep.subr.bf16.mxu0 %v782
    %954 = vmatpush1.bf16.msra.mxu0 %v781
    %955 = vmatprep.subr.bf16.mxu0 %v786
    %956 = vmatpush1.bf16.msra.mxu0 %v785
    %957 = vmatprep.subr.bf16.mxu0 %v790
    %958 = vmatpush1.bf16.msra.mxu0 %v789
    %959 = vmatprep.subr.bf16.mxu0 0
    %960 = vmatpush1.bf16.msra.mxu0 0
    %961 = vmatprep.subr.bf16.mxu0 0
    %962 = vmatpush1.bf16.msra.mxu0 0
    %963 = vmatprep.subr.bf16.mxu0 0
    %964 = vmatpush1.bf16.msra.mxu0 0
    %965 = vmatprep.subr.bf16.mxu0 0
    %966 = vmatpush1.bf16.msra.mxu0 0
    %967 = vmatprep.subr.bf16.mxu0 0
    %968 = vmatpush1.bf16.msra.mxu0 0
    %969 = vmatprep.subr.bf16.mxu0 0
    %970 = vmatpush1.bf16.msra.mxu0 0
    %971 = vmatprep.subr.bf16.mxu0 0
    %972 = vmatpush1.bf16.msra.mxu0 0
    %973 = vmatprep.subr.bf16.mxu0 0
    %974 = vmatpush1.bf16.msra.mxu0 0
    %975 = vmatprep.mubr.bf16.mxu0 0
    %976 = vmatmul.mubr.bf16.gmra.mrb[0].mxu0 %v942
    %v977 = vpop.f32.mrb[0].mxu0
    %v978 = vadd.f32 0.0, %v977
    %v979 = vpop.f32.mrb[0].mxu0
    %v980 = vadd.f32 0.0, %v979
    %v981 = vpop.f32.mrb[0].mxu0
    %v982 = vpop.f32.mrb[0].mxu0
    %983 = vdwg.mxu0
    %984 = vmatprep.subr.bf16.mxu0 %v764
    %985 = vmatpush1.bf16.msra.mxu0 %v763
    %986 = vmatprep.subr.bf16.mxu0 %v768
    %987 = vmatpush1.bf16.msra.mxu0 %v767
    %988 = vmatprep.subr.bf16.mxu0 %v772
    %989 = vmatpush1.bf16.msra.mxu0 %v771
    %990 = vmatprep.subr.bf16.mxu0 %v776
    %991 = vmatpush1.bf16.msra.mxu0 %v775
    %992 = vmatprep.subr.bf16.mxu0 %v780
    %993 = vmatpush1.bf16.msra.mxu0 %v779
    %994 = vmatprep.subr.bf16.mxu0 %v784
    %995 = vmatpush1.bf16.msra.mxu0 %v783
    %996 = vmatprep.subr.bf16.mxu0 %v788
    %997 = vmatpush1.bf16.msra.mxu0 %v787
    %998 = vmatprep.subr.bf16.mxu0 %v792
    %999 = vmatpush1.bf16.msra.mxu0 %v791
    %1000 = vmatprep.subr.bf16.mxu0 0
    %1001 = vmatpush1.bf16.msra.mxu0 0
    %1002 = vmatprep.subr.bf16.mxu0 0
    %1003 = vmatpush1.bf16.msra.mxu0 0
    %1004 = vmatprep.subr.bf16.mxu0 0
    %1005 = vmatpush1.bf16.msra.mxu0 0
    %1006 = vmatprep.subr.bf16.mxu0 0
    %1007 = vmatpush1.bf16.msra.mxu0 0
    %1008 = vmatprep.subr.bf16.mxu0 0
    %1009 = vmatpush1.bf16.msra.mxu0 0
    %1010 = vmatprep.subr.bf16.mxu0 0
    %1011 = vmatpush1.bf16.msra.mxu0 0
    %1012 = vmatprep.subr.bf16.mxu0 0
    %1013 = vmatpush1.bf16.msra.mxu0 0
    %1014 = vmatprep.subr.bf16.mxu0 0
    %1015 = vmatpush1.bf16.msra.mxu0 0
    %1016 = vmatprep.mubr.bf16.mxu0 0
    %1017 = vmatmul.mubr.bf16.gmra.mrb[0].mxu0 %v942
    %v1018 = vpop.f32.mrb[0].mxu0
    %v1019 = vadd.f32 0.0, %v1018
    %v1020 = vpop.f32.mrb[0].mxu0
    %v1021 = vadd.f32 0.0, %v1020
    %v1022 = vpop.f32.mrb[0].mxu0
    %v1023 = vpop.f32.mrb[0].mxu0
    %1024 = vdwg.mxu0
    %v1025 = vadd.f32 %v938, %v978
    %v1026 = vadd.f32 %v939, %v980
    %v1027 = vadd.f32 %v940, %v1019
    %v1028 = vadd.f32 %v941, %v1021
    %v1029 = vxor.u32 %v1025, 2147483648
    %v1030 = vmul.f32 %v1029, 1.442695
    %v1031 = vpow.pop %v1030
    %v1032 = vadd.f32 %v1031, 1.0
    %v1033 = vrcp.pop %v1032
    %v1034 = vmul.f32 1.0, %v1033
    %v1035 = vxor.u32 %v1026, 2147483648
    %v1036 = vmul.f32 %v1035, 1.442695
    %v1037 = vpow.pop %v1036
    %v1038 = vadd.f32 %v1037, 1.0
    %v1039 = vrcp.pop %v1038
    %v1040 = vmul.f32 1.0, %v1039
    %v1041 = vtanh.pop %v1027
    %v1042 = vxor.u32 %v1028, 2147483648
    %v1043 = vmul.f32 %v1042, 1.442695
    %v1044 = vpow.pop %v1043
    %v1045 = vadd.f32 %v1044, 1.0
    %v1046 = vrcp.pop %v1045
    %v1047 = vmul.f32 1.0, %v1046
    %v1048 = vmul.f32 %v1040, %v932
    %v1049 = vmul.f32 %v1034, %v1041
    %v1050 = vadd.f32 %v1048, %v1049
    %v1051 = vtanh.pop %v1050
    %v1052 = vmul.f32 %v1047, %v1051
    %1053 = vst.msk [vmem:[#allocation2 + $0x8] sm:$0xff] %vm276, %v1052
    %1054 = vst.msk [vmem:[#allocation2 + $0x30] sm:$0xff] %vm936, %v1052
    %v1055 = vadd.f32 %v334, %v542
    %v1056 = vadd.f32 %v336, %v544
    %v1057 = vadd.f32 %v407, %v615
    %v1058 = vadd.f32 %v409, %v617
    %v1059 = vpack.c.bf16 %v1052, %v1052
    %1060 = vmatprep.subr.bf16.mxu0 %v762
    %1061 = vmatpush1.bf16.msra.mxu0 %v761
    %1062 = vmatprep.subr.bf16.mxu0 %v766
    %1063 = vmatpush1.bf16.msra.mxu0 %v765
    %1064 = vmatprep.subr.bf16.mxu0 %v770
    %1065 = vmatpush1.bf16.msra.mxu0 %v769
    %1066 = vmatprep.subr.bf16.mxu0 %v774
    %1067 = vmatpush1.bf16.msra.mxu0 %v773
    %1068 = vmatprep.subr.bf16.mxu0 %v778
    %1069 = vmatpush1.bf16.msra.mxu0 %v777
    %1070 = vmatprep.subr.bf16.mxu0 %v782
    %1071 = vmatpush1.bf16.msra.mxu0 %v781
    %1072 = vmatprep.subr.bf16.mxu0 %v786
    %1073 = vmatpush1.bf16.msra.mxu0 %v785
    %1074 = vmatprep.subr.bf16.mxu0 %v790
    %1075 = vmatpush1.bf16.msra.mxu0 %v789
    %1076 = vmatprep.subr.bf16.mxu0 0
    %1077 = vmatpush1.bf16.msra.mxu0 0
    %1078 = vmatprep.subr.bf16.mxu0 0
    %1079 = vmatpush1.bf16.msra.mxu0 0
    %1080 = vmatprep.subr.bf16.mxu0 0
    %1081 = vmatpush1.bf16.msra.mxu0 0
    %1082 = vmatprep.subr.bf16.mxu0 0
    %1083 = vmatpush1.bf16.msra.mxu0 0
    %1084 = vmatprep.subr.bf16.mxu0 0
    %1085 = vmatpush1.bf16.msra.mxu0 0
    %1086 = vmatprep.subr.bf16.mxu0 0
    %1087 = vmatpush1.bf16.msra.mxu0 0
    %1088 = vmatprep.subr.bf16.mxu0 0
    %1089 = vmatpush1.bf16.msra.mxu0 0
    %1090 = vmatprep.subr.bf16.mxu0 0
    %1091 = vmatpush1.bf16.msra.mxu0 0
    %1092 = vmatprep.mubr.bf16.mxu0 0
    %1093 = vmatmul.mubr.bf16.gmra.mrb[0].mxu0 %v1059
    %v1094 = vpop.f32.mrb[0].mxu0
    %v1095 = vadd.f32 0.0, %v1094
    %v1096 = vpop.f32.mrb[0].mxu0
    %v1097 = vadd.f32 0.0, %v1096
    %v1098 = vpop.f32.mrb[0].mxu0
    %v1099 = vpop.f32.mrb[0].mxu0
    %1100 = vdwg.mxu0
    %1101 = vmatprep.subr.bf16.mxu0 %v764
    %1102 = vmatpush1.bf16.msra.mxu0 %v763
    %1103 = vmatprep.subr.bf16.mxu0 %v768
    %1104 = vmatpush1.bf16.msra.mxu0 %v767
    %1105 = vmatprep.subr.bf16.mxu0 %v772
    %1106 = vmatpush1.bf16.msra.mxu0 %v771
    %1107 = vmatprep.subr.bf16.mxu0 %v776
    %1108 = vmatpush1.bf16.msra.mxu0 %v775
    %1109 = vmatprep.subr.bf16.mxu0 %v780
    %1110 = vmatpush1.bf16.msra.mxu0 %v779
    %1111 = vmatprep.subr.bf16.mxu0 %v784
    %1112 = vmatpush1.bf16.msra.mxu0 %v783
    %1113 = vmatprep.subr.bf16.mxu0 %v788
    %1114 = vmatpush1.bf16.msra.mxu0 %v787
    %1115 = vmatprep.subr.bf16.mxu0 %v792
    %1116 = vmatpush1.bf16.msra.mxu0 %v791
    %1117 = vmatprep.subr.bf16.mxu0 0
    %1118 = vmatpush1.bf16.msra.mxu0 0
    %1119 = vmatprep.subr.bf16.mxu0 0
    %1120 = vmatpush1.bf16.msra.mxu0 0
    %1121 = vmatprep.subr.bf16.mxu0 0
    %1122 = vmatpush1.bf16.msra.mxu0 0
    %1123 = vmatprep.subr.bf16.mxu0 0
    %1124 = vmatpush1.bf16.msra.mxu0 0
    %1125 = vmatprep.subr.bf16.mxu0 0
    %1126 = vmatpush1.bf16.msra.mxu0 0
    %1127 = vmatprep.subr.bf16.mxu0 0
    %1128 = vmatpush1.bf16.msra.mxu0 0
    %1129 = vmatprep.subr.bf16.mxu0 0
    %1130 = vmatpush1.bf16.msra.mxu0 0
    %1131 = vmatprep.subr.bf16.mxu0 0
    %1132 = vmatpush1.bf16.msra.mxu0 0
    %1133 = vmatprep.mubr.bf16.mxu0 0
    %1134 = vmatmul.mubr.bf16.gmra.mrb[0].mxu0 %v1059
    %v1135 = vpop.f32.mrb[0].mxu0
    %v1136 = vadd.f32 0.0, %v1135
    %v1137 = vpop.f32.mrb[0].mxu0
    %v1138 = vadd.f32 0.0, %v1137
    %v1139 = vpop.f32.mrb[0].mxu0
    %v1140 = vpop.f32.mrb[0].mxu0
    %1141 = vdwg.mxu0
    %v1142 = vadd.f32 %v1055, %v1095
    %v1143 = vadd.f32 %v1056, %v1097
    %v1144 = vadd.f32 %v1057, %v1136
    %v1145 = vadd.f32 %v1058, %v1138
    %v1146 = vxor.u32 %v1142, 2147483648
    %v1147 = vmul.f32 %v1146, 1.442695
    %v1148 = vpow.pop %v1147
    %v1149 = vadd.f32 %v1148, 1.0
    %v1150 = vrcp.pop %v1149
    %v1151 = vmul.f32 1.0, %v1150
    %v1152 = vxor.u32 %v1143, 2147483648
    %v1153 = vmul.f32 %v1152, 1.442695
    %v1154 = vpow.pop %v1153
    %v1155 = vadd.f32 %v1154, 1.0
    %v1156 = vrcp.pop %v1155
    %v1157 = vmul.f32 1.0, %v1156
    %v1158 = vtanh.pop %v1144
    %v1159 = vxor.u32 %v1145, 2147483648
    %v1160 = vmul.f32 %v1159, 1.442695
    %v1161 = vpow.pop %v1160
    %v1162 = vadd.f32 %v1161, 1.0
    %v1163 = vrcp.pop %v1162
    %v1164 = vmul.f32 1.0, %v1163
    %v1165 = vmul.f32 %v1157, %v1050
    %v1166 = vmul.f32 %v1151, %v1158
    %v1167 = vadd.f32 %v1165, %v1166
    %v1168 = vtanh.pop %v1167
    %v1169 = vmul.f32 %v1164, %v1168
    %1170 = vst.msk [vmem:[#allocation2 + $0x10] sm:$0xff] %vm276, %v1169
    %1171 = vst.msk [vmem:[#allocation2 + $0x28] sm:$0xff] %vm936, %v1169
    %v1172 = vadd.f32 %v338, %v538
    %v1173 = vadd.f32 %v340, %v540
    %v1174 = vadd.f32 %v411, %v611
    %v1175 = vadd.f32 %v413, %v613
    %v1176 = vpack.c.bf16 %v1169, %v1169
    %1177 = vmatprep.subr.bf16.mxu0 %v762
    %1178 = vmatpush1.bf16.msra.mxu0 %v761
    %1179 = vmatprep.subr.bf16.mxu0 %v766
    %1180 = vmatpush1.bf16.msra.mxu0 %v765
    %1181 = vmatprep.subr.bf16.mxu0 %v770
    %1182 = vmatpush1.bf16.msra.mxu0 %v769
    %1183 = vmatprep.subr.bf16.mxu0 %v774
    %1184 = vmatpush1.bf16.msra.mxu0 %v773
    %1185 = vmatprep.subr.bf16.mxu0 %v778
    %1186 = vmatpush1.bf16.msra.mxu0 %v777
    %1187 = vmatprep.subr.bf16.mxu0 %v782
    %1188 = vmatpush1.bf16.msra.mxu0 %v781
    %1189 = vmatprep.subr.bf16.mxu0 %v786
    %1190 = vmatpush1.bf16.msra.mxu0 %v785
    %1191 = vmatprep.subr.bf16.mxu0 %v790
    %1192 = vmatpush1.bf16.msra.mxu0 %v789
    %1193 = vmatprep.subr.bf16.mxu0 0
    %1194 = vmatpush1.bf16.msra.mxu0 0
    %1195 = vmatprep.subr.bf16.mxu0 0
    %1196 = vmatpush1.bf16.msra.mxu0 0
    %1197 = vmatprep.subr.bf16.mxu0 0
    %1198 = vmatpush1.bf16.msra.mxu0 0
    %1199 = vmatprep.subr.bf16.mxu0 0
    %1200 = vmatpush1.bf16.msra.mxu0 0
    %1201 = vmatprep.subr.bf16.mxu0 0
    %1202 = vmatpush1.bf16.msra.mxu0 0
    %1203 = vmatprep.subr.bf16.mxu0 0
    %1204 = vmatpush1.bf16.msra.mxu0 0
    %1205 = vmatprep.subr.bf16.mxu0 0
    %1206 = vmatpush1.bf16.msra.mxu0 0
    %1207 = vmatprep.subr.bf16.mxu0 0
    %1208 = vmatpush1.bf16.msra.mxu0 0
    %1209 = vmatprep.mubr.bf16.mxu0 0
    %1210 = vmatmul.mubr.bf16.gmra.mrb[0].mxu0 %v1176
    %v1211 = vpop.f32.mrb[0].mxu0
    %v1212 = vadd.f32 0.0, %v1211
    %v1213 = vpop.f32.mrb[0].mxu0
    %v1214 = vadd.f32 0.0, %v1213
    %v1215 = vpop.f32.mrb[0].mxu0
    %v1216 = vpop.f32.mrb[0].mxu0
    %1217 = vdwg.mxu0
    %1218 = vmatprep.subr.bf16.mxu0 %v764
    %1219 = vmatpush1.bf16.msra.mxu0 %v763
    %1220 = vmatprep.subr.bf16.mxu0 %v768
    %1221 = vmatpush1.bf16.msra.mxu0 %v767
    %1222 = vmatprep.subr.bf16.mxu0 %v772
    %1223 = vmatpush1.bf16.msra.mxu0 %v771
    %1224 = vmatprep.subr.bf16.mxu0 %v776
    %1225 = vmatpush1.bf16.msra.mxu0 %v775
    %1226 = vmatprep.subr.bf16.mxu0 %v780
    %1227 = vmatpush1.bf16.msra.mxu0 %v779
    %1228 = vmatprep.subr.bf16.mxu0 %v784
    %1229 = vmatpush1.bf16.msra.mxu0 %v783
    %1230 = vmatprep.subr.bf16.mxu0 %v788
    %1231 = vmatpush1.bf16.msra.mxu0 %v787
    %1232 = vmatprep.subr.bf16.mxu0 %v792
    %1233 = vmatpush1.bf16.msra.mxu0 %v791
    %1234 = vmatprep.subr.bf16.mxu0 0
    %1235 = vmatpush1.bf16.msra.mxu0 0
    %1236 = vmatprep.subr.bf16.mxu0 0
    %1237 = vmatpush1.bf16.msra.mxu0 0
    %1238 = vmatprep.subr.bf16.mxu0 0
    %1239 = vmatpush1.bf16.msra.mxu0 0
    %1240 = vmatprep.subr.bf16.mxu0 0
    %1241 = vmatpush1.bf16.msra.mxu0 0
    %1242 = vmatprep.subr.bf16.mxu0 0
    %1243 = vmatpush1.bf16.msra.mxu0 0
    %1244 = vmatprep.subr.bf16.mxu0 0
    %1245 = vmatpush1.bf16.msra.mxu0 0
    %1246 = vmatprep.subr.bf16.mxu0 0
    %1247 = vmatpush1.bf16.msra.mxu0 0
    %1248 = vmatprep.subr.bf16.mxu0 0
    %1249 = vmatpush1.bf16.msra.mxu0 0
    %1250 = vmatprep.mubr.bf16.mxu0 0
    %1251 = vmatmul.mubr.bf16.gmra.mrb[0].mxu0 %v1176
    %v1252 = vpop.f32.mrb[0].mxu0
    %v1253 = vadd.f32 0.0, %v1252
    %v1254 = vpop.f32.mrb[0].mxu0
    %v1255 = vadd.f32 0.0, %v1254
    %v1256 = vpop.f32.mrb[0].mxu0
    %v1257 = vpop.f32.mrb[0].mxu0
    %1258 = vdwg.mxu0
    %v1259 = vadd.f32 %v1172, %v1212
    %v1260 = vadd.f32 %v1173, %v1214
    %v1261 = vadd.f32 %v1174, %v1253
    %v1262 = vadd.f32 %v1175, %v1255
    %v1263 = vxor.u32 %v1259, 2147483648
    %v1264 = vmul.f32 %v1263, 1.442695
    %v1265 = vpow.pop %v1264
    %v1266 = vadd.f32 %v1265, 1.0
    %v1267 = vrcp.pop %v1266
    %v1268 = vmul.f32 1.0, %v1267
    %v1269 = vxor.u32 %v1260, 2147483648
    %v1270 = vmul.f32 %v1269, 1.442695
    %v1271 = vpow.pop %v1270
    %v1272 = vadd.f32 %v1271, 1.0
    %v1273 = vrcp.pop %v1272
    %v1274 = vmul.f32 1.0, %v1273
    %v1275 = vtanh.pop %v1261
    %v1276 = vxor.u32 %v1262, 2147483648
    %v1277 = vmul.f32 %v1276, 1.442695
    %v1278 = vpow.pop %v1277
    %v1279 = vadd.f32 %v1278, 1.0
    %v1280 = vrcp.pop %v1279
    %v1281 = vmul.f32 1.0, %v1280
    %v1282 = vmul.f32 %v1274, %v1167
    %v1283 = vmul.f32 %v1268, %v1275
    %v1284 = vadd.f32 %v1282, %v1283
    %v1285 = vtanh.pop %v1284
    %v1286 = vmul.f32 %v1281, %v1285
    %1287 = vst.msk [vmem:[#allocation2 + $0x18] sm:$0xff] %vm276, %v1286
    %1288 = vst.msk [vmem:[#allocation2 + $0x20] sm:$0xff] %vm936, %v1286
    %v1289 = vadd.f32 %v344, %v532
    %v1290 = vadd.f32 %v346, %v534
    %v1291 = vadd.f32 %v417, %v605
    %v1292 = vadd.f32 %v419, %v607
    %v1293 = vpack.c.bf16 %v1286, %v1286
    %1294 = vmatprep.subr.bf16.mxu0 %v762
    %1295 = vmatpush1.bf16.msra.mxu0 %v761
    %1296 = vmatprep.subr.bf16.mxu0 %v766
    %1297 = vmatpush1.bf16.msra.mxu0 %v765
    %1298 = vmatprep.subr.bf16.mxu0 %v770
    %1299 = vmatpush1.bf16.msra.mxu0 %v769
    %1300 = vmatprep.subr.bf16.mxu0 %v774
    %1301 = vmatpush1.bf16.msra.mxu0 %v773
    %1302 = vmatprep.subr.bf16.mxu0 %v778
    %1303 = vmatpush1.bf16.msra.mxu0 %v777
    %1304 = vmatprep.subr.bf16.mxu0 %v782
    %1305 = vmatpush1.bf16.msra.mxu0 %v781
    %1306 = vmatprep.subr.bf16.mxu0 %v786
    %1307 = vmatpush1.bf16.msra.mxu0 %v785
    %1308 = vmatprep.subr.bf16.mxu0 %v790
    %1309 = vmatpush1.bf16.msra.mxu0 %v789
    %1310 = vmatprep.subr.bf16.mxu0 0
    %1311 = vmatpush1.bf16.msra.mxu0 0
    %1312 = vmatprep.subr.bf16.mxu0 0
    %1313 = vmatpush1.bf16.msra.mxu0 0
    %1314 = vmatprep.subr.bf16.mxu0 0
    %1315 = vmatpush1.bf16.msra.mxu0 0
    %1316 = vmatprep.subr.bf16.mxu0 0
    %1317 = vmatpush1.bf16.msra.mxu0 0
    %1318 = vmatprep.subr.bf16.mxu0 0
    %1319 = vmatpush1.bf16.msra.mxu0 0
    %1320 = vmatprep.subr.bf16.mxu0 0
    %1321 = vmatpush1.bf16.msra.mxu0 0
    %1322 = vmatprep.subr.bf16.mxu0 0
    %1323 = vmatpush1.bf16.msra.mxu0 0
    %1324 = vmatprep.subr.bf16.mxu0 0
    %1325 = vmatpush1.bf16.msra.mxu0 0
    %1326 = vmatprep.mubr.bf16.mxu0 0
    %1327 = vmatmul.mubr.bf16.gmra.mrb[0].mxu0 %v1293
    %v1328 = vpop.f32.mrb[0].mxu0
    %v1329 = vadd.f32 0.0, %v1328
    %v1330 = vpop.f32.mrb[0].mxu0
    %v1331 = vadd.f32 0.0, %v1330
    %v1332 = vpop.f32.mrb[0].mxu0
    %v1333 = vpop.f32.mrb[0].mxu0
    %1334 = vdwg.mxu0
    %1335 = vmatprep.subr.bf16.mxu0 %v764
    %1336 = vmatpush1.bf16.msra.mxu0 %v763
    %1337 = vmatprep.subr.bf16.mxu0 %v768
    %1338 = vmatpush1.bf16.msra.mxu0 %v767
    %1339 = vmatprep.subr.bf16.mxu0 %v772
    %1340 = vmatpush1.bf16.msra.mxu0 %v771
    %1341 = vmatprep.subr.bf16.mxu0 %v776
    %1342 = vmatpush1.bf16.msra.mxu0 %v775
    %1343 = vmatprep.subr.bf16.mxu0 %v780
    %1344 = vmatpush1.bf16.msra.mxu0 %v779
    %1345 = vmatprep.subr.bf16.mxu0 %v784
    %1346 = vmatpush1.bf16.msra.mxu0 %v783
    %1347 = vmatprep.subr.bf16.mxu0 %v788
    %1348 = vmatpush1.bf16.msra.mxu0 %v787
    %1349 = vmatprep.subr.bf16.mxu0 %v792
    %1350 = vmatpush1.bf16.msra.mxu0 %v791
    %1351 = vmatprep.subr.bf16.mxu0 0
    %1352 = vmatpush1.bf16.msra.mxu0 0
    %1353 = vmatprep.subr.bf16.mxu0 0
    %1354 = vmatpush1.bf16.msra.mxu0 0
    %1355 = vmatprep.subr.bf16.mxu0 0
    %1356 = vmatpush1.bf16.msra.mxu0 0
    %1357 = vmatprep.subr.bf16.mxu0 0
    %1358 = vmatpush1.bf16.msra.mxu0 0
    %1359 = vmatprep.subr.bf16.mxu0 0
    %1360 = vmatpush1.bf16.msra.mxu0 0
    %1361 = vmatprep.subr.bf16.mxu0 0
    %1362 = vmatpush1.bf16.msra.mxu0 0
    %1363 = vmatprep.subr.bf16.mxu0 0
    %1364 = vmatpush1.bf16.msra.mxu0 0
    %1365 = vmatprep.subr.bf16.mxu0 0
    %1366 = vmatpush1.bf16.msra.mxu0 0
    %1367 = vmatprep.mubr.bf16.mxu0 0
    %1368 = vmatmul.mubr.bf16.gmra.mrb[0].mxu0 %v1293
    %v1369 = vpop.f32.mrb[0].mxu0
    %v1370 = vadd.f32 0.0, %v1369
    %v1371 = vpop.f32.mrb[0].mxu0
    %v1372 = vadd.f32 0.0, %v1371
    %v1373 = vpop.f32.mrb[0].mxu0
    %v1374 = vpop.f32.mrb[0].mxu0
    %1375 = vdwg.mxu0
    %v1376 = vadd.f32 %v1289, %v1329
    %v1377 = vadd.f32 %v1290, %v1331
    %v1378 = vadd.f32 %v1291, %v1370
    %v1379 = vadd.f32 %v1292, %v1372
    %v1380 = vxor.u32 %v1376, 2147483648
    %v1381 = vmul.f32 %v1380, 1.442695
    %v1382 = vpow.pop %v1381
    %v1383 = vadd.f32 %v1382, 1.0
    %v1384 = vrcp.pop %v1383
    %v1385 = vmul.f32 1.0, %v1384
    %v1386 = vxor.u32 %v1377, 2147483648
    %v1387 = vmul.f32 %v1386, 1.442695
    %v1388 = vpow.pop %v1387
    %v1389 = vadd.f32 %v1388, 1.0
    %v1390 = vrcp.pop %v1389
    %v1391 = vmul.f32 1.0, %v1390
    %v1392 = vtanh.pop %v1378
    %v1393 = vxor.u32 %v1379, 2147483648
    %v1394 = vmul.f32 %v1393, 1.442695
    %v1395 = vpow.pop %v1394
    %v1396 = vadd.f32 %v1395, 1.0
    %v1397 = vrcp.pop %v1396
    %v1398 = vmul.f32 1.0, %v1397
    %v1399 = vmul.f32 %v1391, %v1284
    %v1400 = vmul.f32 %v1385, %v1392
    %v1401 = vadd.f32 %v1399, %v1400
    %v1402 = vtanh.pop %v1401
    %v1403 = vmul.f32 %v1398, %v1402
    %1404 = vst.msk [vmem:[#allocation2 + $0x20] sm:$0xff] %vm276, %v1403
    %1405 = vst.msk [vmem:[#allocation2 + $0x18] sm:$0xff] %vm936, %v1403
    %v1406 = vadd.f32 %v348, %v528
    %v1407 = vadd.f32 %v350, %v530
    %v1408 = vadd.f32 %v421, %v601
    %v1409 = vadd.f32 %v423, %v603
    %v1410 = vpack.c.bf16 %v1403, %v1403
    %1411 = vmatprep.subr.bf16.mxu0 %v762
    %1412 = vmatpush1.bf16.msra.mxu0 %v761
    %1413 = vmatprep.subr.bf16.mxu0 %v766
    %1414 = vmatpush1.bf16.msra.mxu0 %v765
    %1415 = vmatprep.subr.bf16.mxu0 %v770
    %1416 = vmatpush1.bf16.msra.mxu0 %v769
    %1417 = vmatprep.subr.bf16.mxu0 %v774
    %1418 = vmatpush1.bf16.msra.mxu0 %v773
    %1419 = vmatprep.subr.bf16.mxu0 %v778
    %1420 = vmatpush1.bf16.msra.mxu0 %v777
    %1421 = vmatprep.subr.bf16.mxu0 %v782
    %1422 = vmatpush1.bf16.msra.mxu0 %v781
    %1423 = vmatprep.subr.bf16.mxu0 %v786
    %1424 = vmatpush1.bf16.msra.mxu0 %v785
    %1425 = vmatprep.subr.bf16.mxu0 %v790
    %1426 = vmatpush1.bf16.msra.mxu0 %v789
    %1427 = vmatprep.subr.bf16.mxu0 0
    %1428 = vmatpush1.bf16.msra.mxu0 0
    %1429 = vmatprep.subr.bf16.mxu0 0
    %1430 = vmatpush1.bf16.msra.mxu0 0
    %1431 = vmatprep.subr.bf16.mxu0 0
    %1432 = vmatpush1.bf16.msra.mxu0 0
    %1433 = vmatprep.subr.bf16.mxu0 0
    %1434 = vmatpush1.bf16.msra.mxu0 0
    %1435 = vmatprep.subr.bf16.mxu0 0
    %1436 = vmatpush1.bf16.msra.mxu0 0
    %1437 = vmatprep.subr.bf16.mxu0 0
    %1438 = vmatpush1.bf16.msra.mxu0 0
    %1439 = vmatprep.subr.bf16.mxu0 0
    %1440 = vmatpush1.bf16.msra.mxu0 0
    %1441 = vmatprep.subr.bf16.mxu0 0
    %1442 = vmatpush1.bf16.msra.mxu0 0
    %1443 = vmatprep.mubr.bf16.mxu0 0
    %1444 = vmatmul.mubr.bf16.gmra.mrb[0].mxu0 %v1410
    %v1445 = vpop.f32.mrb[0].mxu0
    %v1446 = vadd.f32 0.0, %v1445
    %v1447 = vpop.f32.mrb[0].mxu0
    %v1448 = vadd.f32 0.0, %v1447
    %v1449 = vpop.f32.mrb[0].mxu0
    %v1450 = vpop.f32.mrb[0].mxu0
    %1451 = vdwg.mxu0
    %1452 = vmatprep.subr.bf16.mxu0 %v764
    %1453 = vmatpush1.bf16.msra.mxu0 %v763
    %1454 = vmatprep.subr.bf16.mxu0 %v768
    %1455 = vmatpush1.bf16.msra.mxu0 %v767
    %1456 = vmatprep.subr.bf16.mxu0 %v772
    %1457 = vmatpush1.bf16.msra.mxu0 %v771
    %1458 = vmatprep.subr.bf16.mxu0 %v776
    %1459 = vmatpush1.bf16.msra.mxu0 %v775
    %1460 = vmatprep.subr.bf16.mxu0 %v780
    %1461 = vmatpush1.bf16.msra.mxu0 %v779
    %1462 = vmatprep.subr.bf16.mxu0 %v784
    %1463 = vmatpush1.bf16.msra.mxu0 %v783
    %1464 = vmatprep.subr.bf16.mxu0 %v788
    %1465 = vmatpush1.bf16.msra.mxu0 %v787
    %1466 = vmatprep.subr.bf16.mxu0 %v792
    %1467 = vmatpush1.bf16.msra.mxu0 %v791
    %1468 = vmatprep.subr.bf16.mxu0 0
    %1469 = vmatpush1.bf16.msra.mxu0 0
    %1470 = vmatprep.subr.bf16.mxu0 0
    %1471 = vmatpush1.bf16.msra.mxu0 0
    %1472 = vmatprep.subr.bf16.mxu0 0
    %1473 = vmatpush1.bf16.msra.mxu0 0
    %1474 = vmatprep.subr.bf16.mxu0 0
    %1475 = vmatpush1.bf16.msra.mxu0 0
    %1476 = vmatprep.subr.bf16.mxu0 0
    %1477 = vmatpush1.bf16.msra.mxu0 0
    %1478 = vmatprep.subr.bf16.mxu0 0
    %1479 = vmatpush1.bf16.msra.mxu0 0
    %1480 = vmatprep.subr.bf16.mxu0 0
    %1481 = vmatpush1.bf16.msra.mxu0 0
    %1482 = vmatprep.subr.bf16.mxu0 0
    %1483 = vmatpush1.bf16.msra.mxu0 0
    %1484 = vmatprep.mubr.bf16.mxu0 0
    %1485 = vmatmul.mubr.bf16.gmra.mrb[0].mxu0 %v1410
    %v1486 = vpop.f32.mrb[0].mxu0
    %v1487 = vadd.f32 0.0, %v1486
    %v1488 = vpop.f32.mrb[0].mxu0
    %v1489 = vadd.f32 0.0, %v1488
    %v1490 = vpop.f32.mrb[0].mxu0
    %v1491 = vpop.f32.mrb[0].mxu0
    %1492 = vdwg.mxu0
    %v1493 = vadd.f32 %v1406, %v1446
    %v1494 = vadd.f32 %v1407, %v1448
    %v1495 = vadd.f32 %v1408, %v1487
    %v1496 = vadd.f32 %v1409, %v1489
    %v1497 = vxor.u32 %v1493, 2147483648
    %v1498 = vmul.f32 %v1497, 1.442695
    %v1499 = vpow.pop %v1498
    %v1500 = vadd.f32 %v1499, 1.0
    %v1501 = vrcp.pop %v1500
    %v1502 = vmul.f32 1.0, %v1501
    %v1503 = vxor.u32 %v1494, 2147483648
    %v1504 = vmul.f32 %v1503, 1.442695
    %v1505 = vpow.pop %v1504
    %v1506 = vadd.f32 %v1505, 1.0
    %v1507 = vrcp.pop %v1506
    %v1508 = vmul.f32 1.0, %v1507
    %v1509 = vtanh.pop %v1495
    %v1510 = vxor.u32 %v1496, 2147483648
    %v1511 = vmul.f32 %v1510, 1.442695
    %v1512 = vpow.pop %v1511
    %v1513 = vadd.f32 %v1512, 1.0
    %v1514 = vrcp.pop %v1513
    %v1515 = vmul.f32 1.0, %v1514
    %v1516 = vmul.f32 %v1508, %v1401
    %v1517 = vmul.f32 %v1502, %v1509
    %v1518 = vadd.f32 %v1516, %v1517
    %v1519 = vtanh.pop %v1518
    %v1520 = vmul.f32 %v1515, %v1519
    %1521 = vst.msk [vmem:[#allocation2 + $0x28] sm:$0xff] %vm276, %v1520
    %1522 = vst.msk [vmem:[#allocation2 + $0x10] sm:$0xff] %vm936, %v1520
    %v1523 = vadd.f32 %v354, %v522
    %v1524 = vadd.f32 %v356, %v524
    %v1525 = vadd.f32 %v427, %v595
    %v1526 = vadd.f32 %v429, %v597
    %v1527 = vpack.c.bf16 %v1520, %v1520
    %1528 = vmatprep.subr.bf16.mxu0 %v762
    %1529 = vmatpush1.bf16.msra.mxu0 %v761
    %1530 = vmatprep.subr.bf16.mxu0 %v766
    %1531 = vmatpush1.bf16.msra.mxu0 %v765
    %1532 = vmatprep.subr.bf16.mxu0 %v770
    %1533 = vmatpush1.bf16.msra.mxu0 %v769
    %1534 = vmatprep.subr.bf16.mxu0 %v774
    %1535 = vmatpush1.bf16.msra.mxu0 %v773
    %1536 = vmatprep.subr.bf16.mxu0 %v778
    %1537 = vmatpush1.bf16.msra.mxu0 %v777
    %1538 = vmatprep.subr.bf16.mxu0 %v782
    %1539 = vmatpush1.bf16.msra.mxu0 %v781
    %1540 = vmatprep.subr.bf16.mxu0 %v786
    %1541 = vmatpush1.bf16.msra.mxu0 %v785
    %1542 = vmatprep.subr.bf16.mxu0 %v790
    %1543 = vmatpush1.bf16.msra.mxu0 %v789
    %1544 = vmatprep.subr.bf16.mxu0 0
    %1545 = vmatpush1.bf16.msra.mxu0 0
    %1546 = vmatprep.subr.bf16.mxu0 0
    %1547 = vmatpush1.bf16.msra.mxu0 0
    %1548 = vmatprep.subr.bf16.mxu0 0
    %1549 = vmatpush1.bf16.msra.mxu0 0
    %1550 = vmatprep.subr.bf16.mxu0 0
    %1551 = vmatpush1.bf16.msra.mxu0 0
    %1552 = vmatprep.subr.bf16.mxu0 0
    %1553 = vmatpush1.bf16.msra.mxu0 0
    %1554 = vmatprep.subr.bf16.mxu0 0
    %1555 = vmatpush1.bf16.msra.mxu0 0
    %1556 = vmatprep.subr.bf16.mxu0 0
    %1557 = vmatpush1.bf16.msra.mxu0 0
    %1558 = vmatprep.subr.bf16.mxu0 0
    %1559 = vmatpush1.bf16.msra.mxu0 0
    %1560 = vmatprep.mubr.bf16.mxu0 0
    %1561 = vmatmul.mubr.bf16.gmra.mrb[0].mxu0 %v1527
    %v1562 = vpop.f32.mrb[0].mxu0
    %v1563 = vadd.f32 0.0, %v1562
    %v1564 = vpop.f32.mrb[0].mxu0
    %v1565 = vadd.f32 0.0, %v1564
    %v1566 = vpop.f32.mrb[0].mxu0
    %v1567 = vpop.f32.mrb[0].mxu0
    %1568 = vdwg.mxu0
    %1569 = vmatprep.subr.bf16.mxu0 %v764
    %1570 = vmatpush1.bf16.msra.mxu0 %v763
    %1571 = vmatprep.subr.bf16.mxu0 %v768
    %1572 = vmatpush1.bf16.msra.mxu0 %v767
    %1573 = vmatprep.subr.bf16.mxu0 %v772
    %1574 = vmatpush1.bf16.msra.mxu0 %v771
    %1575 = vmatprep.subr.bf16.mxu0 %v776
    %1576 = vmatpush1.bf16.msra.mxu0 %v775
    %1577 = vmatprep.subr.bf16.mxu0 %v780
    %1578 = vmatpush1.bf16.msra.mxu0 %v779
    %1579 = vmatprep.subr.bf16.mxu0 %v784
    %1580 = vmatpush1.bf16.msra.mxu0 %v783
    %1581 = vmatprep.subr.bf16.mxu0 %v788
    %1582 = vmatpush1.bf16.msra.mxu0 %v787
    %1583 = vmatprep.subr.bf16.mxu0 %v792
    %1584 = vmatpush1.bf16.msra.mxu0 %v791
    %1585 = vmatprep.subr.bf16.mxu0 0
    %1586 = vmatpush1.bf16.msra.mxu0 0
    %1587 = vmatprep.subr.bf16.mxu0 0
    %1588 = vmatpush1.bf16.msra.mxu0 0
    %1589 = vmatprep.subr.bf16.mxu0 0
    %1590 = vmatpush1.bf16.msra.mxu0 0
    %1591 = vmatprep.subr.bf16.mxu0 0
    %1592 = vmatpush1.bf16.msra.mxu0 0
    %1593 = vmatprep.subr.bf16.mxu0 0
    %1594 = vmatpush1.bf16.msra.mxu0 0
    %1595 = vmatprep.subr.bf16.mxu0 0
    %1596 = vmatpush1.bf16.msra.mxu0 0
    %1597 = vmatprep.subr.bf16.mxu0 0
    %1598 = vmatpush1.bf16.msra.mxu0 0
    %1599 = vmatprep.subr.bf16.mxu0 0
    %1600 = vmatpush1.bf16.msra.mxu0 0
    %1601 = vmatprep.mubr.bf16.mxu0 0
    %1602 = vmatmul.mubr.bf16.gmra.mrb[0].mxu0 %v1527
    %v1603 = vpop.f32.mrb[0].mxu0
    %v1604 = vadd.f32 0.0, %v1603
    %v1605 = vpop.f32.mrb[0].mxu0
    %v1606 = vadd.f32 0.0, %v1605
    %v1607 = vpop.f32.mrb[0].mxu0
    %v1608 = vpop.f32.mrb[0].mxu0
    %1609 = vdwg.mxu0
    %v1610 = vadd.f32 %v1523, %v1563
    %v1611 = vadd.f32 %v1524, %v1565
    %v1612 = vadd.f32 %v1525, %v1604
    %v1613 = vadd.f32 %v1526, %v1606
    %v1614 = vxor.u32 %v1610, 2147483648
    %v1615 = vmul.f32 %v1614, 1.442695
    %v1616 = vpow.pop %v1615
    %v1617 = vadd.f32 %v1616, 1.0
    %v1618 = vrcp.pop %v1617
    %v1619 = vmul.f32 1.0, %v1618
    %v1620 = vxor.u32 %v1611, 2147483648
    %v1621 = vmul.f32 %v1620, 1.442695
    %v1622 = vpow.pop %v1621
    %v1623 = vadd.f32 %v1622, 1.0
    %v1624 = vrcp.pop %v1623
    %v1625 = vmul.f32 1.0, %v1624
    %v1626 = vtanh.pop %v1612
    %v1627 = vxor.u32 %v1613, 2147483648
    %v1628 = vmul.f32 %v1627, 1.442695
    %v1629 = vpow.pop %v1628
    %v1630 = vadd.f32 %v1629, 1.0
    %v1631 = vrcp.pop %v1630
    %v1632 = vmul.f32 1.0, %v1631
    %v1633 = vmul.f32 %v1625, %v1518
    %v1634 = vmul.f32 %v1619, %v1626
    %v1635 = vadd.f32 %v1633, %v1634
    %v1636 = vtanh.pop %v1635
    %v1637 = vmul.f32 %v1632, %v1636
    %1638 = vst.msk [vmem:[#allocation2 + $0x30] sm:$0xff] %vm276, %v1637
    %1639 = vst.msk [vmem:[#allocation2 + $0x8] sm:$0xff] %vm936, %v1637
    %v1640 = vadd.f32 %v358, %v518
    %v1641 = vadd.f32 %v360, %v520
    %v1642 = vadd.f32 %v431, %v591
    %v1643 = vadd.f32 %v433, %v593
    %v1644 = vpack.c.bf16 %v1637, %v1637
    %1645 = vmatprep.subr.bf16.mxu0 %v762
    %1646 = vmatpush1.bf16.msra.mxu0 %v761
    %1647 = vmatprep.subr.bf16.mxu0 %v766
    %1648 = vmatpush1.bf16.msra.mxu0 %v765
    %1649 = vmatprep.subr.bf16.mxu0 %v770
    %1650 = vmatpush1.bf16.msra.mxu0 %v769
    %1651 = vmatprep.subr.bf16.mxu0 %v774
    %1652 = vmatpush1.bf16.msra.mxu0 %v773
    %1653 = vmatprep.subr.bf16.mxu0 %v778
    %1654 = vmatpush1.bf16.msra.mxu0 %v777
    %1655 = vmatprep.subr.bf16.mxu0 %v782
    %1656 = vmatpush1.bf16.msra.mxu0 %v781
    %1657 = vmatprep.subr.bf16.mxu0 %v786
    %1658 = vmatpush1.bf16.msra.mxu0 %v785
    %1659 = vmatprep.subr.bf16.mxu0 %v790
    %1660 = vmatpush1.bf16.msra.mxu0 %v789
    %1661 = vmatprep.subr.bf16.mxu0 0
    %1662 = vmatpush1.bf16.msra.mxu0 0
    %1663 = vmatprep.subr.bf16.mxu0 0
    %1664 = vmatpush1.bf16.msra.mxu0 0
    %1665 = vmatprep.subr.bf16.mxu0 0
    %1666 = vmatpush1.bf16.msra.mxu0 0
    %1667 = vmatprep.subr.bf16.mxu0 0
    %1668 = vmatpush1.bf16.msra.mxu0 0
    %1669 = vmatprep.subr.bf16.mxu0 0
    %1670 = vmatpush1.bf16.msra.mxu0 0
    %1671 = vmatprep.subr.bf16.mxu0 0
    %1672 = vmatpush1.bf16.msra.mxu0 0
    %1673 = vmatprep.subr.bf16.mxu0 0
    %1674 = vmatpush1.bf16.msra.mxu0 0
    %1675 = vmatprep.subr.bf16.mxu0 0
    %1676 = vmatpush1.bf16.msra.mxu0 0
    %1677 = vmatprep.mubr.bf16.mxu0 0
    %1678 = vmatmul.mubr.bf16.gmra.mrb[0].mxu0 %v1644
    %v1679 = vpop.f32.mrb[0].mxu0
    %v1680 = vadd.f32 0.0, %v1679
    %v1681 = vpop.f32.mrb[0].mxu0
    %v1682 = vadd.f32 0.0, %v1681
    %v1683 = vpop.f32.mrb[0].mxu0
    %v1684 = vpop.f32.mrb[0].mxu0
    %1685 = vdwg.mxu0
    %1686 = vmatprep.subr.bf16.mxu0 %v764
    %1687 = vmatpush1.bf16.msra.mxu0 %v763
    %1688 = vmatprep.subr.bf16.mxu0 %v768
    %1689 = vmatpush1.bf16.msra.mxu0 %v767
    %1690 = vmatprep.subr.bf16.mxu0 %v772
    %1691 = vmatpush1.bf16.msra.mxu0 %v771
    %1692 = vmatprep.subr.bf16.mxu0 %v776
    %1693 = vmatpush1.bf16.msra.mxu0 %v775
    %1694 = vmatprep.subr.bf16.mxu0 %v780
    %1695 = vmatpush1.bf16.msra.mxu0 %v779
    %1696 = vmatprep.subr.bf16.mxu0 %v784
    %1697 = vmatpush1.bf16.msra.mxu0 %v783
    %1698 = vmatprep.subr.bf16.mxu0 %v788
    %1699 = vmatpush1.bf16.msra.mxu0 %v787
    %1700 = vmatprep.subr.bf16.mxu0 %v792
    %1701 = vmatpush1.bf16.msra.mxu0 %v791
    %1702 = vmatprep.subr.bf16.mxu0 0
    %1703 = vmatpush1.bf16.msra.mxu0 0
    %1704 = vmatprep.subr.bf16.mxu0 0
    %1705 = vmatpush1.bf16.msra.mxu0 0
    %1706 = vmatprep.subr.bf16.mxu0 0
    %1707 = vmatpush1.bf16.msra.mxu0 0
    %1708 = vmatprep.subr.bf16.mxu0 0
    %1709 = vmatpush1.bf16.msra.mxu0 0
    %1710 = vmatprep.subr.bf16.mxu0 0
    %1711 = vmatpush1.bf16.msra.mxu0 0
    %1712 = vmatprep.subr.bf16.mxu0 0
    %1713 = vmatpush1.bf16.msra.mxu0 0
    %1714 = vmatprep.subr.bf16.mxu0 0
    %1715 = vmatpush1.bf16.msra.mxu0 0
    %1716 = vmatprep.subr.bf16.mxu0 0
    %1717 = vmatpush1.bf16.msra.mxu0 0
    %1718 = vmatprep.mubr.bf16.mxu0 0
    %1719 = vmatmul.mubr.bf16.gmra.mrb[0].mxu0 %v1644
    %v1720 = vpop.f32.mrb[0].mxu0
    %v1721 = vadd.f32 0.0, %v1720
    %v1722 = vpop.f32.mrb[0].mxu0
    %v1723 = vadd.f32 0.0, %v1722
    %v1724 = vpop.f32.mrb[0].mxu0
    %v1725 = vpop.f32.mrb[0].mxu0
    %1726 = vdwg.mxu0
    %v1727 = vadd.f32 %v1640, %v1680
    %v1728 = vadd.f32 %v1641, %v1682
    %v1729 = vadd.f32 %v1642, %v1721
    %v1730 = vadd.f32 %v1643, %v1723
    %v1731 = vxor.u32 %v1727, 2147483648
    %v1732 = vmul.f32 %v1731, 1.442695
    %v1733 = vpow.pop %v1732
    %v1734 = vadd.f32 %v1733, 1.0
    %v1735 = vrcp.pop %v1734
    %v1736 = vmul.f32 1.0, %v1735
    %v1737 = vxor.u32 %v1728, 2147483648
    %v1738 = vmul.f32 %v1737, 1.442695
    %v1739 = vpow.pop %v1738
    %v1740 = vadd.f32 %v1739, 1.0
    %v1741 = vrcp.pop %v1740
    %v1742 = vmul.f32 1.0, %v1741
    %v1743 = vtanh.pop %v1729
    %v1744 = vxor.u32 %v1730, 2147483648
    %v1745 = vmul.f32 %v1744, 1.442695
    %v1746 = vpow.pop %v1745
    %v1747 = vadd.f32 %v1746, 1.0
    %v1748 = vrcp.pop %v1747
    %v1749 = vmul.f32 1.0, %v1748
    %v1750 = vmul.f32 %v1742, %v1635
    %v1751 = vmul.f32 %v1736, %v1743
    %v1752 = vadd.f32 %v1750, %v1751
    %v1753 = vtanh.pop %v1752
    %v1754 = vmul.f32 %v1749, %v1753
    %1755 = vst.msk [vmem:[#allocation2 + $0x38] sm:$0xff] %vm276, %v1754
    %1756 = vst.msk [vmem:[#allocation2] sm:$0xff] %vm936, %v1754
    %v1757 = vld [vmem:[#allocation2] sm:$0xff]
    %v1758 = vld [vmem:[#allocation2 + $0x8] sm:$0xff]
    %v1759 = vld [vmem:[#allocation2 + $0x10] sm:$0xff]
    %v1760 = vld [vmem:[#allocation2 + $0x18] sm:$0xff]
    %v1761 = vld [vmem:[#allocation2 + $0x20] sm:$0xff]
    %v1762 = vld [vmem:[#allocation2 + $0x28] sm:$0xff]
    %v1763 = vld [vmem:[#allocation2 + $0x30] sm:$0xff]
    %v1764 = vld [vmem:[#allocation2 + $0x38] sm:$0xff]
    %v1765 = vpack.c.bf16 %v1758, %v1757
    %v1766 = vpack.c.bf16 %v1760, %v1759
    %v1767 = vpack.c.bf16 %v1762, %v1761
    %v1768 = vpack.c.bf16 %v1764, %v1763
    %v1769 = vld [vmem:[#allocation13] sm:$0xff]
    %v1770 = vld [vmem:[#allocation13 + $0x8] sm:$0xff]
    %v1771 = vld [vmem:[#allocation13 + $0x10] sm:$0xff]
    %v1772 = vld [vmem:[#allocation13 + $0x18] sm:$0xff]
    %v1773 = vld [vmem:[#allocation13 + $0x20] sm:$0xff]
    %v1774 = vld [vmem:[#allocation13 + $0x28] sm:$0xff]
    %v1775 = vld [vmem:[#allocation13 + $0x30] sm:$0xff]
    %v1776 = vld [vmem:[#allocation13 + $0x38] sm:$0xff]
    %v1777 = vld [vmem:[#allocation13 + $0x40] sm:$0xff]
    %v1778 = vld [vmem:[#allocation13 + $0x48] sm:$0xff]
    %v1779 = vld [vmem:[#allocation13 + $0x50] sm:$0xff]
    %v1780 = vld [vmem:[#allocation13 + $0x58] sm:$0xff]
    %v1781 = vld [vmem:[#allocation13 + $0x60] sm:$0xff]
    %v1782 = vld [vmem:[#allocation13 + $0x68] sm:$0xff]
    %v1783 = vld [vmem:[#allocation13 + $0x70] sm:$0xff]
    %v1784 = vld [vmem:[#allocation13 + $0x78] sm:$0xff]
    %v1785 = vld [vmem:[#allocation18] sm:$0xf]
    %v1787 = vlaneseq
    %v1788 = vshrl.u32 %v1787, 7
    %v1789 = vsub.s32 0, %v1788
    %v1790 = vrot.slane %v1785, %v1789
    %v1791 = vlaneseq
    %v1792 = vshrl.u32 %v1791, 7
    %v1793 = vsub.s32 1, %v1792
    %v1794 = vrot.slane %v1785, %v1793
    %v1795 = vlaneseq
    %v1796 = vshrl.u32 %v1795, 7
    %v1797 = vsub.s32 2, %v1796
    %v1798 = vrot.slane %v1785, %v1797
    %v1799 = vlaneseq
    %v1800 = vshrl.u32 %v1799, 7
    %v1801 = vsub.s32 3, %v1800
    %v1802 = vrot.slane %v1785, %v1801
    %v1823 = vunpack.c.l.b16 %v1769
    %v1824 = vunpack.c.h.b16 %v1769
    %v1825 = vunpack.c.l.b16 %v1770
    %v1826 = vunpack.c.h.b16 %v1770
    %v1827 = vunpack.c.l.b16 %v1771
    %v1828 = vunpack.c.h.b16 %v1771
    %v1829 = vunpack.c.l.b16 %v1772
    %v1830 = vunpack.c.h.b16 %v1772
    %v1831 = vunpack.c.l.b16 %v1773
    %v1832 = vunpack.c.h.b16 %v1773
    %v1833 = vunpack.c.l.b16 %v1774
    %v1834 = vunpack.c.h.b16 %v1774
    %v1835 = vunpack.c.l.b16 %v1775
    %v1836 = vunpack.c.h.b16 %v1775
    %v1837 = vunpack.c.l.b16 %v1776
    %v1838 = vunpack.c.h.b16 %v1776
    %v1839 = vunpack.c.l.b16 %v1777
    %v1840 = vunpack.c.h.b16 %v1777
    %v1841 = vunpack.c.l.b16 %v1778
    %v1842 = vunpack.c.h.b16 %v1778
    %v1843 = vunpack.c.l.b16 %v1779
    %v1844 = vunpack.c.h.b16 %v1779
    %v1845 = vunpack.c.l.b16 %v1780
    %v1846 = vunpack.c.h.b16 %v1780
    %v1847 = vunpack.c.l.b16 %v1781
    %v1848 = vunpack.c.h.b16 %v1781
    %v1849 = vunpack.c.l.b16 %v1782
    %v1850 = vunpack.c.h.b16 %v1782
    %v1851 = vunpack.c.l.b16 %v1783
    %v1852 = vunpack.c.h.b16 %v1783
    %v1853 = vunpack.c.l.b16 %v1784
    %v1854 = vunpack.c.h.b16 %v1784
    %v1855 = vpack.c.b16 %v1827, %v1823
    %v1856 = vpack.c.b16 %v1828, %v1824
    %v1857 = vpack.c.b16 %v1829, %v1825
    %v1858 = vpack.c.b16 %v1830, %v1826
    %v1859 = vpack.c.b16 %v1835, %v1831
    %v1860 = vpack.c.b16 %v1836, %v1832
    %v1861 = vpack.c.b16 %v1837, %v1833
    %v1862 = vpack.c.b16 %v1838, %v1834
    %v1863 = vpack.c.b16 %v1843, %v1839
    %v1864 = vpack.c.b16 %v1844, %v1840
    %v1865 = vpack.c.b16 %v1845, %v1841
    %v1866 = vpack.c.b16 %v1846, %v1842
    %v1867 = vpack.c.b16 %v1851, %v1847
    %v1868 = vpack.c.b16 %v1852, %v1848
    %v1869 = vpack.c.b16 %v1853, %v1849
    %v1870 = vpack.c.b16 %v1854, %v1850
    %vm1887 = vcmask 523264
    %v1889 = vsel %vm1887, %v1765, 0
    %v1892 = vsel %vm1887, %v1766, 0
    %v1895 = vsel %vm1887, %v1767, 0
    %v1898 = vsel %vm1887, %v1768, 0
    %1900 = vmatprep.subr.bf16.mxu0 %v1856
    %1901 = vmatpush1.bf16.msra.mxu0 %v1855
    %1902 = vmatprep.subr.bf16.mxu0 %v1860
    %1903 = vmatpush1.bf16.msra.mxu0 %v1859
    %1904 = vmatprep.subr.bf16.mxu0 %v1864
    %1905 = vmatpush1.bf16.msra.mxu0 %v1863
    %1906 = vmatprep.subr.bf16.mxu0 %v1868
    %1907 = vmatpush1.bf16.msra.mxu0 %v1867
    %1908 = vmatprep.subr.bf16.mxu0 0
    %1909 = vmatpush1.bf16.msra.mxu0 0
    %1910 = vmatprep.subr.bf16.mxu0 0
    %1911 = vmatpush1.bf16.msra.mxu0 0
    %1912 = vmatprep.subr.bf16.mxu0 0
    %1913 = vmatpush1.bf16.msra.mxu0 0
    %1914 = vmatprep.subr.bf16.mxu0 0
    %1915 = vmatpush1.bf16.msra.mxu0 0
    %1916 = vmatprep.subr.bf16.mxu0 0
    %1917 = vmatpush1.bf16.msra.mxu0 0
    %1918 = vmatprep.subr.bf16.mxu0 0
    %1919 = vmatpush1.bf16.msra.mxu0 0
    %1920 = vmatprep.subr.bf16.mxu0 0
    %1921 = vmatpush1.bf16.msra.mxu0 0
    %1922 = vmatprep.subr.bf16.mxu0 0
    %1923 = vmatpush1.bf16.msra.mxu0 0
    %1924 = vmatprep.subr.bf16.mxu0 0
    %1925 = vmatpush1.bf16.msra.mxu0 0
    %1926 = vmatprep.subr.bf16.mxu0 0
    %1927 = vmatpush1.bf16.msra.mxu0 0
    %1928 = vmatprep.subr.bf16.mxu0 0
    %1929 = vmatpush1.bf16.msra.mxu0 0
    %1930 = vmatprep.subr.bf16.mxu0 0
    %1931 = vmatpush1.bf16.msra.mxu0 0
    %1932 = vmatprep.mubr.bf16.mxu0 0
    %1933 = vmatmul.mubr.bf16.gmra.mrb[0].mxu0 %v1889
    %v1934 = vpop.f32.mrb[0].mxu0
    %v1935 = vadd.f32 %v1790, %v1934
    %v1936 = vpop.f32.mrb[0].mxu0
    %v1937 = vadd.f32 %v1794, %v1936
    %v1938 = vpop.f32.mrb[0].mxu0
    %v1939 = vadd.f32 %v1790, %v1938
    %v1940 = vpop.f32.mrb[0].mxu0
    %v1941 = vadd.f32 %v1794, %v1940
    %1942 = vmatprep.mubr.bf16.mxu0 0
    %1943 = vmatmul.mubr.bf16.gmra.mrb[0].mxu0 %v1892
    %v1944 = vpop.f32.mrb[0].mxu0
    %v1945 = vadd.f32 %v1790, %v1944
    %v1946 = vpop.f32.mrb[0].mxu0
    %v1947 = vadd.f32 %v1794, %v1946
    %v1948 = vpop.f32.mrb[0].mxu0
    %v1949 = vadd.f32 %v1790, %v1948
    %v1950 = vpop.f32.mrb[0].mxu0
    %v1951 = vadd.f32 %v1794, %v1950
    %1952 = vmatprep.mubr.bf16.mxu0 0
    %1953 = vmatmul.mubr.bf16.gmra.mrb[0].mxu0 %v1895
    %v1954 = vpop.f32.mrb[0].mxu0
    %v1955 = vadd.f32 %v1790, %v1954
    %v1956 = vpop.f32.mrb[0].mxu0
    %v1957 = vadd.f32 %v1794, %v1956
    %v1958 = vpop.f32.mrb[0].mxu0
    %v1959 = vadd.f32 %v1790, %v1958
    %v1960 = vpop.f32.mrb[0].mxu0
    %v1961 = vadd.f32 %v1794, %v1960
    %1962 = vmatprep.mubr.bf16.mxu0 0
    %1963 = vmatmul.mubr.bf16.gmra.mrb[0].mxu0 %v1898
    %v1964 = vpop.f32.mrb[0].mxu0
    %v1965 = vadd.f32 %v1790, %v1964
    %v1966 = vpop.f32.mrb[0].mxu0
    %v1967 = vadd.f32 %v1794, %v1966
    %v1968 = vpop.f32.mrb[0].mxu0
    %v1969 = vadd.f32 %v1790, %v1968
    %v1970 = vpop.f32.mrb[0].mxu0
    %v1971 = vadd.f32 %v1794, %v1970
    %1972 = vdwg.mxu0
    %1973 = vmatprep.subr.bf16.mxu0 %v1858
    %1974 = vmatpush1.bf16.msra.mxu0 %v1857
    %1975 = vmatprep.subr.bf16.mxu0 %v1862
    %1976 = vmatpush1.bf16.msra.mxu0 %v1861
    %1977 = vmatprep.subr.bf16.mxu0 %v1866
    %1978 = vmatpush1.bf16.msra.mxu0 %v1865
    %1979 = vmatprep.subr.bf16.mxu0 %v1870
    %1980 = vmatpush1.bf16.msra.mxu0 %v1869
    %1981 = vmatprep.subr.bf16.mxu0 0
    %1982 = vmatpush1.bf16.msra.mxu0 0
    %1983 = vmatprep.subr.bf16.mxu0 0
    %1984 = vmatpush1.bf16.msra.mxu0 0
    %1985 = vmatprep.subr.bf16.mxu0 0
    %1986 = vmatpush1.bf16.msra.mxu0 0
    %1987 = vmatprep.subr.bf16.mxu0 0
    %1988 = vmatpush1.bf16.msra.mxu0 0
    %1989 = vmatprep.subr.bf16.mxu0 0
    %1990 = vmatpush1.bf16.msra.mxu0 0
    %1991 = vmatprep.subr.bf16.mxu0 0
    %1992 = vmatpush1.bf16.msra.mxu0 0
    %1993 = vmatprep.subr.bf16.mxu0 0
    %1994 = vmatpush1.bf16.msra.mxu0 0
    %1995 = vmatprep.subr.bf16.mxu0 0
    %1996 = vmatpush1.bf16.msra.mxu0 0
    %1997 = vmatprep.subr.bf16.mxu0 0
    %1998 = vmatpush1.bf16.msra.mxu0 0
    %1999 = vmatprep.subr.bf16.mxu0 0
    %2000 = vmatpush1.bf16.msra.mxu0 0
    %2001 = vmatprep.subr.bf16.mxu0 0
    %2002 = vmatpush1.bf16.msra.mxu0 0
    %2003 = vmatprep.subr.bf16.mxu0 0
    %2004 = vmatpush1.bf16.msra.mxu0 0
    %2005 = vmatprep.mubr.bf16.mxu0 0
    %2006 = vmatmul.mubr.bf16.gmra.mrb[0].mxu0 %v1889
    %v2007 = vpop.f32.mrb[0].mxu0
    %v2008 = vadd.f32 %v1798, %v2007
    %v2009 = vpop.f32.mrb[0].mxu0
    %v2010 = vadd.f32 %v1802, %v2009
    %v2011 = vpop.f32.mrb[0].mxu0
    %v2012 = vadd.f32 %v1798, %v2011
    %v2013 = vpop.f32.mrb[0].mxu0
    %v2014 = vadd.f32 %v1802, %v2013
    %2015 = vmatprep.mubr.bf16.mxu0 0
    %2016 = vmatmul.mubr.bf16.gmra.mrb[0].mxu0 %v1892
    %v2017 = vpop.f32.mrb[0].mxu0
    %v2018 = vadd.f32 %v1798, %v2017
    %v2019 = vpop.f32.mrb[0].mxu0
    %v2020 = vadd.f32 %v1802, %v2019
    %v2021 = vpop.f32.mrb[0].mxu0
    %v2022 = vadd.f32 %v1798, %v2021
    %v2023 = vpop.f32.mrb[0].mxu0
    %v2024 = vadd.f32 %v1802, %v2023
    %2025 = vmatprep.mubr.bf16.mxu0 0
    %2026 = vmatmul.mubr.bf16.gmra.mrb[0].mxu0 %v1895
    %v2027 = vpop.f32.mrb[0].mxu0
    %v2028 = vadd.f32 %v1798, %v2027
    %v2029 = vpop.f32.mrb[0].mxu0
    %v2030 = vadd.f32 %v1802, %v2029
    %v2031 = vpop.f32.mrb[0].mxu0
    %v2032 = vadd.f32 %v1798, %v2031
    %v2033 = vpop.f32.mrb[0].mxu0
    %v2034 = vadd.f32 %v1802, %v2033
    %2035 = vmatprep.mubr.bf16.mxu0 0
    %2036 = vmatmul.mubr.bf16.gmra.mrb[0].mxu0 %v1898
    %v2037 = vpop.f32.mrb[0].mxu0
    %v2038 = vadd.f32 %v1798, %v2037
    %v2039 = vpop.f32.mrb[0].mxu0
    %v2040 = vadd.f32 %v1802, %v2039
    %v2041 = vpop.f32.mrb[0].mxu0
    %v2042 = vadd.f32 %v1798, %v2041
    %v2043 = vpop.f32.mrb[0].mxu0
    %v2044 = vadd.f32 %v1802, %v2043
    %2045 = vdwg.mxu0
    %v2046 = vld [vmem:[#allocation15] sm:$0xff]
    %v2047 = vld [vmem:[#allocation15 + $0x8] sm:$0xff]
    %v2048 = vld [vmem:[#allocation15 + $0x10] sm:$0xff]
    %v2049 = vld [vmem:[#allocation15 + $0x18] sm:$0xff]
    %v2050 = vld [vmem:[#allocation15 + $0x20] sm:$0xff]
    %v2051 = vld [vmem:[#allocation15 + $0x28] sm:$0xff]
    %v2052 = vld [vmem:[#allocation15 + $0x30] sm:$0xff]
    %v2053 = vld [vmem:[#allocation15 + $0x38] sm:$0xff]
    %v2054 = vld [vmem:[#allocation15 + $0x40] sm:$0xff]
    %v2055 = vld [vmem:[#allocation15 + $0x48] sm:$0xff]
    %v2056 = vld [vmem:[#allocation15 + $0x50] sm:$0xff]
    %v2057 = vld [vmem:[#allocation15 + $0x58] sm:$0xff]
    %v2058 = vld [vmem:[#allocation15 + $0x60] sm:$0xff]
    %v2059 = vld [vmem:[#allocation15 + $0x68] sm:$0xff]
    %v2060 = vld [vmem:[#allocation15 + $0x70] sm:$0xff]
    %v2061 = vld [vmem:[#allocation15 + $0x78] sm:$0xff]
    %v2078 = vunpack.c.l.b16 %v2046
    %v2079 = vunpack.c.h.b16 %v2046
    %v2080 = vunpack.c.l.b16 %v2047
    %v2081 = vunpack.c.h.b16 %v2047
    %v2082 = vunpack.c.l.b16 %v2048
    %v2083 = vunpack.c.h.b16 %v2048
    %v2084 = vunpack.c.l.b16 %v2049
    %v2085 = vunpack.c.h.b16 %v2049
    %v2086 = vunpack.c.l.b16 %v2050
    %v2087 = vunpack.c.h.b16 %v2050
    %v2088 = vunpack.c.l.b16 %v2051
    %v2089 = vunpack.c.h.b16 %v2051
    %v2090 = vunpack.c.l.b16 %v2052
    %v2091 = vunpack.c.h.b16 %v2052
    %v2092 = vunpack.c.l.b16 %v2053
    %v2093 = vunpack.c.h.b16 %v2053
    %v2094 = vunpack.c.l.b16 %v2054
    %v2095 = vunpack.c.h.b16 %v2054
    %v2096 = vunpack.c.l.b16 %v2055
    %v2097 = vunpack.c.h.b16 %v2055
    %v2098 = vunpack.c.l.b16 %v2056
    %v2099 = vunpack.c.h.b16 %v2056
    %v2100 = vunpack.c.l.b16 %v2057
    %v2101 = vunpack.c.h.b16 %v2057
    %v2102 = vunpack.c.l.b16 %v2058
    %v2103 = vunpack.c.h.b16 %v2058
    %v2104 = vunpack.c.l.b16 %v2059
    %v2105 = vunpack.c.h.b16 %v2059
    %v2106 = vunpack.c.l.b16 %v2060
    %v2107 = vunpack.c.h.b16 %v2060
    %v2108 = vunpack.c.l.b16 %v2061
    %v2109 = vunpack.c.h.b16 %v2061
    %v2110 = vpack.c.b16 %v2082, %v2078
    %v2111 = vpack.c.b16 %v2083, %v2079
    %v2112 = vpack.c.b16 %v2084, %v2080
    %v2113 = vpack.c.b16 %v2085, %v2081
    %v2114 = vpack.c.b16 %v2090, %v2086
    %v2115 = vpack.c.b16 %v2091, %v2087
    %v2116 = vpack.c.b16 %v2092, %v2088
    %v2117 = vpack.c.b16 %v2093, %v2089
    %v2118 = vpack.c.b16 %v2098, %v2094
    %v2119 = vpack.c.b16 %v2099, %v2095
    %v2120 = vpack.c.b16 %v2100, %v2096
    %v2121 = vpack.c.b16 %v2101, %v2097
    %v2122 = vpack.c.b16 %v2106, %v2102
    %v2123 = vpack.c.b16 %v2107, %v2103
    %v2124 = vpack.c.b16 %v2108, %v2104
    %v2125 = vpack.c.b16 %v2109, %v2105
    %2142 = vmatprep.subr.bf16.mxu0 %v2111
    %2143 = vmatpush1.bf16.msra.mxu0 %v2110
    %2144 = vmatprep.subr.bf16.mxu0 %v2115
    %2145 = vmatpush1.bf16.msra.mxu0 %v2114
    %2146 = vmatprep.subr.bf16.mxu0 %v2119
    %2147 = vmatpush1.bf16.msra.mxu0 %v2118
    %2148 = vmatprep.subr.bf16.mxu0 %v2123
    %2149 = vmatpush1.bf16.msra.mxu0 %v2122
    %2150 = vmatprep.subr.bf16.mxu0 0
    %2151 = vmatpush1.bf16.msra.mxu0 0
    %2152 = vmatprep.subr.bf16.mxu0 0
    %2153 = vmatpush1.bf16.msra.mxu0 0
    %2154 = vmatprep.subr.bf16.mxu0 0
    %2155 = vmatpush1.bf16.msra.mxu0 0
    %2156 = vmatprep.subr.bf16.mxu0 0
    %2157 = vmatpush1.bf16.msra.mxu0 0
    %2158 = vmatprep.subr.bf16.mxu0 0
    %2159 = vmatpush1.bf16.msra.mxu0 0
    %2160 = vmatprep.subr.bf16.mxu0 0
    %2161 = vmatpush1.bf16.msra.mxu0 0
    %2162 = vmatprep.subr.bf16.mxu0 0
    %2163 = vmatpush1.bf16.msra.mxu0 0
    %2164 = vmatprep.subr.bf16.mxu0 0
    %2165 = vmatpush1.bf16.msra.mxu0 0
    %2166 = vmatprep.subr.bf16.mxu0 0
    %2167 = vmatpush1.bf16.msra.mxu0 0
    %2168 = vmatprep.subr.bf16.mxu0 0
    %2169 = vmatpush1.bf16.msra.mxu0 0
    %2170 = vmatprep.subr.bf16.mxu0 0
    %2171 = vmatpush1.bf16.msra.mxu0 0
    %2172 = vmatprep.subr.bf16.mxu0 0
    %2173 = vmatpush1.bf16.msra.mxu0 0
    %2174 = vmatprep.mubr.bf16.mxu0 0
    %2175 = vmatmul.mubr.bf16.gmra.mrb[0].mxu0 %v1889
    %v2176 = vpop.f32.mrb[0].mxu0
    %v2177 = vadd.f32 0.0, %v2176
    %v2178 = vpop.f32.mrb[0].mxu0
    %v2179 = vadd.f32 0.0, %v2178
    %v2180 = vpop.f32.mrb[0].mxu0
    %v2181 = vadd.f32 0.0, %v2180
    %v2182 = vpop.f32.mrb[0].mxu0
    %v2183 = vadd.f32 0.0, %v2182
    %2184 = vmatprep.mubr.bf16.mxu0 0
    %2185 = vmatmul.mubr.bf16.gmra.mrb[0].mxu0 %v1892
    %v2186 = vpop.f32.mrb[0].mxu0
    %v2187 = vadd.f32 0.0, %v2186
    %v2188 = vpop.f32.mrb[0].mxu0
    %v2189 = vadd.f32 0.0, %v2188
    %v2190 = vpop.f32.mrb[0].mxu0
    %v2191 = vadd.f32 0.0, %v2190
    %v2192 = vpop.f32.mrb[0].mxu0
    %v2193 = vadd.f32 0.0, %v2192
    %2194 = vmatprep.mubr.bf16.mxu0 0
    %2195 = vmatmul.mubr.bf16.gmra.mrb[0].mxu0 %v1895
    %v2196 = vpop.f32.mrb[0].mxu0
    %v2197 = vadd.f32 0.0, %v2196
    %v2198 = vpop.f32.mrb[0].mxu0
    %v2199 = vadd.f32 0.0, %v2198
    %v2200 = vpop.f32.mrb[0].mxu0
    %v2201 = vadd.f32 0.0, %v2200
    %v2202 = vpop.f32.mrb[0].mxu0
    %v2203 = vadd.f32 0.0, %v2202
    %2204 = vmatprep.mubr.bf16.mxu0 0
    %2205 = vmatmul.mubr.bf16.gmra.mrb[0].mxu0 %v1898
    %v2206 = vpop.f32.mrb[0].mxu0
    %v2207 = vadd.f32 0.0, %v2206
    %v2208 = vpop.f32.mrb[0].mxu0
    %v2209 = vadd.f32 0.0, %v2208
    %v2210 = vpop.f32.mrb[0].mxu0
    %v2211 = vadd.f32 0.0, %v2210
    %v2212 = vpop.f32.mrb[0].mxu0
    %v2213 = vadd.f32 0.0, %v2212
    %2214 = vdwg.mxu0
    %2215 = vmatprep.subr.bf16.mxu0 %v2113
    %2216 = vmatpush1.bf16.msra.mxu0 %v2112
    %2217 = vmatprep.subr.bf16.mxu0 %v2117
    %2218 = vmatpush1.bf16.msra.mxu0 %v2116
    %2219 = vmatprep.subr.bf16.mxu0 %v2121
    %2220 = vmatpush1.bf16.msra.mxu0 %v2120
    %2221 = vmatprep.subr.bf16.mxu0 %v2125
    %2222 = vmatpush1.bf16.msra.mxu0 %v2124
    %2223 = vmatprep.subr.bf16.mxu0 0
    %2224 = vmatpush1.bf16.msra.mxu0 0
    %2225 = vmatprep.subr.bf16.mxu0 0
    %2226 = vmatpush1.bf16.msra.mxu0 0
    %2227 = vmatprep.subr.bf16.mxu0 0
    %2228 = vmatpush1.bf16.msra.mxu0 0
    %2229 = vmatprep.subr.bf16.mxu0 0
    %2230 = vmatpush1.bf16.msra.mxu0 0
    %2231 = vmatprep.subr.bf16.mxu0 0
    %2232 = vmatpush1.bf16.msra.mxu0 0
    %2233 = vmatprep.subr.bf16.mxu0 0
    %2234 = vmatpush1.bf16.msra.mxu0 0
    %2235 = vmatprep.subr.bf16.mxu0 0
    %2236 = vmatpush1.bf16.msra.mxu0 0
    %2237 = vmatprep.subr.bf16.mxu0 0
    %2238 = vmatpush1.bf16.msra.mxu0 0
    %2239 = vmatprep.subr.bf16.mxu0 0
    %2240 = vmatpush1.bf16.msra.mxu0 0
    %2241 = vmatprep.subr.bf16.mxu0 0
    %2242 = vmatpush1.bf16.msra.mxu0 0
    %2243 = vmatprep.subr.bf16.mxu0 0
    %2244 = vmatpush1.bf16.msra.mxu0 0
    %2245 = vmatprep.subr.bf16.mxu0 0
    %2246 = vmatpush1.bf16.msra.mxu0 0
    %2247 = vmatprep.mubr.bf16.mxu0 0
    %2248 = vmatmul.mubr.bf16.gmra.mrb[0].mxu0 %v1889
    %v2249 = vpop.f32.mrb[0].mxu0
    %v2250 = vadd.f32 0.0, %v2249
    %v2251 = vpop.f32.mrb[0].mxu0
    %v2252 = vadd.f32 0.0, %v2251
    %v2253 = vpop.f32.mrb[0].mxu0
    %v2254 = vadd.f32 0.0, %v2253
    %v2255 = vpop.f32.mrb[0].mxu0
    %v2256 = vadd.f32 0.0, %v2255
    %2257 = vmatprep.mubr.bf16.mxu0 0
    %2258 = vmatmul.mubr.bf16.gmra.mrb[0].mxu0 %v1892
    %v2259 = vpop.f32.mrb[0].mxu0
    %v2260 = vadd.f32 0.0, %v2259
    %v2261 = vpop.f32.mrb[0].mxu0
    %v2262 = vadd.f32 0.0, %v2261
    %v2263 = vpop.f32.mrb[0].mxu0
    %v2264 = vadd.f32 0.0, %v2263
    %v2265 = vpop.f32.mrb[0].mxu0
    %v2266 = vadd.f32 0.0, %v2265
    %2267 = vmatprep.mubr.bf16.mxu0 0
    %2268 = vmatmul.mubr.bf16.gmra.mrb[0].mxu0 %v1895
    %v2269 = vpop.f32.mrb[0].mxu0
    %v2270 = vadd.f32 0.0, %v2269
    %v2271 = vpop.f32.mrb[0].mxu0
    %v2272 = vadd.f32 0.0, %v2271
    %v2273 = vpop.f32.mrb[0].mxu0
    %v2274 = vadd.f32 0.0, %v2273
    %v2275 = vpop.f32.mrb[0].mxu0
    %v2276 = vadd.f32 0.0, %v2275
    %2277 = vmatprep.mubr.bf16.mxu0 0
    %2278 = vmatmul.mubr.bf16.gmra.mrb[0].mxu0 %v1898
    %v2279 = vpop.f32.mrb[0].mxu0
    %v2280 = vadd.f32 0.0, %v2279
    %v2281 = vpop.f32.mrb[0].mxu0
    %v2282 = vadd.f32 0.0, %v2281
    %v2283 = vpop.f32.mrb[0].mxu0
    %v2284 = vadd.f32 0.0, %v2283
    %v2285 = vpop.f32.mrb[0].mxu0
    %v2286 = vadd.f32 0.0, %v2285
    %2287 = vdwg.mxu0
    %v2288 = vld [vmem:[#allocation16] sm:$0xff]
    %v2289 = vld [vmem:[#allocation16 + $0x8] sm:$0xff]
    %v2290 = vld [vmem:[#allocation16 + $0x10] sm:$0xff]
    %v2291 = vld [vmem:[#allocation16 + $0x18] sm:$0xff]
    %v2292 = vld [vmem:[#allocation16 + $0x20] sm:$0xff]
    %v2293 = vld [vmem:[#allocation16 + $0x28] sm:$0xff]
    %v2294 = vld [vmem:[#allocation16 + $0x30] sm:$0xff]
    %v2295 = vld [vmem:[#allocation16 + $0x38] sm:$0xff]
    %v2296 = vld [vmem:[#allocation16 + $0x40] sm:$0xff]
    %v2297 = vld [vmem:[#allocation16 + $0x48] sm:$0xff]
    %v2298 = vld [vmem:[#allocation16 + $0x50] sm:$0xff]
    %v2299 = vld [vmem:[#allocation16 + $0x58] sm:$0xff]
    %v2300 = vld [vmem:[#allocation16 + $0x60] sm:$0xff]
    %v2301 = vld [vmem:[#allocation16 + $0x68] sm:$0xff]
    %v2302 = vld [vmem:[#allocation16 + $0x70] sm:$0xff]
    %v2303 = vld [vmem:[#allocation16 + $0x78] sm:$0xff]
    %v2304 = vld [vmem:[#allocation16 + $0x80] sm:$0xff]
    %v2305 = vld [vmem:[#allocation16 + $0x88] sm:$0xff]
    %v2306 = vld [vmem:[#allocation16 + $0x90] sm:$0xff]
    %v2307 = vld [vmem:[#allocation16 + $0x98] sm:$0xff]
    %v2308 = vld [vmem:[#allocation16 + $0xa0] sm:$0xff]
    %v2309 = vld [vmem:[#allocation16 + $0xa8] sm:$0xff]
    %v2310 = vld [vmem:[#allocation16 + $0xb0] sm:$0xff]
    %v2311 = vld [vmem:[#allocation16 + $0xb8] sm:$0xff]
    %v2312 = vld [vmem:[#allocation16 + $0xc0] sm:$0xff]
    %v2313 = vld [vmem:[#allocation16 + $0xc8] sm:$0xff]
    %v2314 = vld [vmem:[#allocation16 + $0xd0] sm:$0xff]
    %v2315 = vld [vmem:[#allocation16 + $0xd8] sm:$0xff]
    %v2316 = vld [vmem:[#allocation16 + $0xe0] sm:$0xff]
    %v2317 = vld [vmem:[#allocation16 + $0xe8] sm:$0xff]
    %v2318 = vld [vmem:[#allocation16 + $0xf0] sm:$0xff]
    %v2319 = vld [vmem:[#allocation16 + $0xf8] sm:$0xff]
    %v2320 = vadd.f32 %v1935, %v2211
    %v2321 = vadd.f32 %v1937, %v2213
    %v2322 = vadd.f32 %v2008, %v2284
    %v2323 = vadd.f32 %v2010, %v2286
    %v2356 = vunpack.c.l.b16 %v2288
    %v2357 = vunpack.c.h.b16 %v2288
    %v2358 = vunpack.c.l.b16 %v2289
    %v2359 = vunpack.c.h.b16 %v2289
    %v2360 = vunpack.c.l.b16 %v2290
    %v2361 = vunpack.c.h.b16 %v2290
    %v2362 = vunpack.c.l.b16 %v2291
    %v2363 = vunpack.c.h.b16 %v2291
    %v2364 = vunpack.c.l.b16 %v2292
    %v2365 = vunpack.c.h.b16 %v2292
    %v2366 = vunpack.c.l.b16 %v2293
    %v2367 = vunpack.c.h.b16 %v2293
    %v2368 = vunpack.c.l.b16 %v2294
    %v2369 = vunpack.c.h.b16 %v2294
    %v2370 = vunpack.c.l.b16 %v2295
    %v2371 = vunpack.c.h.b16 %v2295
    %v2372 = vunpack.c.l.b16 %v2296
    %v2373 = vunpack.c.h.b16 %v2296
    %v2374 = vunpack.c.l.b16 %v2297
    %v2375 = vunpack.c.h.b16 %v2297
    %v2376 = vunpack.c.l.b16 %v2298
    %v2377 = vunpack.c.h.b16 %v2298
    %v2378 = vunpack.c.l.b16 %v2299
    %v2379 = vunpack.c.h.b16 %v2299
    %v2380 = vunpack.c.l.b16 %v2300
    %v2381 = vunpack.c.h.b16 %v2300
    %v2382 = vunpack.c.l.b16 %v2301
    %v2383 = vunpack.c.h.b16 %v2301
    %v2384 = vunpack.c.l.b16 %v2302
    %v2385 = vunpack.c.h.b16 %v2302
    %v2386 = vunpack.c.l.b16 %v2303
    %v2387 = vunpack.c.h.b16 %v2303
    %v2388 = vunpack.c.l.b16 %v2304
    %v2389 = vunpack.c.h.b16 %v2304
    %v2390 = vunpack.c.l.b16 %v2305
    %v2391 = vunpack.c.h.b16 %v2305
    %v2392 = vunpack.c.l.b16 %v2306
    %v2393 = vunpack.c.h.b16 %v2306
    %v2394 = vunpack.c.l.b16 %v2307
    %v2395 = vunpack.c.h.b16 %v2307
    %v2396 = vunpack.c.l.b16 %v2308
    %v2397 = vunpack.c.h.b16 %v2308
    %v2398 = vunpack.c.l.b16 %v2309
    %v2399 = vunpack.c.h.b16 %v2309
    %v2400 = vunpack.c.l.b16 %v2310
    %v2401 = vunpack.c.h.b16 %v2310
    %v2402 = vunpack.c.l.b16 %v2311
    %v2403 = vunpack.c.h.b16 %v2311
    %v2404 = vunpack.c.l.b16 %v2312
    %v2405 = vunpack.c.h.b16 %v2312
    %v2406 = vunpack.c.l.b16 %v2313
    %v2407 = vunpack.c.h.b16 %v2313
    %v2408 = vunpack.c.l.b16 %v2314
    %v2409 = vunpack.c.h.b16 %v2314
    %v2410 = vunpack.c.l.b16 %v2315
    %v2411 = vunpack.c.h.b16 %v2315
    %v2412 = vunpack.c.l.b16 %v2316
    %v2413 = vunpack.c.h.b16 %v2316
    %v2414 = vunpack.c.l.b16 %v2317
    %v2415 = vunpack.c.h.b16 %v2317
    %v2416 = vunpack.c.l.b16 %v2318
    %v2417 = vunpack.c.h.b16 %v2318
    %v2418 = vunpack.c.l.b16 %v2319
    %v2419 = vunpack.c.h.b16 %v2319
    %v2420 = vpack.c.b16 %v2360, %v2356
    %v2421 = vpack.c.b16 %v2361, %v2357
    %v2422 = vpack.c.b16 %v2362, %v2358
    %v2423 = vpack.c.b16 %v2363, %v2359
    %v2424 = vpack.c.b16 %v2368, %v2364
    %v2425 = vpack.c.b16 %v2369, %v2365
    %v2426 = vpack.c.b16 %v2370, %v2366
    %v2427 = vpack.c.b16 %v2371, %v2367
    %v2428 = vpack.c.b16 %v2376, %v2372
    %v2429 = vpack.c.b16 %v2377, %v2373
    %v2430 = vpack.c.b16 %v2378, %v2374
    %v2431 = vpack.c.b16 %v2379, %v2375
    %v2432 = vpack.c.b16 %v2384, %v2380
    %v2433 = vpack.c.b16 %v2385, %v2381
    %v2434 = vpack.c.b16 %v2386, %v2382
    %v2435 = vpack.c.b16 %v2387, %v2383
    %v2436 = vpack.c.b16 %v2392, %v2388
    %v2437 = vpack.c.b16 %v2393, %v2389
    %v2438 = vpack.c.b16 %v2394, %v2390
    %v2439 = vpack.c.b16 %v2395, %v2391
    %v2440 = vpack.c.b16 %v2400, %v2396
    %v2441 = vpack.c.b16 %v2401, %v2397
    %v2442 = vpack.c.b16 %v2402, %v2398
    %v2443 = vpack.c.b16 %v2403, %v2399
    %v2444 = vpack.c.b16 %v2408, %v2404
    %v2445 = vpack.c.b16 %v2409, %v2405
    %v2446 = vpack.c.b16 %v2410, %v2406
    %v2447 = vpack.c.b16 %v2411, %v2407
    %v2448 = vpack.c.b16 %v2416, %v2412
    %v2449 = vpack.c.b16 %v2417, %v2413
    %v2450 = vpack.c.b16 %v2418, %v2414
    %v2451 = vpack.c.b16 %v2419, %v2415
    %2484 = vmatprep.subr.bf16.mxu0 %v2421
    %2485 = vmatpush1.bf16.msra.mxu0 %v2420
    %2486 = vmatprep.subr.bf16.mxu0 %v2425
    %2487 = vmatpush1.bf16.msra.mxu0 %v2424
    %2488 = vmatprep.subr.bf16.mxu0 %v2429
    %2489 = vmatpush1.bf16.msra.mxu0 %v2428
    %2490 = vmatprep.subr.bf16.mxu0 %v2433
    %2491 = vmatpush1.bf16.msra.mxu0 %v2432
    %2492 = vmatprep.subr.bf16.mxu0 %v2437
    %2493 = vmatpush1.bf16.msra.mxu0 %v2436
    %2494 = vmatprep.subr.bf16.mxu0 %v2441
    %2495 = vmatpush1.bf16.msra.mxu0 %v2440
    %2496 = vmatprep.subr.bf16.mxu0 %v2445
    %2497 = vmatpush1.bf16.msra.mxu0 %v2444
    %2498 = vmatprep.subr.bf16.mxu0 %v2449
    %2499 = vmatpush1.bf16.msra.mxu0 %v2448
    %2500 = vmatprep.subr.bf16.mxu0 0
    %2501 = vmatpush1.bf16.msra.mxu0 0
    %2502 = vmatprep.subr.bf16.mxu0 0
    %2503 = vmatpush1.bf16.msra.mxu0 0
    %2504 = vmatprep.subr.bf16.mxu0 0
    %2505 = vmatpush1.bf16.msra.mxu0 0
    %2506 = vmatprep.subr.bf16.mxu0 0
    %2507 = vmatpush1.bf16.msra.mxu0 0
    %2508 = vmatprep.subr.bf16.mxu0 0
    %2509 = vmatpush1.bf16.msra.mxu0 0
    %2510 = vmatprep.subr.bf16.mxu0 0
    %2511 = vmatpush1.bf16.msra.mxu0 0
    %2512 = vmatprep.subr.bf16.mxu0 0
    %2513 = vmatpush1.bf16.msra.mxu0 0
    %2514 = vmatprep.subr.bf16.mxu0 0
    %2515 = vmatpush1.bf16.msra.mxu0 0
    %2516 = vmatprep.mubr.bf16.mxu0 0
    %2517 = vmatmul.mubr.bf16.gmra.mrb[0].mxu0 0
    %v2518 = vpop.f32.mrb[0].mxu0
    %v2519 = vadd.f32 0.0, %v2518
    %v2520 = vpop.f32.mrb[0].mxu0
    %v2521 = vadd.f32 0.0, %v2520
    %v2522 = vpop.f32.mrb[0].mxu0
    %v2523 = vpop.f32.mrb[0].mxu0
    %2524 = vdwg.mxu0
    %2525 = vmatprep.subr.bf16.mxu0 %v2423
    %2526 = vmatpush1.bf16.msra.mxu0 %v2422
    %2527 = vmatprep.subr.bf16.mxu0 %v2427
    %2528 = vmatpush1.bf16.msra.mxu0 %v2426
    %2529 = vmatprep.subr.bf16.mxu0 %v2431
    %2530 = vmatpush1.bf16.msra.mxu0 %v2430
    %2531 = vmatprep.subr.bf16.mxu0 %v2435
    %2532 = vmatpush1.bf16.msra.mxu0 %v2434
    %2533 = vmatprep.subr.bf16.mxu0 %v2439
    %2534 = vmatpush1.bf16.msra.mxu0 %v2438
    %2535 = vmatprep.subr.bf16.mxu0 %v2443
    %2536 = vmatpush1.bf16.msra.mxu0 %v2442
    %2537 = vmatprep.subr.bf16.mxu0 %v2447
    %2538 = vmatpush1.bf16.msra.mxu0 %v2446
    %2539 = vmatprep.subr.bf16.mxu0 %v2451
    %2540 = vmatpush1.bf16.msra.mxu0 %v2450
    %2541 = vmatprep.subr.bf16.mxu0 0
    %2542 = vmatpush1.bf16.msra.mxu0 0
    %2543 = vmatprep.subr.bf16.mxu0 0
    %2544 = vmatpush1.bf16.msra.mxu0 0
    %2545 = vmatprep.subr.bf16.mxu0 0
    %2546 = vmatpush1.bf16.msra.mxu0 0
    %2547 = vmatprep.subr.bf16.mxu0 0
    %2548 = vmatpush1.bf16.msra.mxu0 0
    %2549 = vmatprep.subr.bf16.mxu0 0
    %2550 = vmatpush1.bf16.msra.mxu0 0
    %2551 = vmatprep.subr.bf16.mxu0 0
    %2552 = vmatpush1.bf16.msra.mxu0 0
    %2553 = vmatprep.subr.bf16.mxu0 0
    %2554 = vmatpush1.bf16.msra.mxu0 0
    %2555 = vmatprep.subr.bf16.mxu0 0
    %2556 = vmatpush1.bf16.msra.mxu0 0
    %2557 = vmatprep.mubr.bf16.mxu0 0
    %2558 = vmatmul.mubr.bf16.gmra.mrb[0].mxu0 0
    %v2559 = vpop.f32.mrb[0].mxu0
    %v2560 = vadd.f32 0.0, %v2559
    %v2561 = vpop.f32.mrb[0].mxu0
    %v2562 = vadd.f32 0.0, %v2561
    %v2563 = vpop.f32.mrb[0].mxu0
    %v2564 = vpop.f32.mrb[0].mxu0
    %2565 = vdwg.mxu0
    %v2566 = vadd.f32 %v2320, %v2519
    %v2567 = vadd.f32 %v2321, %v2521
    %v2568 = vadd.f32 %v2322, %v2560
    %v2569 = vadd.f32 %v2323, %v2562
    %v2570 = vxor.u32 %v2566, 2147483648
    %v2571 = vmul.f32 %v2570, 1.442695
    %v2572 = vpow.pop %v2571
    %v2573 = vadd.f32 %v2572, 1.0
    %v2574 = vrcp.pop %v2573
    %v2575 = vmul.f32 1.0, %v2574
    %v2576 = vxor.u32 %v2567, 2147483648
    %v2577 = vmul.f32 %v2576, 1.442695
    %v2578 = vpow.pop %v2577
    %v2579 = vadd.f32 %v2578, 1.0
    %v2580 = vrcp.pop %v2579
    %v2581 = vmul.f32 1.0, %v2580
    %v2582 = vtanh.pop %v2568
    %v2583 = vxor.u32 %v2569, 2147483648
    %v2584 = vmul.f32 %v2583, 1.442695
    %v2585 = vpow.pop %v2584
    %v2586 = vadd.f32 %v2585, 1.0
    %v2587 = vrcp.pop %v2586
    %v2588 = vmul.f32 1.0, %v2587
    %v2589 = vmul.f32 %v2581, 0.0
    %v2590 = vmul.f32 %v2575, %v2582
    %v2591 = vadd.f32 %v2589, %v2590
    %v2592 = vtanh.pop %v2591
    %v2593 = vmul.f32 %v2588, %v2592
    %2594 = vst.msk [vmem:[#allocation3] sm:$0xff] %vm276, %v2593
    %2595 = vst.msk [vmem:[#allocation3 + $0x38] sm:$0xff] %vm936, %v2593
    %v2596 = vadd.f32 %v1939, %v2207
    %v2597 = vadd.f32 %v1941, %v2209
    %v2598 = vadd.f32 %v2012, %v2280
    %v2599 = vadd.f32 %v2014, %v2282
    %v2600 = vpack.c.bf16 %v2593, %v2593
    %2601 = vmatprep.subr.bf16.mxu0 %v2421
    %2602 = vmatpush1.bf16.msra.mxu0 %v2420
    %2603 = vmatprep.subr.bf16.mxu0 %v2425
    %2604 = vmatpush1.bf16.msra.mxu0 %v2424
    %2605 = vmatprep.subr.bf16.mxu0 %v2429
    %2606 = vmatpush1.bf16.msra.mxu0 %v2428
    %2607 = vmatprep.subr.bf16.mxu0 %v2433
    %2608 = vmatpush1.bf16.msra.mxu0 %v2432
    %2609 = vmatprep.subr.bf16.mxu0 %v2437
    %2610 = vmatpush1.bf16.msra.mxu0 %v2436
    %2611 = vmatprep.subr.bf16.mxu0 %v2441
    %2612 = vmatpush1.bf16.msra.mxu0 %v2440
    %2613 = vmatprep.subr.bf16.mxu0 %v2445
    %2614 = vmatpush1.bf16.msra.mxu0 %v2444
    %2615 = vmatprep.subr.bf16.mxu0 %v2449
    %2616 = vmatpush1.bf16.msra.mxu0 %v2448
    %2617 = vmatprep.subr.bf16.mxu0 0
    %2618 = vmatpush1.bf16.msra.mxu0 0
    %2619 = vmatprep.subr.bf16.mxu0 0
    %2620 = vmatpush1.bf16.msra.mxu0 0
    %2621 = vmatprep.subr.bf16.mxu0 0
    %2622 = vmatpush1.bf16.msra.mxu0 0
    %2623 = vmatprep.subr.bf16.mxu0 0
    %2624 = vmatpush1.bf16.msra.mxu0 0
    %2625 = vmatprep.subr.bf16.mxu0 0
    %2626 = vmatpush1.bf16.msra.mxu0 0
    %2627 = vmatprep.subr.bf16.mxu0 0
    %2628 = vmatpush1.bf16.msra.mxu0 0
    %2629 = vmatprep.subr.bf16.mxu0 0
    %2630 = vmatpush1.bf16.msra.mxu0 0
    %2631 = vmatprep.subr.bf16.mxu0 0
    %2632 = vmatpush1.bf16.msra.mxu0 0
    %2633 = vmatprep.mubr.bf16.mxu0 0
    %2634 = vmatmul.mubr.bf16.gmra.mrb[0].mxu0 %v2600
    %v2635 = vpop.f32.mrb[0].mxu0
    %v2636 = vadd.f32 0.0, %v2635
    %v2637 = vpop.f32.mrb[0].mxu0
    %v2638 = vadd.f32 0.0, %v2637
    %v2639 = vpop.f32.mrb[0].mxu0
    %v2640 = vpop.f32.mrb[0].mxu0
    %2641 = vdwg.mxu0
    %2642 = vmatprep.subr.bf16.mxu0 %v2423
    %2643 = vmatpush1.bf16.msra.mxu0 %v2422
    %2644 = vmatprep.subr.bf16.mxu0 %v2427
    %2645 = vmatpush1.bf16.msra.mxu0 %v2426
    %2646 = vmatprep.subr.bf16.mxu0 %v2431
    %2647 = vmatpush1.bf16.msra.mxu0 %v2430
    %2648 = vmatprep.subr.bf16.mxu0 %v2435
    %2649 = vmatpush1.bf16.msra.mxu0 %v2434
    %2650 = vmatprep.subr.bf16.mxu0 %v2439
    %2651 = vmatpush1.bf16.msra.mxu0 %v2438
    %2652 = vmatprep.subr.bf16.mxu0 %v2443
    %2653 = vmatpush1.bf16.msra.mxu0 %v2442
    %2654 = vmatprep.subr.bf16.mxu0 %v2447
    %2655 = vmatpush1.bf16.msra.mxu0 %v2446
    %2656 = vmatprep.subr.bf16.mxu0 %v2451
    %2657 = vmatpush1.bf16.msra.mxu0 %v2450
    %2658 = vmatprep.subr.bf16.mxu0 0
    %2659 = vmatpush1.bf16.msra.mxu0 0
    %2660 = vmatprep.subr.bf16.mxu0 0
    %2661 = vmatpush1.bf16.msra.mxu0 0
    %2662 = vmatprep.subr.bf16.mxu0 0
    %2663 = vmatpush1.bf16.msra.mxu0 0
    %2664 = vmatprep.subr.bf16.mxu0 0
    %2665 = vmatpush1.bf16.msra.mxu0 0
    %2666 = vmatprep.subr.bf16.mxu0 0
    %2667 = vmatpush1.bf16.msra.mxu0 0
    %2668 = vmatprep.subr.bf16.mxu0 0
    %2669 = vmatpush1.bf16.msra.mxu0 0
    %2670 = vmatprep.subr.bf16.mxu0 0
    %2671 = vmatpush1.bf16.msra.mxu0 0
    %2672 = vmatprep.subr.bf16.mxu0 0
    %2673 = vmatpush1.bf16.msra.mxu0 0
    %2674 = vmatprep.mubr.bf16.mxu0 0
    %2675 = vmatmul.mubr.bf16.gmra.mrb[0].mxu0 %v2600
    %v2676 = vpop.f32.mrb[0].mxu0
    %v2677 = vadd.f32 0.0, %v2676
    %v2678 = vpop.f32.mrb[0].mxu0
    %v2679 = vadd.f32 0.0, %v2678
    %v2680 = vpop.f32.mrb[0].mxu0
    %v2681 = vpop.f32.mrb[0].mxu0
    %2682 = vdwg.mxu0
    %v2683 = vadd.f32 %v2596, %v2636
    %v2684 = vadd.f32 %v2597, %v2638
    %v2685 = vadd.f32 %v2598, %v2677
    %v2686 = vadd.f32 %v2599, %v2679
    %v2687 = vxor.u32 %v2683, 2147483648
    %v2688 = vmul.f32 %v2687, 1.442695
    %v2689 = vpow.pop %v2688
    %v2690 = vadd.f32 %v2689, 1.0
    %v2691 = vrcp.pop %v2690
    %v2692 = vmul.f32 1.0, %v2691
    %v2693 = vxor.u32 %v2684, 2147483648
    %v2694 = vmul.f32 %v2693, 1.442695
    %v2695 = vpow.pop %v2694
    %v2696 = vadd.f32 %v2695, 1.0
    %v2697 = vrcp.pop %v2696
    %v2698 = vmul.f32 1.0, %v2697
    %v2699 = vtanh.pop %v2685
    %v2700 = vxor.u32 %v2686, 2147483648
    %v2701 = vmul.f32 %v2700, 1.442695
    %v2702 = vpow.pop %v2701
    %v2703 = vadd.f32 %v2702, 1.0
    %v2704 = vrcp.pop %v2703
    %v2705 = vmul.f32 1.0, %v2704
    %v2706 = vmul.f32 %v2698, %v2591
    %v2707 = vmul.f32 %v2692, %v2699
    %v2708 = vadd.f32 %v2706, %v2707
    %v2709 = vtanh.pop %v2708
    %v2710 = vmul.f32 %v2705, %v2709
    %2711 = vst.msk [vmem:[#allocation3 + $0x8] sm:$0xff] %vm276, %v2710
    %2712 = vst.msk [vmem:[#allocation3 + $0x30] sm:$0xff] %vm936, %v2710
    %v2713 = vadd.f32 %v1945, %v2201
    %v2714 = vadd.f32 %v1947, %v2203
    %v2715 = vadd.f32 %v2018, %v2274
    %v2716 = vadd.f32 %v2020, %v2276
    %v2717 = vpack.c.bf16 %v2710, %v2710
    %2718 = vmatprep.subr.bf16.mxu0 %v2421
    %2719 = vmatpush1.bf16.msra.mxu0 %v2420
    %2720 = vmatprep.subr.bf16.mxu0 %v2425
    %2721 = vmatpush1.bf16.msra.mxu0 %v2424
    %2722 = vmatprep.subr.bf16.mxu0 %v2429
    %2723 = vmatpush1.bf16.msra.mxu0 %v2428
    %2724 = vmatprep.subr.bf16.mxu0 %v2433
    %2725 = vmatpush1.bf16.msra.mxu0 %v2432
    %2726 = vmatprep.subr.bf16.mxu0 %v2437
    %2727 = vmatpush1.bf16.msra.mxu0 %v2436
    %2728 = vmatprep.subr.bf16.mxu0 %v2441
    %2729 = vmatpush1.bf16.msra.mxu0 %v2440
    %2730 = vmatprep.subr.bf16.mxu0 %v2445
    %2731 = vmatpush1.bf16.msra.mxu0 %v2444
    %2732 = vmatprep.subr.bf16.mxu0 %v2449
    %2733 = vmatpush1.bf16.msra.mxu0 %v2448
    %2734 = vmatprep.subr.bf16.mxu0 0
    %2735 = vmatpush1.bf16.msra.mxu0 0
    %2736 = vmatprep.subr.bf16.mxu0 0
    %2737 = vmatpush1.bf16.msra.mxu0 0
    %2738 = vmatprep.subr.bf16.mxu0 0
    %2739 = vmatpush1.bf16.msra.mxu0 0
    %2740 = vmatprep.subr.bf16.mxu0 0
    %2741 = vmatpush1.bf16.msra.mxu0 0
    %2742 = vmatprep.subr.bf16.mxu0 0
    %2743 = vmatpush1.bf16.msra.mxu0 0
    %2744 = vmatprep.subr.bf16.mxu0 0
    %2745 = vmatpush1.bf16.msra.mxu0 0
    %2746 = vmatprep.subr.bf16.mxu0 0
    %2747 = vmatpush1.bf16.msra.mxu0 0
    %2748 = vmatprep.subr.bf16.mxu0 0
    %2749 = vmatpush1.bf16.msra.mxu0 0
    %2750 = vmatprep.mubr.bf16.mxu0 0
    %2751 = vmatmul.mubr.bf16.gmra.mrb[0].mxu0 %v2717
    %v2752 = vpop.f32.mrb[0].mxu0
    %v2753 = vadd.f32 0.0, %v2752
    %v2754 = vpop.f32.mrb[0].mxu0
    %v2755 = vadd.f32 0.0, %v2754
    %v2756 = vpop.f32.mrb[0].mxu0
    %v2757 = vpop.f32.mrb[0].mxu0
    %2758 = vdwg.mxu0
    %2759 = vmatprep.subr.bf16.mxu0 %v2423
    %2760 = vmatpush1.bf16.msra.mxu0 %v2422
    %2761 = vmatprep.subr.bf16.mxu0 %v2427
    %2762 = vmatpush1.bf16.msra.mxu0 %v2426
    %2763 = vmatprep.subr.bf16.mxu0 %v2431
    %2764 = vmatpush1.bf16.msra.mxu0 %v2430
    %2765 = vmatprep.subr.bf16.mxu0 %v2435
    %2766 = vmatpush1.bf16.msra.mxu0 %v2434
    %2767 = vmatprep.subr.bf16.mxu0 %v2439
    %2768 = vmatpush1.bf16.msra.mxu0 %v2438
    %2769 = vmatprep.subr.bf16.mxu0 %v2443
    %2770 = vmatpush1.bf16.msra.mxu0 %v2442
    %2771 = vmatprep.subr.bf16.mxu0 %v2447
    %2772 = vmatpush1.bf16.msra.mxu0 %v2446
    %2773 = vmatprep.subr.bf16.mxu0 %v2451
    %2774 = vmatpush1.bf16.msra.mxu0 %v2450
    %2775 = vmatprep.subr.bf16.mxu0 0
    %2776 = vmatpush1.bf16.msra.mxu0 0
    %2777 = vmatprep.subr.bf16.mxu0 0
    %2778 = vmatpush1.bf16.msra.mxu0 0
    %2779 = vmatprep.subr.bf16.mxu0 0
    %2780 = vmatpush1.bf16.msra.mxu0 0
    %2781 = vmatprep.subr.bf16.mxu0 0
    %2782 = vmatpush1.bf16.msra.mxu0 0
    %2783 = vmatprep.subr.bf16.mxu0 0
    %2784 = vmatpush1.bf16.msra.mxu0 0
    %2785 = vmatprep.subr.bf16.mxu0 0
    %2786 = vmatpush1.bf16.msra.mxu0 0
    %2787 = vmatprep.subr.bf16.mxu0 0
    %2788 = vmatpush1.bf16.msra.mxu0 0
    %2789 = vmatprep.subr.bf16.mxu0 0
    %2790 = vmatpush1.bf16.msra.mxu0 0
    %2791 = vmatprep.mubr.bf16.mxu0 0
    %2792 = vmatmul.mubr.bf16.gmra.mrb[0].mxu0 %v2717
    %v2793 = vpop.f32.mrb[0].mxu0
    %v2794 = vadd.f32 0.0, %v2793
    %v2795 = vpop.f32.mrb[0].mxu0
    %v2796 = vadd.f32 0.0, %v2795
    %v2797 = vpop.f32.mrb[0].mxu0
    %v2798 = vpop.f32.mrb[0].mxu0
    %2799 = vdwg.mxu0
    %v2800 = vadd.f32 %v2713, %v2753
    %v2801 = vadd.f32 %v2714, %v2755
    %v2802 = vadd.f32 %v2715, %v2794
    %v2803 = vadd.f32 %v2716, %v2796
    %v2804 = vxor.u32 %v2800, 2147483648
    %v2805 = vmul.f32 %v2804, 1.442695
    %v2806 = vpow.pop %v2805
    %v2807 = vadd.f32 %v2806, 1.0
    %v2808 = vrcp.pop %v2807
    %v2809 = vmul.f32 1.0, %v2808
    %v2810 = vxor.u32 %v2801, 2147483648
    %v2811 = vmul.f32 %v2810, 1.442695
    %v2812 = vpow.pop %v2811
    %v2813 = vadd.f32 %v2812, 1.0
    %v2814 = vrcp.pop %v2813
    %v2815 = vmul.f32 1.0, %v2814
    %v2816 = vtanh.pop %v2802
    %v2817 = vxor.u32 %v2803, 2147483648
    %v2818 = vmul.f32 %v2817, 1.442695
    %v2819 = vpow.pop %v2818
    %v2820 = vadd.f32 %v2819, 1.0
    %v2821 = vrcp.pop %v2820
    %v2822 = vmul.f32 1.0, %v2821
    %v2823 = vmul.f32 %v2815, %v2708
    %v2824 = vmul.f32 %v2809, %v2816
    %v2825 = vadd.f32 %v2823, %v2824
    %v2826 = vtanh.pop %v2825
    %v2827 = vmul.f32 %v2822, %v2826
    %2828 = vst.msk [vmem:[#allocation3 + $0x10] sm:$0xff] %vm276, %v2827
    %2829 = vst.msk [vmem:[#allocation3 + $0x28] sm:$0xff] %vm936, %v2827
    %v2830 = vadd.f32 %v1949, %v2197
    %v2831 = vadd.f32 %v1951, %v2199
    %v2832 = vadd.f32 %v2022, %v2270
    %v2833 = vadd.f32 %v2024, %v2272
    %v2834 = vpack.c.bf16 %v2827, %v2827
    %2835 = vmatprep.subr.bf16.mxu0 %v2421
    %2836 = vmatpush1.bf16.msra.mxu0 %v2420
    %2837 = vmatprep.subr.bf16.mxu0 %v2425
    %2838 = vmatpush1.bf16.msra.mxu0 %v2424
    %2839 = vmatprep.subr.bf16.mxu0 %v2429
    %2840 = vmatpush1.bf16.msra.mxu0 %v2428
    %2841 = vmatprep.subr.bf16.mxu0 %v2433
    %2842 = vmatpush1.bf16.msra.mxu0 %v2432
    %2843 = vmatprep.subr.bf16.mxu0 %v2437
    %2844 = vmatpush1.bf16.msra.mxu0 %v2436
    %2845 = vmatprep.subr.bf16.mxu0 %v2441
    %2846 = vmatpush1.bf16.msra.mxu0 %v2440
    %2847 = vmatprep.subr.bf16.mxu0 %v2445
    %2848 = vmatpush1.bf16.msra.mxu0 %v2444
    %2849 = vmatprep.subr.bf16.mxu0 %v2449
    %2850 = vmatpush1.bf16.msra.mxu0 %v2448
    %2851 = vmatprep.subr.bf16.mxu0 0
    %2852 = vmatpush1.bf16.msra.mxu0 0
    %2853 = vmatprep.subr.bf16.mxu0 0
    %2854 = vmatpush1.bf16.msra.mxu0 0
    %2855 = vmatprep.subr.bf16.mxu0 0
    %2856 = vmatpush1.bf16.msra.mxu0 0
    %2857 = vmatprep.subr.bf16.mxu0 0
    %2858 = vmatpush1.bf16.msra.mxu0 0
    %2859 = vmatprep.subr.bf16.mxu0 0
    %2860 = vmatpush1.bf16.msra.mxu0 0
    %2861 = vmatprep.subr.bf16.mxu0 0
    %2862 = vmatpush1.bf16.msra.mxu0 0
    %2863 = vmatprep.subr.bf16.mxu0 0
    %2864 = vmatpush1.bf16.msra.mxu0 0
    %2865 = vmatprep.subr.bf16.mxu0 0
    %2866 = vmatpush1.bf16.msra.mxu0 0
    %2867 = vmatprep.mubr.bf16.mxu0 0
    %2868 = vmatmul.mubr.bf16.gmra.mrb[0].mxu0 %v2834
    %v2869 = vpop.f32.mrb[0].mxu0
    %v2870 = vadd.f32 0.0, %v2869
    %v2871 = vpop.f32.mrb[0].mxu0
    %v2872 = vadd.f32 0.0, %v2871
    %v2873 = vpop.f32.mrb[0].mxu0
    %v2874 = vpop.f32.mrb[0].mxu0
    %2875 = vdwg.mxu0
    %2876 = vmatprep.subr.bf16.mxu0 %v2423
    %2877 = vmatpush1.bf16.msra.mxu0 %v2422
    %2878 = vmatprep.subr.bf16.mxu0 %v2427
    %2879 = vmatpush1.bf16.msra.mxu0 %v2426
    %2880 = vmatprep.subr.bf16.mxu0 %v2431
    %2881 = vmatpush1.bf16.msra.mxu0 %v2430
    %2882 = vmatprep.subr.bf16.mxu0 %v2435
    %2883 = vmatpush1.bf16.msra.mxu0 %v2434
    %2884 = vmatprep.subr.bf16.mxu0 %v2439
    %2885 = vmatpush1.bf16.msra.mxu0 %v2438
    %2886 = vmatprep.subr.bf16.mxu0 %v2443
    %2887 = vmatpush1.bf16.msra.mxu0 %v2442
    %2888 = vmatprep.subr.bf16.mxu0 %v2447
    %2889 = vmatpush1.bf16.msra.mxu0 %v2446
    %2890 = vmatprep.subr.bf16.mxu0 %v2451
    %2891 = vmatpush1.bf16.msra.mxu0 %v2450
    %2892 = vmatprep.subr.bf16.mxu0 0
    %2893 = vmatpush1.bf16.msra.mxu0 0
    %2894 = vmatprep.subr.bf16.mxu0 0
    %2895 = vmatpush1.bf16.msra.mxu0 0
    %2896 = vmatprep.subr.bf16.mxu0 0
    %2897 = vmatpush1.bf16.msra.mxu0 0
    %2898 = vmatprep.subr.bf16.mxu0 0
    %2899 = vmatpush1.bf16.msra.mxu0 0
    %2900 = vmatprep.subr.bf16.mxu0 0
    %2901 = vmatpush1.bf16.msra.mxu0 0
    %2902 = vmatprep.subr.bf16.mxu0 0
    %2903 = vmatpush1.bf16.msra.mxu0 0
    %2904 = vmatprep.subr.bf16.mxu0 0
    %2905 = vmatpush1.bf16.msra.mxu0 0
    %2906 = vmatprep.subr.bf16.mxu0 0
    %2907 = vmatpush1.bf16.msra.mxu0 0
    %2908 = vmatprep.mubr.bf16.mxu0 0
    %2909 = vmatmul.mubr.bf16.gmra.mrb[0].mxu0 %v2834
    %v2910 = vpop.f32.mrb[0].mxu0
    %v2911 = vadd.f32 0.0, %v2910
    %v2912 = vpop.f32.mrb[0].mxu0
    %v2913 = vadd.f32 0.0, %v2912
    %v2914 = vpop.f32.mrb[0].mxu0
    %v2915 = vpop.f32.mrb[0].mxu0
    %2916 = vdwg.mxu0
    %v2917 = vadd.f32 %v2830, %v2870
    %v2918 = vadd.f32 %v2831, %v2872
    %v2919 = vadd.f32 %v2832, %v2911
    %v2920 = vadd.f32 %v2833, %v2913
    %v2921 = vxor.u32 %v2917, 2147483648
    %v2922 = vmul.f32 %v2921, 1.442695
    %v2923 = vpow.pop %v2922
    %v2924 = vadd.f32 %v2923, 1.0
    %v2925 = vrcp.pop %v2924
    %v2926 = vmul.f32 1.0, %v2925
    %v2927 = vxor.u32 %v2918, 2147483648
    %v2928 = vmul.f32 %v2927, 1.442695
    %v2929 = vpow.pop %v2928
    %v2930 = vadd.f32 %v2929, 1.0
    %v2931 = vrcp.pop %v2930
    %v2932 = vmul.f32 1.0, %v2931
    %v2933 = vtanh.pop %v2919
    %v2934 = vxor.u32 %v2920, 2147483648
    %v2935 = vmul.f32 %v2934, 1.442695
    %v2936 = vpow.pop %v2935
    %v2937 = vadd.f32 %v2936, 1.0
    %v2938 = vrcp.pop %v2937
    %v2939 = vmul.f32 1.0, %v2938
    %v2940 = vmul.f32 %v2932, %v2825
    %v2941 = vmul.f32 %v2926, %v2933
    %v2942 = vadd.f32 %v2940, %v2941
    %v2943 = vtanh.pop %v2942
    %v2944 = vmul.f32 %v2939, %v2943
    %2945 = vst.msk [vmem:[#allocation3 + $0x18] sm:$0xff] %vm276, %v2944
    %2946 = vst.msk [vmem:[#allocation3 + $0x20] sm:$0xff] %vm936, %v2944
    %v2947 = vadd.f32 %v1955, %v2191
    %v2948 = vadd.f32 %v1957, %v2193
    %v2949 = vadd.f32 %v2028, %v2264
    %v2950 = vadd.f32 %v2030, %v2266
    %v2951 = vpack.c.bf16 %v2944, %v2944
    %2952 = vmatprep.subr.bf16.mxu0 %v2421
    %2953 = vmatpush1.bf16.msra.mxu0 %v2420
    %2954 = vmatprep.subr.bf16.mxu0 %v2425
    %2955 = vmatpush1.bf16.msra.mxu0 %v2424
    %2956 = vmatprep.subr.bf16.mxu0 %v2429
    %2957 = vmatpush1.bf16.msra.mxu0 %v2428
    %2958 = vmatprep.subr.bf16.mxu0 %v2433
    %2959 = vmatpush1.bf16.msra.mxu0 %v2432
    %2960 = vmatprep.subr.bf16.mxu0 %v2437
    %2961 = vmatpush1.bf16.msra.mxu0 %v2436
    %2962 = vmatprep.subr.bf16.mxu0 %v2441
    %2963 = vmatpush1.bf16.msra.mxu0 %v2440
    %2964 = vmatprep.subr.bf16.mxu0 %v2445
    %2965 = vmatpush1.bf16.msra.mxu0 %v2444
    %2966 = vmatprep.subr.bf16.mxu0 %v2449
    %2967 = vmatpush1.bf16.msra.mxu0 %v2448
    %2968 = vmatprep.subr.bf16.mxu0 0
    %2969 = vmatpush1.bf16.msra.mxu0 0
    %2970 = vmatprep.subr.bf16.mxu0 0
    %2971 = vmatpush1.bf16.msra.mxu0 0
    %2972 = vmatprep.subr.bf16.mxu0 0
    %2973 = vmatpush1.bf16.msra.mxu0 0
    %2974 = vmatprep.subr.bf16.mxu0 0
    %2975 = vmatpush1.bf16.msra.mxu0 0
    %2976 = vmatprep.subr.bf16.mxu0 0
    %2977 = vmatpush1.bf16.msra.mxu0 0
    %2978 = vmatprep.subr.bf16.mxu0 0
    %2979 = vmatpush1.bf16.msra.mxu0 0
    %2980 = vmatprep.subr.bf16.mxu0 0
    %2981 = vmatpush1.bf16.msra.mxu0 0
    %2982 = vmatprep.subr.bf16.mxu0 0
    %2983 = vmatpush1.bf16.msra.mxu0 0
    %2984 = vmatprep.mubr.bf16.mxu0 0
    %2985 = vmatmul.mubr.bf16.gmra.mrb[0].mxu0 %v2951
    %v2986 = vpop.f32.mrb[0].mxu0
    %v2987 = vadd.f32 0.0, %v2986
    %v2988 = vpop.f32.mrb[0].mxu0
    %v2989 = vadd.f32 0.0, %v2988
    %v2990 = vpop.f32.mrb[0].mxu0
    %v2991 = vpop.f32.mrb[0].mxu0
    %2992 = vdwg.mxu0
    %2993 = vmatprep.subr.bf16.mxu0 %v2423
    %2994 = vmatpush1.bf16.msra.mxu0 %v2422
    %2995 = vmatprep.subr.bf16.mxu0 %v2427
    %2996 = vmatpush1.bf16.msra.mxu0 %v2426
    %2997 = vmatprep.subr.bf16.mxu0 %v2431
    %2998 = vmatpush1.bf16.msra.mxu0 %v2430
    %2999 = vmatprep.subr.bf16.mxu0 %v2435
    %3000 = vmatpush1.bf16.msra.mxu0 %v2434
    %3001 = vmatprep.subr.bf16.mxu0 %v2439
    %3002 = vmatpush1.bf16.msra.mxu0 %v2438
    %3003 = vmatprep.subr.bf16.mxu0 %v2443
    %3004 = vmatpush1.bf16.msra.mxu0 %v2442
    %3005 = vmatprep.subr.bf16.mxu0 %v2447
    %3006 = vmatpush1.bf16.msra.mxu0 %v2446
    %3007 = vmatprep.subr.bf16.mxu0 %v2451
    %3008 = vmatpush1.bf16.msra.mxu0 %v2450
    %3009 = vmatprep.subr.bf16.mxu0 0
    %3010 = vmatpush1.bf16.msra.mxu0 0
    %3011 = vmatprep.subr.bf16.mxu0 0
    %3012 = vmatpush1.bf16.msra.mxu0 0
    %3013 = vmatprep.subr.bf16.mxu0 0
    %3014 = vmatpush1.bf16.msra.mxu0 0
    %3015 = vmatprep.subr.bf16.mxu0 0
    %3016 = vmatpush1.bf16.msra.mxu0 0
    %3017 = vmatprep.subr.bf16.mxu0 0
    %3018 = vmatpush1.bf16.msra.mxu0 0
    %3019 = vmatprep.subr.bf16.mxu0 0
    %3020 = vmatpush1.bf16.msra.mxu0 0
    %3021 = vmatprep.subr.bf16.mxu0 0
    %3022 = vmatpush1.bf16.msra.mxu0 0
    %3023 = vmatprep.subr.bf16.mxu0 0
    %3024 = vmatpush1.bf16.msra.mxu0 0
    %3025 = vmatprep.mubr.bf16.mxu0 0
    %3026 = vmatmul.mubr.bf16.gmra.mrb[0].mxu0 %v2951
    %v3027 = vpop.f32.mrb[0].mxu0
    %v3028 = vadd.f32 0.0, %v3027
    %v3029 = vpop.f32.mrb[0].mxu0
    %v3030 = vadd.f32 0.0, %v3029
    %v3031 = vpop.f32.mrb[0].mxu0
    %v3032 = vpop.f32.mrb[0].mxu0
    %3033 = vdwg.mxu0
    %v3034 = vadd.f32 %v2947, %v2987
    %v3035 = vadd.f32 %v2948, %v2989
    %v3036 = vadd.f32 %v2949, %v3028
    %v3037 = vadd.f32 %v2950, %v3030
    %v3038 = vxor.u32 %v3034, 2147483648
    %v3039 = vmul.f32 %v3038, 1.442695
    %v3040 = vpow.pop %v3039
    %v3041 = vadd.f32 %v3040, 1.0
    %v3042 = vrcp.pop %v3041
    %v3043 = vmul.f32 1.0, %v3042
    %v3044 = vxor.u32 %v3035, 2147483648
    %v3045 = vmul.f32 %v3044, 1.442695
    %v3046 = vpow.pop %v3045
    %v3047 = vadd.f32 %v3046, 1.0
    %v3048 = vrcp.pop %v3047
    %v3049 = vmul.f32 1.0, %v3048
    %v3050 = vtanh.pop %v3036
    %v3051 = vxor.u32 %v3037, 2147483648
    %v3052 = vmul.f32 %v3051, 1.442695
    %v3053 = vpow.pop %v3052
    %v3054 = vadd.f32 %v3053, 1.0
    %v3055 = vrcp.pop %v3054
    %v3056 = vmul.f32 1.0, %v3055
    %v3057 = vmul.f32 %v3049, %v2942
    %v3058 = vmul.f32 %v3043, %v3050
    %v3059 = vadd.f32 %v3057, %v3058
    %v3060 = vtanh.pop %v3059
    %v3061 = vmul.f32 %v3056, %v3060
    %3062 = vst.msk [vmem:[#allocation3 + $0x20] sm:$0xff] %vm276, %v3061
    %3063 = vst.msk [vmem:[#allocation3 + $0x18] sm:$0xff] %vm936, %v3061
    %v3064 = vadd.f32 %v1959, %v2187
    %v3065 = vadd.f32 %v1961, %v2189
    %v3066 = vadd.f32 %v2032, %v2260
    %v3067 = vadd.f32 %v2034, %v2262
    %v3068 = vpack.c.bf16 %v3061, %v3061
    %3069 = vmatprep.subr.bf16.mxu0 %v2421
    %3070 = vmatpush1.bf16.msra.mxu0 %v2420
    %3071 = vmatprep.subr.bf16.mxu0 %v2425
    %3072 = vmatpush1.bf16.msra.mxu0 %v2424
    %3073 = vmatprep.subr.bf16.mxu0 %v2429
    %3074 = vmatpush1.bf16.msra.mxu0 %v2428
    %3075 = vmatprep.subr.bf16.mxu0 %v2433
    %3076 = vmatpush1.bf16.msra.mxu0 %v2432
    %3077 = vmatprep.subr.bf16.mxu0 %v2437
    %3078 = vmatpush1.bf16.msra.mxu0 %v2436
    %3079 = vmatprep.subr.bf16.mxu0 %v2441
    %3080 = vmatpush1.bf16.msra.mxu0 %v2440
    %3081 = vmatprep.subr.bf16.mxu0 %v2445
    %3082 = vmatpush1.bf16.msra.mxu0 %v2444
    %3083 = vmatprep.subr.bf16.mxu0 %v2449
    %3084 = vmatpush1.bf16.msra.mxu0 %v2448
    %3085 = vmatprep.subr.bf16.mxu0 0
    %3086 = vmatpush1.bf16.msra.mxu0 0
    %3087 = vmatprep.subr.bf16.mxu0 0
    %3088 = vmatpush1.bf16.msra.mxu0 0
    %3089 = vmatprep.subr.bf16.mxu0 0
    %3090 = vmatpush1.bf16.msra.mxu0 0
    %3091 = vmatprep.subr.bf16.mxu0 0
    %3092 = vmatpush1.bf16.msra.mxu0 0
    %3093 = vmatprep.subr.bf16.mxu0 0
    %3094 = vmatpush1.bf16.msra.mxu0 0
    %3095 = vmatprep.subr.bf16.mxu0 0
    %3096 = vmatpush1.bf16.msra.mxu0 0
    %3097 = vmatprep.subr.bf16.mxu0 0
    %3098 = vmatpush1.bf16.msra.mxu0 0
    %3099 = vmatprep.subr.bf16.mxu0 0
    %3100 = vmatpush1.bf16.msra.mxu0 0
    %3101 = vmatprep.mubr.bf16.mxu0 0
    %3102 = vmatmul.mubr.bf16.gmra.mrb[0].mxu0 %v3068
    %v3103 = vpop.f32.mrb[0].mxu0
    %v3104 = vadd.f32 0.0, %v3103
    %v3105 = vpop.f32.mrb[0].mxu0
    %v3106 = vadd.f32 0.0, %v3105
    %v3107 = vpop.f32.mrb[0].mxu0
    %v3108 = vpop.f32.mrb[0].mxu0
    %3109 = vdwg.mxu0
    %3110 = vmatprep.subr.bf16.mxu0 %v2423
    %3111 = vmatpush1.bf16.msra.mxu0 %v2422
    %3112 = vmatprep.subr.bf16.mxu0 %v2427
    %3113 = vmatpush1.bf16.msra.mxu0 %v2426
    %3114 = vmatprep.subr.bf16.mxu0 %v2431
    %3115 = vmatpush1.bf16.msra.mxu0 %v2430
    %3116 = vmatprep.subr.bf16.mxu0 %v2435
    %3117 = vmatpush1.bf16.msra.mxu0 %v2434
    %3118 = vmatprep.subr.bf16.mxu0 %v2439
    %3119 = vmatpush1.bf16.msra.mxu0 %v2438
    %3120 = vmatprep.subr.bf16.mxu0 %v2443
    %3121 = vmatpush1.bf16.msra.mxu0 %v2442
    %3122 = vmatprep.subr.bf16.mxu0 %v2447
    %3123 = vmatpush1.bf16.msra.mxu0 %v2446
    %3124 = vmatprep.subr.bf16.mxu0 %v2451
    %3125 = vmatpush1.bf16.msra.mxu0 %v2450
    %3126 = vmatprep.subr.bf16.mxu0 0
    %3127 = vmatpush1.bf16.msra.mxu0 0
    %3128 = vmatprep.subr.bf16.mxu0 0
    %3129 = vmatpush1.bf16.msra.mxu0 0
    %3130 = vmatprep.subr.bf16.mxu0 0
    %3131 = vmatpush1.bf16.msra.mxu0 0
    %3132 = vmatprep.subr.bf16.mxu0 0
    %3133 = vmatpush1.bf16.msra.mxu0 0
    %3134 = vmatprep.subr.bf16.mxu0 0
    %3135 = vmatpush1.bf16.msra.mxu0 0
    %3136 = vmatprep.subr.bf16.mxu0 0
    %3137 = vmatpush1.bf16.msra.mxu0 0
    %3138 = vmatprep.subr.bf16.mxu0 0
    %3139 = vmatpush1.bf16.msra.mxu0 0
    %3140 = vmatprep.subr.bf16.mxu0 0
    %3141 = vmatpush1.bf16.msra.mxu0 0
    %3142 = vmatprep.mubr.bf16.mxu0 0
    %3143 = vmatmul.mubr.bf16.gmra.mrb[0].mxu0 %v3068
    %v3144 = vpop.f32.mrb[0].mxu0
    %v3145 = vadd.f32 0.0, %v3144
    %v3146 = vpop.f32.mrb[0].mxu0
    %v3147 = vadd.f32 0.0, %v3146
    %v3148 = vpop.f32.mrb[0].mxu0
    %v3149 = vpop.f32.mrb[0].mxu0
    %3150 = vdwg.mxu0
    %v3151 = vadd.f32 %v3064, %v3104
    %v3152 = vadd.f32 %v3065, %v3106
    %v3153 = vadd.f32 %v3066, %v3145
    %v3154 = vadd.f32 %v3067, %v3147
    %v3155 = vxor.u32 %v3151, 2147483648
    %v3156 = vmul.f32 %v3155, 1.442695
    %v3157 = vpow.pop %v3156
    %v3158 = vadd.f32 %v3157, 1.0
    %v3159 = vrcp.pop %v3158
    %v3160 = vmul.f32 1.0, %v3159
    %v3161 = vxor.u32 %v3152, 2147483648
    %v3162 = vmul.f32 %v3161, 1.442695
    %v3163 = vpow.pop %v3162
    %v3164 = vadd.f32 %v3163, 1.0
    %v3165 = vrcp.pop %v3164
    %v3166 = vmul.f32 1.0, %v3165
    %v3167 = vtanh.pop %v3153
    %v3168 = vxor.u32 %v3154, 2147483648
    %v3169 = vmul.f32 %v3168, 1.442695
    %v3170 = vpow.pop %v3169
    %v3171 = vadd.f32 %v3170, 1.0
    %v3172 = vrcp.pop %v3171
    %v3173 = vmul.f32 1.0, %v3172
    %v3174 = vmul.f32 %v3166, %v3059
    %v3175 = vmul.f32 %v3160, %v3167
    %v3176 = vadd.f32 %v3174, %v3175
    %v3177 = vtanh.pop %v3176
    %v3178 = vmul.f32 %v3173, %v3177
    %3179 = vst.msk [vmem:[#allocation3 + $0x28] sm:$0xff] %vm276, %v3178
    %3180 = vst.msk [vmem:[#allocation3 + $0x10] sm:$0xff] %vm936, %v3178
    %v3181 = vadd.f32 %v1965, %v2181
    %v3182 = vadd.f32 %v1967, %v2183
    %v3183 = vadd.f32 %v2038, %v2254
    %v3184 = vadd.f32 %v2040, %v2256
    %v3185 = vpack.c.bf16 %v3178, %v3178
    %3186 = vmatprep.subr.bf16.mxu0 %v2421
    %3187 = vmatpush1.bf16.msra.mxu0 %v2420
    %3188 = vmatprep.subr.bf16.mxu0 %v2425
    %3189 = vmatpush1.bf16.msra.mxu0 %v2424
    %3190 = vmatprep.subr.bf16.mxu0 %v2429
    %3191 = vmatpush1.bf16.msra.mxu0 %v2428
    %3192 = vmatprep.subr.bf16.mxu0 %v2433
    %3193 = vmatpush1.bf16.msra.mxu0 %v2432
    %3194 = vmatprep.subr.bf16.mxu0 %v2437
    %3195 = vmatpush1.bf16.msra.mxu0 %v2436
    %3196 = vmatprep.subr.bf16.mxu0 %v2441
    %3197 = vmatpush1.bf16.msra.mxu0 %v2440
    %3198 = vmatprep.subr.bf16.mxu0 %v2445
    %3199 = vmatpush1.bf16.msra.mxu0 %v2444
    %3200 = vmatprep.subr.bf16.mxu0 %v2449
    %3201 = vmatpush1.bf16.msra.mxu0 %v2448
    %3202 = vmatprep.subr.bf16.mxu0 0
    %3203 = vmatpush1.bf16.msra.mxu0 0
    %3204 = vmatprep.subr.bf16.mxu0 0
    %3205 = vmatpush1.bf16.msra.mxu0 0
    %3206 = vmatprep.subr.bf16.mxu0 0
    %3207 = vmatpush1.bf16.msra.mxu0 0
    %3208 = vmatprep.subr.bf16.mxu0 0
    %3209 = vmatpush1.bf16.msra.mxu0 0
    %3210 = vmatprep.subr.bf16.mxu0 0
    %3211 = vmatpush1.bf16.msra.mxu0 0
    %3212 = vmatprep.subr.bf16.mxu0 0
    %3213 = vmatpush1.bf16.msra.mxu0 0
    %3214 = vmatprep.subr.bf16.mxu0 0
    %3215 = vmatpush1.bf16.msra.mxu0 0
    %3216 = vmatprep.subr.bf16.mxu0 0
    %3217 = vmatpush1.bf16.msra.mxu0 0
    %3218 = vmatprep.mubr.bf16.mxu0 0
    %3219 = vmatmul.mubr.bf16.gmra.mrb[0].mxu0 %v3185
    %v3220 = vpop.f32.mrb[0].mxu0
    %v3221 = vadd.f32 0.0, %v3220
    %v3222 = vpop.f32.mrb[0].mxu0
    %v3223 = vadd.f32 0.0, %v3222
    %v3224 = vpop.f32.mrb[0].mxu0
    %v3225 = vpop.f32.mrb[0].mxu0
    %3226 = vdwg.mxu0
    %3227 = vmatprep.subr.bf16.mxu0 %v2423
    %3228 = vmatpush1.bf16.msra.mxu0 %v2422
    %3229 = vmatprep.subr.bf16.mxu0 %v2427
    %3230 = vmatpush1.bf16.msra.mxu0 %v2426
    %3231 = vmatprep.subr.bf16.mxu0 %v2431
    %3232 = vmatpush1.bf16.msra.mxu0 %v2430
    %3233 = vmatprep.subr.bf16.mxu0 %v2435
    %3234 = vmatpush1.bf16.msra.mxu0 %v2434
    %3235 = vmatprep.subr.bf16.mxu0 %v2439
    %3236 = vmatpush1.bf16.msra.mxu0 %v2438
    %3237 = vmatprep.subr.bf16.mxu0 %v2443
    %3238 = vmatpush1.bf16.msra.mxu0 %v2442
    %3239 = vmatprep.subr.bf16.mxu0 %v2447
    %3240 = vmatpush1.bf16.msra.mxu0 %v2446
    %3241 = vmatprep.subr.bf16.mxu0 %v2451
    %3242 = vmatpush1.bf16.msra.mxu0 %v2450
    %3243 = vmatprep.subr.bf16.mxu0 0
    %3244 = vmatpush1.bf16.msra.mxu0 0
    %3245 = vmatprep.subr.bf16.mxu0 0
    %3246 = vmatpush1.bf16.msra.mxu0 0
    %3247 = vmatprep.subr.bf16.mxu0 0
    %3248 = vmatpush1.bf16.msra.mxu0 0
    %3249 = vmatprep.subr.bf16.mxu0 0
    %3250 = vmatpush1.bf16.msra.mxu0 0
    %3251 = vmatprep.subr.bf16.mxu0 0
    %3252 = vmatpush1.bf16.msra.mxu0 0
    %3253 = vmatprep.subr.bf16.mxu0 0
    %3254 = vmatpush1.bf16.msra.mxu0 0
    %3255 = vmatprep.subr.bf16.mxu0 0
    %3256 = vmatpush1.bf16.msra.mxu0 0
    %3257 = vmatprep.subr.bf16.mxu0 0
    %3258 = vmatpush1.bf16.msra.mxu0 0
    %3259 = vmatprep.mubr.bf16.mxu0 0
    %3260 = vmatmul.mubr.bf16.gmra.mrb[0].mxu0 %v3185
    %v3261 = vpop.f32.mrb[0].mxu0
    %v3262 = vadd.f32 0.0, %v3261
    %v3263 = vpop.f32.mrb[0].mxu0
    %v3264 = vadd.f32 0.0, %v3263
    %v3265 = vpop.f32.mrb[0].mxu0
    %v3266 = vpop.f32.mrb[0].mxu0
    %3267 = vdwg.mxu0
    %v3268 = vadd.f32 %v3181, %v3221
    %v3269 = vadd.f32 %v3182, %v3223
    %v3270 = vadd.f32 %v3183, %v3262
    %v3271 = vadd.f32 %v3184, %v3264
    %v3272 = vxor.u32 %v3268, 2147483648
    %v3273 = vmul.f32 %v3272, 1.442695
    %v3274 = vpow.pop %v3273
    %v3275 = vadd.f32 %v3274, 1.0
    %v3276 = vrcp.pop %v3275
    %v3277 = vmul.f32 1.0, %v3276
    %v3278 = vxor.u32 %v3269, 2147483648
    %v3279 = vmul.f32 %v3278, 1.442695
    %v3280 = vpow.pop %v3279
    %v3281 = vadd.f32 %v3280, 1.0
    %v3282 = vrcp.pop %v3281
    %v3283 = vmul.f32 1.0, %v3282
    %v3284 = vtanh.pop %v3270
    %v3285 = vxor.u32 %v3271, 2147483648
    %v3286 = vmul.f32 %v3285, 1.442695
    %v3287 = vpow.pop %v3286
    %v3288 = vadd.f32 %v3287, 1.0
    %v3289 = vrcp.pop %v3288
    %v3290 = vmul.f32 1.0, %v3289
    %v3291 = vmul.f32 %v3283, %v3176
    %v3292 = vmul.f32 %v3277, %v3284
    %v3293 = vadd.f32 %v3291, %v3292
    %v3294 = vtanh.pop %v3293
    %v3295 = vmul.f32 %v3290, %v3294
    %3296 = vst.msk [vmem:[#allocation3 + $0x30] sm:$0xff] %vm276, %v3295
    %3297 = vst.msk [vmem:[#allocation3 + $0x8] sm:$0xff] %vm936, %v3295
    %v3298 = vadd.f32 %v1969, %v2177
    %v3299 = vadd.f32 %v1971, %v2179
    %v3300 = vadd.f32 %v2042, %v2250
    %v3301 = vadd.f32 %v2044, %v2252
    %v3302 = vpack.c.bf16 %v3295, %v3295
    %3303 = vmatprep.subr.bf16.mxu0 %v2421
    %3304 = vmatpush1.bf16.msra.mxu0 %v2420
    %3305 = vmatprep.subr.bf16.mxu0 %v2425
    %3306 = vmatpush1.bf16.msra.mxu0 %v2424
    %3307 = vmatprep.subr.bf16.mxu0 %v2429
    %3308 = vmatpush1.bf16.msra.mxu0 %v2428
    %3309 = vmatprep.subr.bf16.mxu0 %v2433
    %3310 = vmatpush1.bf16.msra.mxu0 %v2432
    %3311 = vmatprep.subr.bf16.mxu0 %v2437
    %3312 = vmatpush1.bf16.msra.mxu0 %v2436
    %3313 = vmatprep.subr.bf16.mxu0 %v2441
    %3314 = vmatpush1.bf16.msra.mxu0 %v2440
    %3315 = vmatprep.subr.bf16.mxu0 %v2445
    %3316 = vmatpush1.bf16.msra.mxu0 %v2444
    %3317 = vmatprep.subr.bf16.mxu0 %v2449
    %3318 = vmatpush1.bf16.msra.mxu0 %v2448
    %3319 = vmatprep.subr.bf16.mxu0 0
    %3320 = vmatpush1.bf16.msra.mxu0 0
    %3321 = vmatprep.subr.bf16.mxu0 0
    %3322 = vmatpush1.bf16.msra.mxu0 0
    %3323 = vmatprep.subr.bf16.mxu0 0
    %3324 = vmatpush1.bf16.msra.mxu0 0
    %3325 = vmatprep.subr.bf16.mxu0 0
    %3326 = vmatpush1.bf16.msra.mxu0 0
    %3327 = vmatprep.subr.bf16.mxu0 0
    %3328 = vmatpush1.bf16.msra.mxu0 0
    %3329 = vmatprep.subr.bf16.mxu0 0
    %3330 = vmatpush1.bf16.msra.mxu0 0
    %3331 = vmatprep.subr.bf16.mxu0 0
    %3332 = vmatpush1.bf16.msra.mxu0 0
    %3333 = vmatprep.subr.bf16.mxu0 0
    %3334 = vmatpush1.bf16.msra.mxu0 0
    %3335 = vmatprep.mubr.bf16.mxu0 0
    %3336 = vmatmul.mubr.bf16.gmra.mrb[0].mxu0 %v3302
    %v3337 = vpop.f32.mrb[0].mxu0
    %v3338 = vadd.f32 0.0, %v3337
    %v3339 = vpop.f32.mrb[0].mxu0
    %v3340 = vadd.f32 0.0, %v3339
    %v3341 = vpop.f32.mrb[0].mxu0
    %v3342 = vpop.f32.mrb[0].mxu0
    %3343 = vdwg.mxu0
    %3344 = vmatprep.subr.bf16.mxu0 %v2423
    %3345 = vmatpush1.bf16.msra.mxu0 %v2422
    %3346 = vmatprep.subr.bf16.mxu0 %v2427
    %3347 = vmatpush1.bf16.msra.mxu0 %v2426
    %3348 = vmatprep.subr.bf16.mxu0 %v2431
    %3349 = vmatpush1.bf16.msra.mxu0 %v2430
    %3350 = vmatprep.subr.bf16.mxu0 %v2435
    %3351 = vmatpush1.bf16.msra.mxu0 %v2434
    %3352 = vmatprep.subr.bf16.mxu0 %v2439
    %3353 = vmatpush1.bf16.msra.mxu0 %v2438
    %3354 = vmatprep.subr.bf16.mxu0 %v2443
    %3355 = vmatpush1.bf16.msra.mxu0 %v2442
    %3356 = vmatprep.subr.bf16.mxu0 %v2447
    %3357 = vmatpush1.bf16.msra.mxu0 %v2446
    %3358 = vmatprep.subr.bf16.mxu0 %v2451
    %3359 = vmatpush1.bf16.msra.mxu0 %v2450
    %3360 = vmatprep.subr.bf16.mxu0 0
    %3361 = vmatpush1.bf16.msra.mxu0 0
    %3362 = vmatprep.subr.bf16.mxu0 0
    %3363 = vmatpush1.bf16.msra.mxu0 0
    %3364 = vmatprep.subr.bf16.mxu0 0
    %3365 = vmatpush1.bf16.msra.mxu0 0
    %3366 = vmatprep.subr.bf16.mxu0 0
    %3367 = vmatpush1.bf16.msra.mxu0 0
    %3368 = vmatprep.subr.bf16.mxu0 0
    %3369 = vmatpush1.bf16.msra.mxu0 0
    %3370 = vmatprep.subr.bf16.mxu0 0
    %3371 = vmatpush1.bf16.msra.mxu0 0
    %3372 = vmatprep.subr.bf16.mxu0 0
    %3373 = vmatpush1.bf16.msra.mxu0 0
    %3374 = vmatprep.subr.bf16.mxu0 0
    %3375 = vmatpush1.bf16.msra.mxu0 0
    %3376 = vmatprep.mubr.bf16.mxu0 0
    %3377 = vmatmul.mubr.bf16.gmra.mrb[0].mxu0 %v3302
    %v3378 = vpop.f32.mrb[0].mxu0
    %v3379 = vadd.f32 0.0, %v3378
    %v3380 = vpop.f32.mrb[0].mxu0
    %v3381 = vadd.f32 0.0, %v3380
    %v3382 = vpop.f32.mrb[0].mxu0
    %v3383 = vpop.f32.mrb[0].mxu0
    %3384 = vdwg.mxu0
    %v3385 = vadd.f32 %v3298, %v3338
    %v3386 = vadd.f32 %v3299, %v3340
    %v3387 = vadd.f32 %v3300, %v3379
    %v3388 = vadd.f32 %v3301, %v3381
    %v3389 = vxor.u32 %v3385, 2147483648
    %v3390 = vmul.f32 %v3389, 1.442695
    %v3391 = vpow.pop %v3390
    %v3392 = vadd.f32 %v3391, 1.0
    %v3393 = vrcp.pop %v3392
    %v3394 = vmul.f32 1.0, %v3393
    %v3395 = vxor.u32 %v3386, 2147483648
    %v3396 = vmul.f32 %v3395, 1.442695
    %v3397 = vpow.pop %v3396
    %v3398 = vadd.f32 %v3397, 1.0
    %v3399 = vrcp.pop %v3398
    %v3400 = vmul.f32 1.0, %v3399
    %v3401 = vtanh.pop %v3387
    %v3402 = vxor.u32 %v3388, 2147483648
    %v3403 = vmul.f32 %v3402, 1.442695
    %v3404 = vpow.pop %v3403
    %v3405 = vadd.f32 %v3404, 1.0
    %v3406 = vrcp.pop %v3405
    %v3407 = vmul.f32 1.0, %v3406
    %v3408 = vmul.f32 %v3400, %v3293
    %v3409 = vmul.f32 %v3394, %v3401
    %v3410 = vadd.f32 %v3408, %v3409
    %v3411 = vtanh.pop %v3410
    %v3412 = vmul.f32 %v3407, %v3411
    %3413 = vst.msk [vmem:[#allocation3 + $0x38] sm:$0xff] %vm276, %v3412
    %3414 = vst.msk [vmem:[#allocation3] sm:$0xff] %vm936, %v3412
    %v3415 = vld [vmem:[#allocation3] sm:$0xff]
    %v3416 = vld [vmem:[#allocation3 + $0x8] sm:$0xff]
    %v3417 = vld [vmem:[#allocation3 + $0x10] sm:$0xff]
    %v3418 = vld [vmem:[#allocation3 + $0x18] sm:$0xff]
    %v3419 = vld [vmem:[#allocation3 + $0x20] sm:$0xff]
    %v3420 = vld [vmem:[#allocation3 + $0x28] sm:$0xff]
    %v3421 = vld [vmem:[#allocation3 + $0x30] sm:$0xff]
    %v3422 = vld [vmem:[#allocation3 + $0x38] sm:$0xff]
    %v3423 = vpack.c.bf16 %v3416, %v3415
    %v3424 = vpack.c.bf16 %v3418, %v3417
    %v3425 = vpack.c.bf16 %v3420, %v3419
    %v3426 = vpack.c.bf16 %v3422, %v3421
    %v3427 = vld [vmem:[%s9] sm:$0xf]
    %v3428 = vld [vmem:[%s9 + $0x4] sm:$0xf]
    %v3429 = vld [vmem:[%s9 + $0x8] sm:$0xf]
    %v3430 = vld [vmem:[%s9 + $0xc] sm:$0xf]
    %v3431 = vld [vmem:[%s9 + $0x10] sm:$0xf]
    %v3432 = vld [vmem:[%s9 + $0x14] sm:$0xf]
    %v3433 = vld [vmem:[%s9 + $0x18] sm:$0xf]
    %v3434 = vld [vmem:[%s9 + $0x1c] sm:$0xf]
    %v3435 = vld [vmem:[#allocation19] sm:$0xf]
    %v3436 = vld [vmem:[#allocation19 + $0x4] sm:$0xf]
    %v3437 = vld [vmem:[#allocation19 + $0x8] sm:$0xf]
    %v3438 = vld [vmem:[#allocation19 + $0xc] sm:$0xf]
    %v3443 = vunpack.c.l.b16 %v3435
    %v3444 = vunpack.c.l.b16 %v3436
    %v3445 = vunpack.c.l.b16 %v3437
    %v3446 = vunpack.c.l.b16 %v3438
    %v3447 = vpack.c.b16 %v3444, %v3443
    %v3448 = vpack.c.b16 %v3446, %v3445
    %3451 = vmatprep.subr.bf16.mxu0 0
    %3452 = vmatpush1.bf16.msra.mxu0 %v3447
    %3453 = vmatprep.subr.bf16.mxu0 0
    %3454 = vmatpush1.bf16.msra.mxu0 %v3448
    %3455 = vmatprep.subr.bf16.mxu0 0
    %3456 = vmatpush1.bf16.msra.mxu0 0
    %3457 = vmatprep.subr.bf16.mxu0 0
    %3458 = vmatpush1.bf16.msra.mxu0 0
    %3459 = vmatprep.subr.bf16.mxu0 0
    %3460 = vmatpush1.bf16.msra.mxu0 0
    %3461 = vmatprep.subr.bf16.mxu0 0
    %3462 = vmatpush1.bf16.msra.mxu0 0
    %3463 = vmatprep.subr.bf16.mxu0 0
    %3464 = vmatpush1.bf16.msra.mxu0 0
    %3465 = vmatprep.subr.bf16.mxu0 0
    %3466 = vmatpush1.bf16.msra.mxu0 0
    %3467 = vmatprep.subr.bf16.mxu0 0
    %3468 = vmatpush1.bf16.msra.mxu0 0
    %3469 = vmatprep.subr.bf16.mxu0 0
    %3470 = vmatpush1.bf16.msra.mxu0 0
    %3471 = vmatprep.subr.bf16.mxu0 0
    %3472 = vmatpush1.bf16.msra.mxu0 0
    %3473 = vmatprep.subr.bf16.mxu0 0
    %3474 = vmatpush1.bf16.msra.mxu0 0
    %3475 = vmatprep.subr.bf16.mxu0 0
    %3476 = vmatpush1.bf16.msra.mxu0 0
    %3477 = vmatprep.subr.bf16.mxu0 0
    %3478 = vmatpush1.bf16.msra.mxu0 0
    %3479 = vmatprep.subr.bf16.mxu0 0
    %3480 = vmatpush1.bf16.msra.mxu0 0
    %3481 = vmatprep.subr.bf16.mxu0 0
    %3482 = vmatpush1.bf16.msra.mxu0 0
    %3483 = vmatprep.mubr.bf16.mxu0 0
    %3484 = vmatmul.mubr.bf16.gmra.mrb[0].mxu0 %v278
    %v3485 = vpop.f32.mrb[0].mxu0
    %v3486 = vadd.f32 0.0, %v3485
    %v3487 = vpop.f32.mrb[0].mxu0
    %v3488 = vpop.f32.mrb[0].mxu0
    %v3489 = vadd.f32 0.0, %v3488
    %v3490 = vpop.f32.mrb[0].mxu0
    %3491 = vmatprep.mubr.bf16.mxu0 0
    %3492 = vmatmul.mubr.bf16.gmra.mrb[0].mxu0 %v281
    %v3493 = vpop.f32.mrb[0].mxu0
    %v3494 = vadd.f32 0.0, %v3493
    %v3495 = vpop.f32.mrb[0].mxu0
    %v3496 = vpop.f32.mrb[0].mxu0
    %v3497 = vadd.f32 0.0, %v3496
    %v3498 = vpop.f32.mrb[0].mxu0
    %3499 = vmatprep.mubr.bf16.mxu0 0
    %3500 = vmatmul.mubr.bf16.gmra.mrb[0].mxu0 %v284
    %v3501 = vpop.f32.mrb[0].mxu0
    %v3502 = vadd.f32 0.0, %v3501
    %v3503 = vpop.f32.mrb[0].mxu0
    %v3504 = vpop.f32.mrb[0].mxu0
    %v3505 = vadd.f32 0.0, %v3504
    %v3506 = vpop.f32.mrb[0].mxu0
    %3507 = vmatprep.mubr.bf16.mxu0 0
    %3508 = vmatmul.mubr.bf16.gmra.mrb[0].mxu0 %v287
    %v3509 = vpop.f32.mrb[0].mxu0
    %v3510 = vadd.f32 0.0, %v3509
    %v3511 = vpop.f32.mrb[0].mxu0
    %v3512 = vpop.f32.mrb[0].mxu0
    %v3513 = vadd.f32 0.0, %v3512
    %v3514 = vpop.f32.mrb[0].mxu0
    %3515 = vdwg.mxu0
    %v3524 = vunpack.c.l.b16 %v3427
    %v3525 = vunpack.c.l.b16 %v3428
    %v3526 = vunpack.c.l.b16 %v3429
    %v3527 = vunpack.c.l.b16 %v3430
    %v3528 = vunpack.c.l.b16 %v3431
    %v3529 = vunpack.c.l.b16 %v3432
    %v3530 = vunpack.c.l.b16 %v3433
    %v3531 = vunpack.c.l.b16 %v3434
    %v3532 = vpack.c.b16 %v3525, %v3524
    %v3533 = vpack.c.b16 %v3527, %v3526
    %v3534 = vpack.c.b16 %v3529, %v3528
    %v3535 = vpack.c.b16 %v3531, %v3530
    %v3541 = vsel %vm1887, %v3423, 0
    %v3544 = vsel %vm1887, %v3424, 0
    %v3547 = vsel %vm1887, %v3425, 0
    %v3550 = vsel %vm1887, %v3426, 0
    %3552 = vmatprep.subr.bf16.mxu0 0
    %3553 = vmatpush1.bf16.msra.mxu0 %v3532
    %3554 = vmatprep.subr.bf16.mxu0 0
    %3555 = vmatpush1.bf16.msra.mxu0 %v3533
    %3556 = vmatprep.subr.bf16.mxu0 0
    %3557 = vmatpush1.bf16.msra.mxu0 %v3534
    %3558 = vmatprep.subr.bf16.mxu0 0
    %3559 = vmatpush1.bf16.msra.mxu0 %v3535
    %3560 = vmatprep.subr.bf16.mxu0 0
    %3561 = vmatpush1.bf16.msra.mxu0 0
    %3562 = vmatprep.subr.bf16.mxu0 0
    %3563 = vmatpush1.bf16.msra.mxu0 0
    %3564 = vmatprep.subr.bf16.mxu0 0
    %3565 = vmatpush1.bf16.msra.mxu0 0
    %3566 = vmatprep.subr.bf16.mxu0 0
    %3567 = vmatpush1.bf16.msra.mxu0 0
    %3568 = vmatprep.subr.bf16.mxu0 0
    %3569 = vmatpush1.bf16.msra.mxu0 0
    %3570 = vmatprep.subr.bf16.mxu0 0
    %3571 = vmatpush1.bf16.msra.mxu0 0
    %3572 = vmatprep.subr.bf16.mxu0 0
    %3573 = vmatpush1.bf16.msra.mxu0 0
    %3574 = vmatprep.subr.bf16.mxu0 0
    %3575 = vmatpush1.bf16.msra.mxu0 0
    %3576 = vmatprep.subr.bf16.mxu0 0
    %3577 = vmatpush1.bf16.msra.mxu0 0
    %3578 = vmatprep.subr.bf16.mxu0 0
    %3579 = vmatpush1.bf16.msra.mxu0 0
    %3580 = vmatprep.subr.bf16.mxu0 0
    %3581 = vmatpush1.bf16.msra.mxu0 0
    %3582 = vmatprep.subr.bf16.mxu0 0
    %3583 = vmatpush1.bf16.msra.mxu0 0
    %3584 = vmatprep.mubr.bf16.mxu0 0
    %3585 = vmatmul.mubr.bf16.gmra.mrb[0].mxu0 %v3541
    %v3586 = vpop.f32.mrb[0].mxu0
    %v3587 = vadd.f32 %v3486, %v3586
    %v3588 = vpop.f32.mrb[0].mxu0
    %v3589 = vpop.f32.mrb[0].mxu0
    %v3590 = vadd.f32 %v3489, %v3589
    %v3591 = vpop.f32.mrb[0].mxu0
    %3592 = vmatprep.mubr.bf16.mxu0 0
    %3593 = vmatmul.mubr.bf16.gmra.mrb[0].mxu0 %v3544
    %v3594 = vpop.f32.mrb[0].mxu0
    %v3595 = vadd.f32 %v3494, %v3594
    %v3596 = vpop.f32.mrb[0].mxu0
    %v3597 = vpop.f32.mrb[0].mxu0
    %v3598 = vadd.f32 %v3497, %v3597
    %v3599 = vpop.f32.mrb[0].mxu0
    %3600 = vmatprep.mubr.bf16.mxu0 0
    %3601 = vmatmul.mubr.bf16.gmra.mrb[0].mxu0 %v3547
    %v3602 = vpop.f32.mrb[0].mxu0
    %v3603 = vadd.f32 %v3502, %v3602
    %v3604 = vpop.f32.mrb[0].mxu0
    %v3605 = vpop.f32.mrb[0].mxu0
    %v3606 = vadd.f32 %v3505, %v3605
    %v3607 = vpop.f32.mrb[0].mxu0
    %3608 = vmatprep.mubr.bf16.mxu0 0
    %3609 = vmatmul.mubr.bf16.gmra.mrb[0].mxu0 %v3550
    %v3610 = vpop.f32.mrb[0].mxu0
    %v3611 = vadd.f32 %v3510, %v3610
    %v3612 = vpop.f32.mrb[0].mxu0
    %v3613 = vpop.f32.mrb[0].mxu0
    %v3614 = vadd.f32 %v3513, %v3613
    %v3615 = vpop.f32.mrb[0].mxu0
    %3616 = vdwg.mxu0
    %v3617 = vld [vmem:[%s11] sm:$0x1]
    %v3619 = vlaneseq
    %v3620 = vshrl.u32 %v3619, 7
    %v3621 = vsub.s32 0, %v3620
    %v3622 = vrot.slane %v3617, %v3621
    %v3624 = vadd.f32 %v3587, %v3622
    %v3625 = vadd.f32 %v3590, %v3622
    %v3626 = vadd.f32 %v3595, %v3622
    %v3627 = vadd.f32 %v3598, %v3622
    %v3628 = vadd.f32 %v3603, %v3622
    %v3629 = vadd.f32 %v3606, %v3622
    %v3630 = vadd.f32 %v3611, %v3622
    %v3631 = vadd.f32 %v3614, %v3622
    %v3632 = vtanh.pop %v3624
    %v3633 = vtanh.pop %v3625
    %v3634 = vtanh.pop %v3626
    %v3635 = vtanh.pop %v3627
    %v3636 = vtanh.pop %v3628
    %v3637 = vtanh.pop %v3629
    %v3638 = vtanh.pop %v3630
    %v3639 = vtanh.pop %v3631
    %v3640 = vsel %vm1887, %v3632, -inf
    %v3641 = vrot.slane %v3640, 4
    %v3642 = vmax.f32 %v3640, %v3641
    %v3643 = vrot.slane %v3642, 2
    %v3644 = vmax.f32 %v3642, %v3643
    %v3645 = vrot.slane %v3644, 1
    %v3646 = vmax.f32 %v3644, %v3645
    %v3647 = vsel %vm1887, %v3633, -inf
    %v3648 = vrot.slane %v3647, 4
    %v3649 = vmax.f32 %v3647, %v3648
    %v3650 = vrot.slane %v3649, 2
    %v3651 = vmax.f32 %v3649, %v3650
    %v3652 = vrot.slane %v3651, 1
    %v3653 = vmax.f32 %v3651, %v3652
    %v3654 = vsel %vm1887, %v3634, -inf
    %v3655 = vrot.slane %v3654, 4
    %v3656 = vmax.f32 %v3654, %v3655
    %v3657 = vrot.slane %v3656, 2
    %v3658 = vmax.f32 %v3656, %v3657
    %v3659 = vrot.slane %v3658, 1
    %v3660 = vmax.f32 %v3658, %v3659
    %v3661 = vsel %vm1887, %v3635, -inf
    %v3662 = vrot.slane %v3661, 4
    %v3663 = vmax.f32 %v3661, %v3662
    %v3664 = vrot.slane %v3663, 2
    %v3665 = vmax.f32 %v3663, %v3664
    %v3666 = vrot.slane %v3665, 1
    %v3667 = vmax.f32 %v3665, %v3666
    %v3668 = vsel %vm1887, %v3636, -inf
    %v3669 = vrot.slane %v3668, 4
    %v3670 = vmax.f32 %v3668, %v3669
    %v3671 = vrot.slane %v3670, 2
    %v3672 = vmax.f32 %v3670, %v3671
    %v3673 = vrot.slane %v3672, 1
    %v3674 = vmax.f32 %v3672, %v3673
    %v3675 = vsel %vm1887, %v3637, -inf
    %v3676 = vrot.slane %v3675, 4
    %v3677 = vmax.f32 %v3675, %v3676
    %v3678 = vrot.slane %v3677, 2
    %v3679 = vmax.f32 %v3677, %v3678
    %v3680 = vrot.slane %v3679, 1
    %v3681 = vmax.f32 %v3679, %v3680
    %v3682 = vsel %vm1887, %v3638, -inf
    %v3683 = vrot.slane %v3682, 4
    %v3684 = vmax.f32 %v3682, %v3683
    %v3685 = vrot.slane %v3684, 2
    %v3686 = vmax.f32 %v3684, %v3685
    %v3687 = vrot.slane %v3686, 1
    %v3688 = vmax.f32 %v3686, %v3687
    %v3689 = vsel %vm1887, %v3639, -inf
    %v3690 = vrot.slane %v3689, 4
    %v3691 = vmax.f32 %v3689, %v3690
    %v3692 = vrot.slane %v3691, 2
    %v3693 = vmax.f32 %v3691, %v3692
    %v3694 = vrot.slane %v3693, 1
    %v3695 = vmax.f32 %v3693, %v3694
    %v3696 = vpack.c.bf16 %v3646, %v3646
    %v3697 = vpack.c.bf16 %v3653, %v3653
    %v3698 = vpack.c.bf16 %v3660, %v3660
    %v3699 = vpack.c.bf16 %v3667, %v3667
    %v3700 = vpack.c.bf16 %v3674, %v3674
    %v3701 = vpack.c.bf16 %v3681, %v3681
    %v3702 = vpack.c.bf16 %v3688, %v3688
    %v3703 = vpack.c.bf16 %v3695, %v3695
    %v3704 = vld [vmem:[#allocation21] sm:$0xf]
    %v3705 = vld [vmem:[#allocation21 + $0x4] sm:$0xf]
    %v3706 = vld [vmem:[#allocation21 + $0x8] sm:$0xf]
    %v3707 = vld [vmem:[#allocation21 + $0xc] sm:$0xf]
    %v3708 = vld [vmem:[#allocation21 + $0x10] sm:$0xf]
    %v3709 = vld [vmem:[#allocation21 + $0x14] sm:$0xf]
    %v3710 = vld [vmem:[#allocation21 + $0x18] sm:$0xf]
    %v3711 = vld [vmem:[#allocation21 + $0x1c] sm:$0xf]
    %v3712 = vld [vmem:[%s13] sm:$0x1]
    %v3714 = vlaneseq
    %v3715 = vshrl.u32 %v3714, 7
    %v3716 = vsub.s32 0, %v3715
    %v3717 = vrot.slane %v3712, %v3716
    %v3727 = vunpack.c.l.b16 %v3696
    %v3728 = vunpack.c.l.b16 %v3697
    %v3729 = vunpack.c.l.b16 %v3698
    %v3730 = vunpack.c.l.b16 %v3699
    %v3731 = vunpack.c.l.b16 %v3700
    %v3732 = vunpack.c.l.b16 %v3701
    %v3733 = vunpack.c.l.b16 %v3702
    %v3734 = vunpack.c.l.b16 %v3703
    %vm3735 = vcmask 1041409
    %v3736 = vsel %vm3735, %v3728, %v3727
    %vm3737 = vcmask 1042434
    %v3738 = vsel %vm3737, %v3729, %v3736
    %vm3739 = vcmask 1043459
    %v3740 = vsel %vm3739, %v3730, %v3738
    %vm3741 = vcmask 1044484
    %v3742 = vsel %vm3741, %v3731, %v3740
    %vm3743 = vcmask 1045509
    %v3744 = vsel %vm3743, %v3732, %v3742
    %vm3745 = vcmask 1046534
    %v3746 = vsel %vm3745, %v3733, %v3744
    %vm3747 = vcmask 1047559
    %v3748 = vsel %vm3747, %v3734, %v3746
    %v3749 = vpack.c.b16 %v3748, %v3748
    %v3758 = vunpack.c.l.b16 %v3704
    %v3759 = vunpack.c.l.b16 %v3705
    %v3760 = vunpack.c.l.b16 %v3706
    %v3761 = vunpack.c.l.b16 %v3707
    %v3762 = vunpack.c.l.b16 %v3708
    %v3763 = vunpack.c.l.b16 %v3709
    %v3764 = vunpack.c.l.b16 %v3710
    %v3765 = vunpack.c.l.b16 %v3711
    %v3766 = vpack.c.b16 %v3759, %v3758
    %v3767 = vpack.c.b16 %v3761, %v3760
    %v3768 = vpack.c.b16 %v3763, %v3762
    %v3769 = vpack.c.b16 %v3765, %v3764
    %v3775 = vsel %vm1887, %v3749, 0
    %3777 = vmatprep.subr.bf16.mxu0 0
    %3778 = vmatpush1.bf16.msra.mxu0 %v3766
    %3779 = vmatprep.subr.bf16.mxu0 0
    %3780 = vmatpush1.bf16.msra.mxu0 %v3767
    %3781 = vmatprep.subr.bf16.mxu0 0
    %3782 = vmatpush1.bf16.msra.mxu0 %v3768
    %3783 = vmatprep.subr.bf16.mxu0 0
    %3784 = vmatpush1.bf16.msra.mxu0 %v3769
    %3785 = vmatprep.subr.bf16.mxu0 0
    %3786 = vmatpush1.bf16.msra.mxu0 0
    %3787 = vmatprep.subr.bf16.mxu0 0
    %3788 = vmatpush1.bf16.msra.mxu0 0
    %3789 = vmatprep.subr.bf16.mxu0 0
    %3790 = vmatpush1.bf16.msra.mxu0 0
    %3791 = vmatprep.subr.bf16.mxu0 0
    %3792 = vmatpush1.bf16.msra.mxu0 0
    %3793 = vmatprep.subr.bf16.mxu0 0
    %3794 = vmatpush1.bf16.msra.mxu0 0
    %3795 = vmatprep.subr.bf16.mxu0 0
    %3796 = vmatpush1.bf16.msra.mxu0 0
    %3797 = vmatprep.subr.bf16.mxu0 0
    %3798 = vmatpush1.bf16.msra.mxu0 0
    %3799 = vmatprep.subr.bf16.mxu0 0
    %3800 = vmatpush1.bf16.msra.mxu0 0
    %3801 = vmatprep.subr.bf16.mxu0 0
    %3802 = vmatpush1.bf16.msra.mxu0 0
    %3803 = vmatprep.subr.bf16.mxu0 0
    %3804 = vmatpush1.bf16.msra.mxu0 0
    %3805 = vmatprep.subr.bf16.mxu0 0
    %3806 = vmatpush1.bf16.msra.mxu0 0
    %3807 = vmatprep.subr.bf16.mxu0 0
    %3808 = vmatpush1.bf16.msra.mxu0 0
    %3809 = vmatprep.mubr.bf16.mxu0 0
    %3810 = vmatmul.mubr.bf16.gmra.mrb[0].mxu0 %v3775
    %v3811 = vpop.f32.mrb[0].mxu0
    %v3812 = vadd.f32 %v3717, %v3811
    %v3813 = vpop.f32.mrb[0].mxu0
    %v3814 = vpop.f32.mrb[0].mxu0
    %v3815 = vpop.f32.mrb[0].mxu0
    %3816 = vdwg.mxu0
    %3817 = vst [vmem:[#allocation22] sm:$0xff] %v3812
    // Predicated region
    $region102: #{tpu_custom_call.1} parent=1 // pred_check
      _
    $region103: #{tpu_custom_call.1} parent=1 // pred_check_branch
      %3819 = sbr.rel (0) target = $region105
    $region104: #{tpu_custom_call.1} parent=1 // pred_region
      %s3821 = ssub.s32 128, 128
      %3822 = vsyncadd [#allocation6], %s3821
      %s3824 = sshll.u32 [#allocation22], 4
      %s3825 = int_to_ptr.vmem [resolvable:$true] %s3824
      %3827 = dma.vmem_to_hbm [thread:$0]  %s3825, 128, %s14, [#allocation6]
    $region105: #{tpu_custom_call.1} parent=1 // pred_fallthru
      _
    // Predicated region
    $region106: #{tpu_custom_call.1} parent=1 // pred_check
      _
    $region107: #{tpu_custom_call.1} parent=1 // pred_check_branch
      %3829 = sbr.rel (0) target = $region109
    $region108: #{tpu_custom_call.1} parent=1 // pred_region
      %3830 = dma.done [#allocation6], 128
    $region109: #{tpu_custom_call.1} parent=1 // pred_fallthru
      _
    %3831 = vsyncpa [#allocation5], 1
    %3832 = vsyncpa [#allocation8], 1
    %3833 = vsyncpa [#allocation11], 1
    %3834 = vsyncpa [#allocation14], 1
    %3835 = vsyncpa [#allocation17], 1
    %3836 = vsyncpa [#allocation20], 1
    %3837 = vsyncpa [#allocation6], 1

</llo_original>
